<compile_context>
chip_gen: v5e
topology: v5e:2x2
jax: 0.10.0
libtpu: 0.0.40
codegen_flags: <defaults>
</compile_context>

<pallas_src>
import jax
import jax.numpy as jnp
from jax.experimental import pallas as pl
from jax.experimental.pallas import tpu as pltpu


def _se_gate_conv1x1_kernel(x_ref, g_ref, w_ref, o_ref):
    # x_ref: (TK, M)    f32   Cin-chunk of the input (channels x pixels)
    # g_ref: (1, TK)    f32   lane-dense pre-sigmoid gate row for this chunk
    # w_ref: (TCO, TK)  bf16  Cout-tile x Cin-chunk of the 1x1 conv weight
    # o_ref: (TCO, M)   f32   output tile (resident across the K axis)
    k = pl.program_id(1)

    s = jax.nn.sigmoid(g_ref[...])                       # (1, TK), lane-dense, EUP
    # Fold the gate into the weight: sublane broadcast of the (1, TK) row.
    ws = (w_ref[...] * s).astype(jnp.bfloat16)           # (TCO, TK) bf16 for MXU
    contrib = jnp.dot(
        ws, x_ref[...].astype(jnp.bfloat16), preferred_element_type=jnp.float32
    )

    @pl.when(k == 0)
    def _():
        o_ref[...] = contrib

    @pl.when(k > 0)
    def _():
        o_ref[...] += contrib


def _pick_tiles(cout, cin):
    """Per-generation (tco, tk) defaults per the perf review."""
    try:
        kind = jax.devices()[0].device_kind.lower()
    except Exception:
        kind = ""
    if "v7" in kind:
        # 2 TensorCores: split Cout 2-way ("parallel"), single K step.
        return cout // 2, cin
    if "v5e" in kind or "v5 lite" in kind or "v5litepod" in kind:
        # 1 TC, slower HBM: no Cout split, keep 2-step K so MXU hides under DMA.
        return cout, cin // 2
    # v6e / other single-TC: no Cout split, single K step (one grid step).
    return cout, cin


def se_gate_conv1x1(x_nchw, gate_nc11, weight_oi11, *, tco=None, tk=None):
    """sigmoid-gate + 1x1 conv (no bias). NCHW in / NCHW out, no transposes."""
    N, Cin, H, W = x_nchw.shape
    Cout = weight_oi11.shape[0]
    assert weight_oi11.shape[:2] == (Cout, Cin)
    assert gate_nc11.shape == (N, Cin, 1, 1)
    assert N == 1, "kernel targets the module's batch-1 shape"
    M = H * W

    d_tco, d_tk = _pick_tiles(Cout, Cin)
    tco = d_tco if tco is None else tco
    tk = d_tk if tk is None else tk
    assert Cout % tco == 0 and Cin % tk == 0

    x2d = x_nchw.reshape(Cin, M)                 # pure reshape (no transpose)
    g2d = gate_nc11.reshape(1, Cin)              # lane-dense gate row
    # Weight is stored at rest in bf16; this astype is a no-op in that case.
    w2d = weight_oi11.reshape(Cout, Cin).astype(jnp.bfloat16)

    cost = pl.CostEstimate(
        flops=2 * Cout * Cin * M,
        transcendentals=Cin,
        bytes_accessed=2 * Cout * Cin + 4 * Cin * M + 4 * Cin + 4 * Cout * M,
    )

    out2d = pl.pallas_call(
        _se_gate_conv1x1_kernel,
        out_shape=jax.ShapeDtypeStruct((Cout, M), jnp.float32),
        grid=(Cout // tco, Cin // tk),
        in_specs=[
            pl.BlockSpec((tk, M), lambda j, k: (k, 0)),     # x: slice along Cin
            pl.BlockSpec((1, tk), lambda j, k: (0, k)),     # gate: lane-dense row
            pl.BlockSpec((tco, tk), lambda j, k: (j, k)),   # weight tile
        ],
        out_specs=pl.BlockSpec((tco, M), lambda j, k: (j, 0)),
        compiler_params=pltpu.CompilerParams(
            dimension_semantics=("parallel", "arbitrary"),
        ),
        cost_estimate=cost,
    )(x2d, g2d, w2d)

    # (Cout, M) -> (1, Cout, H, W): pure reshape, no transpose
    return out2d.reshape(N, Cout, H, W)


if __name__ == "__main__":
    key = jax.random.PRNGKey(0)
    k1, k2, k3 = jax.random.split(key, 3)

    N, Cin, H, W, Cout = 1, 2304, 7, 7, 384

    x745 = jax.random.normal(k1, (N, Cin, H, W), dtype=jnp.float32)
    x749 = jax.random.normal(k2, (N, Cin, 1, 1), dtype=jnp.float32)
    # synthetic Conv2d(2304, 384, 1x1, bias=False) weight
    weight_f32 = jax.random.normal(k3, (Cout, Cin, 1, 1), dtype=jnp.float32) * 0.02
    # store the conv weight at rest in bf16 so the kernel's dominant DMA is halved
    # TODO(synk): int8 (v5e/v6e) / fp8-e4m3 (v7x) weight-at-rest with per-Cout
    # dequant scales would halve the dominant DMA again if accuracy allows.
    weight = weight_f32.astype(jnp.bfloat16)

    out = se_gate_conv1x1(x745, x749, weight)
    out = jax.block_until_ready(out)
    assert out.shape == (N, Cout, H, W), out.shape

    # reference in plain JAX (f32 weight, f32 math)
    gated = x745 * jax.nn.sigmoid(x749)
    ref = jnp.einsum("nchw,oc->nohw", gated, weight_f32.reshape(Cout, Cin))
    assert jnp.allclose(out, ref, rtol=2e-2, atol=2e-2), (
        float(jnp.max(jnp.abs(out - ref)))
    )

    print("KERNEL_OK")
</pallas_src>

<mosaic_0001>
module attributes {stable_mosaic.version = 11 : i64} {
  func.func @_se_gate_conv1x1_kernel(%arg0: i32, %arg1: i32, %arg2: memref<2304x49xf32, #tpu.memory_space<vmem>>, %arg3: memref<1x2304xf32, #tpu.memory_space<vmem>>, %arg4: memref<384x2304xbf16, #tpu.memory_space<vmem>>, %arg5: memref<384x49xf32, #tpu.memory_space<vmem>>) attributes {dimension_semantics = [#tpu.dimension_semantics<parallel>, #tpu.dimension_semantics<arbitrary>], iteration_bounds = array<i64: 1, 1>, scalar_prefetch = 0 : i64, scratch_operands = 0 : i64, tpu.core_type = #tpu.core_type<tc>, window_params = [{transform_indices = @transform_0, window_bounds = array<i64: 2304, 49>}, {transform_indices = @transform_1, window_bounds = array<i64: 1, 2304>}, {transform_indices = @transform_2, window_bounds = array<i64: 384, 2304>}, {transform_indices = @transform_3, window_bounds = array<i64: 384, 49>}]} {
    %c0 = arith.constant 0 : index
    %c0_0 = arith.constant 0 : index
    %0 = vector.load %arg3[%c0, %c0_0] : memref<1x2304xf32, #tpu.memory_space<vmem>>, vector<1x2304xf32>
    %1 = arith.negf %0 : vector<1x2304xf32>
    %2 = math.exp %1 : vector<1x2304xf32>
    %cst = arith.constant 1.000000e+00 : f32
    %3 = vector.broadcast %cst : f32 to vector<1x2304xf32>
    %4 = arith.addf %3, %2 : vector<1x2304xf32>
    %5 = arith.divf %3, %4 : vector<1x2304xf32>
    %c0_1 = arith.constant 0 : index
    %c0_2 = arith.constant 0 : index
    %6 = vector.load %arg4[%c0_1, %c0_2] : memref<384x2304xbf16, #tpu.memory_space<vmem>>, vector<384x2304xbf16>
    %7 = arith.extf %6 : vector<384x2304xbf16> to vector<384x2304xf32>
    %8 = vector.broadcast %5 : vector<1x2304xf32> to vector<384x2304xf32>
    %9 = arith.mulf %7, %8 : vector<384x2304xf32>
    %10 = arith.truncf %9 : vector<384x2304xf32> to vector<384x2304xbf16>
    %c0_3 = arith.constant 0 : index
    %c0_4 = arith.constant 0 : index
    %11 = vector.load %arg2[%c0_3, %c0_4] : memref<2304x49xf32, #tpu.memory_space<vmem>>, vector<2304x49xf32>
    %12 = arith.truncf %11 : vector<2304x49xf32> to vector<2304x49xbf16>
    %cst_5 = arith.constant dense<0.000000e+00> : vector<384x49xf32>
    %13 = tpu.matmul %10, %12, %cst_5 {dimension_numbers = #tpu.dot_dimension_numbers<[1], [0], [0], [1], [0, 0, 1, 1], [], []>} : vector<384x2304xbf16>, vector<2304x49xbf16>, vector<384x49xf32> -> vector<384x49xf32>
    %c0_i32 = arith.constant 0 : i32
    %14 = arith.cmpi eq, %arg1, %c0_i32 : i32
    %15 = arith.extui %14 : i1 to i32
    %c0_i32_6 = arith.constant 0 : i32
    %16 = arith.cmpi ne, %15, %c0_i32_6 : i32
    scf.if %16 {
      %c0_9 = arith.constant 0 : index
      %c0_10 = arith.constant 0 : index
      %20 = vector.load %arg5[%c0_9, %c0_10] : memref<384x49xf32, #tpu.memory_space<vmem>>, vector<384x49xf32>
      tpu.vector_store %arg5[%c0_9, %c0_10], %13 {strides = array<i32>} : memref<384x49xf32, #tpu.memory_space<vmem>>, vector<384x49xf32>,
    } else {
    }
    %c0_i32_7 = arith.constant 0 : i32
    %17 = arith.cmpi sgt, %arg1, %c0_i32_7 : i32
    %18 = arith.extui %17 : i1 to i32
    %c0_i32_8 = arith.constant 0 : i32
    %19 = arith.cmpi ne, %18, %c0_i32_8 : i32
    scf.if %19 {
      %c0_9 = arith.constant 0 : index
      %c0_10 = arith.constant 0 : index
      %20 = vector.load %arg5[%c0_9, %c0_10] : memref<384x49xf32, #tpu.memory_space<vmem>>, vector<384x49xf32>
      %21 = arith.addf %20, %13 : vector<384x49xf32>
      %c0_11 = arith.constant 0 : index
      %c0_12 = arith.constant 0 : index
      %22 = vector.load %arg5[%c0_11, %c0_12] : memref<384x49xf32, #tpu.memory_space<vmem>>, vector<384x49xf32>
      tpu.vector_store %arg5[%c0_11, %c0_12], %21 {strides = array<i32>} : memref<384x49xf32, #tpu.memory_space<vmem>>, vector<384x49xf32>,
    } else {
    }
    return
  }
  func.func @transform_0(%arg0: i32, %arg1: i32) -> (i32, i32) {
    %c0_i32 = arith.constant 0 : i32
    %c0_i32_0 = arith.constant 0 : i32
    return %arg1, %c0_i32 : i32, i32
  }
  func.func @transform_1(%arg0: i32, %arg1: i32) -> (i32, i32) {
    %c0_i32 = arith.constant 0 : i32
    %c0_i32_0 = arith.constant 0 : i32
    return %c0_i32, %arg1 : i32, i32
  }
  func.func @transform_2(%arg0: i32, %arg1: i32) -> (i32, i32) {
    %c0_i32 = arith.constant 0 : i32
    return %arg0, %arg1 : i32, i32
  }
  func.func @transform_3(%arg0: i32, %arg1: i32) -> (i32, i32) {
    %c0_i32 = arith.constant 0 : i32
    %c0_i32_0 = arith.constant 0 : i32
    return %arg0, %c0_i32 : i32, i32
  }
}

</mosaic_0001>

<llo_original>
// kernel: tpu_custom_call.1
$region0: #{tpu_custom_call.1}
  #allocation0 [shape = 'u32[]', space=smem, size = 0x4, offset = 0x4, fixed_abs, tag = 'smem constant byte address 0x4 - core index']
  #allocation1 [shape = 'u32[72,128]{1,0:T(1,128)}', space=vmem, size = 0x9000, scoped, tag = 'internal scratch']
  %s0 = inlined_call_operand.vmem [shape: f32[2304,49], index: 0, kind: input, shape index: {}]
  %s1 = inlined_call_operand.hbm [shape: f32[1,2304], index: 1, kind: input, shape index: {}]
  %s2 = inlined_call_operand.hbm [shape: bf16[384,2304], index: 2, kind: input, shape index: {}]
  %s3 = inlined_call_operand.vmem [shape: f32[384,49], index: 3, kind: output, shape index: {}]
  %s4 = sld [smem:[#allocation0]]
  $region38: #{tpu_custom_call.1} parent=0
    _
  %s6 = ssub.s32 1, %s4
  %s7 = scalar_select 0, %s6, %s4
  $region1: #{tpu_custom_call.1} parent=0
    #allocation2 [shape = 'u8[9216]{0}', space=vmem, size = 0x2400, scoped, tag = 'input window, operand 1, single buffered']
    #allocation3 [shape = 's32[1]{0}', space=sflag, size = 0x4, scoped, tag = 'scoped memory for tpu_custom_call.1']
    #allocation4 [shape = 'u8[1769472]{0}', space=vmem, size = 0x1b0000, scoped, tag = 'input window, operand 2, single buffered']
    #allocation5 [shape = 's32[1]{0}', space=sflag, size = 0x4, scoped, tag = 'scoped memory for tpu_custom_call.1']
    %8 = vsyncpa [#allocation3], 0
    %9 = vsyncpa [#allocation5], 0
    // Predicated region
    $region2: #{tpu_custom_call.1} parent=1 // pred_check
      _
    $region3: #{tpu_custom_call.1} parent=1 // pred_check_branch
      %11 = sbr.rel (0) target = $region5
    $region4: #{tpu_custom_call.1} parent=1 // pred_region
      _
    $region5: #{tpu_custom_call.1} parent=1 // pred_fallthru
      _
    // Predicated region
    $region6: #{tpu_custom_call.1} parent=1 // pred_check
      _
    $region7: #{tpu_custom_call.1} parent=1 // pred_check_branch
      %13 = sbr.rel (0) target = $region9
    $region8: #{tpu_custom_call.1} parent=1 // pred_region
      %15 = vsyncadd [#allocation3], 0
      %s17 = sshll.u32 %s1, 4
      %s18 = int_to_ptr.hbm [resolvable:$true] %s17
      %s19 = sshll.u32 [#allocation2], 4
      %s20 = int_to_ptr.vmem [resolvable:$true] %s19
      %22 = dma.hbm_to_vmem [thread:$0]  %s18, 288, %s20, [#allocation3]
    $region9: #{tpu_custom_call.1} parent=1 // pred_fallthru
      _
    // Predicated region
    $region10: #{tpu_custom_call.1} parent=1 // pred_check
      _
    $region11: #{tpu_custom_call.1} parent=1 // pred_check_branch
      %24 = sbr.rel (0) target = $region13
    $region12: #{tpu_custom_call.1} parent=1 // pred_region
      %26 = vsyncadd [#allocation5], 0
      %s27 = sshll.u32 %s2, 4
      %s28 = int_to_ptr.hbm [resolvable:$true] %s27
      %s29 = sshll.u32 [#allocation4], 4
      %s30 = int_to_ptr.vmem [resolvable:$true] %s29
      %35 = dma.hbm_to_vmem [thread:$0]  %s28, 55296, %s30, [#allocation5], 1152, 1152, 72
    $region13: #{tpu_custom_call.1} parent=1 // pred_fallthru
      _
    // Predicated region
    $region14: #{tpu_custom_call.1} parent=1 // pred_check
      _
    $region15: #{tpu_custom_call.1} parent=1 // pred_check_branch
      %37 = sbr.rel (0) target = $region17
    $region16: #{tpu_custom_call.1} parent=1 // pred_region
      %39 = dma.done [#allocation3], 288
    $region17: #{tpu_custom_call.1} parent=1 // pred_fallthru
      _
    // Predicated region
    $region18: #{tpu_custom_call.1} parent=1 // pred_check
      _
    $region19: #{tpu_custom_call.1} parent=1 // pred_check_branch
      %41 = sbr.rel (0) target = $region21
    $region20: #{tpu_custom_call.1} parent=1 // pred_region
      %43 = dma.done [#allocation5], 55296
    $region21: #{tpu_custom_call.1} parent=1 // pred_fallthru
      _
    %v44 = vld [vmem:[#allocation2] sm:$0xff]
    %v45 = vld [vmem:[#allocation2 + $0x8] sm:$0xff]
    %v46 = vld [vmem:[#allocation2 + $0x10] sm:$0x3]
    %v47 = vxor.u32 %v44, 2147483648
    %v48 = vxor.u32 %v45, 2147483648
    %v49 = vxor.u32 %v46, 2147483648
    %v50 = vmul.f32 %v47, 1.442695
    %v51 = vpow.pop %v50
    %v52 = vmul.f32 %v48, 1.442695
    %v53 = vpow.pop %v52
    %v54 = vmul.f32 %v49, 1.442695
    %v55 = vpow.pop %v54
    %v56 = vadd.f32 %v51, 1.0
    %v57 = vadd.f32 %v53, 1.0
    %v58 = vadd.f32 %v55, 1.0
    %v59 = vrcp.pop %v56
    %v60 = vmul.f32 %v56, %v59
    %v61 = vsub.f32 1.0, %v60
    %v62 = vmul.f32 %v59, %v61
    %v63 = vadd.f32 %v59, %v62
    %vm64 = vweird.f32 %v56
    %vm65 = vweird.f32 %v59
    %vm66 = vmor %vm64, %vm65
    %v67 = vsel %vm66, %v59, %v63
    %v68 = vand.u32 2147483647, %v56
    %vm69 = vcmp.eq.f32.partialorder %v68, 8.507059e+37
    %v70 = vand.u32 %v56, 2147483648
    %v71 = vor.u32 1.1754944e-38, %v70
    %v72 = vsel %vm69, %v71, %v67
    %v73 = vmul.f32 1.0, %v72
    %v74 = vrcp.pop %v57
    %v75 = vmul.f32 %v57, %v74
    %v76 = vsub.f32 1.0, %v75
    %v77 = vmul.f32 %v74, %v76
    %v78 = vadd.f32 %v74, %v77
    %vm79 = vweird.f32 %v57
    %vm80 = vweird.f32 %v74
    %vm81 = vmor %vm79, %vm80
    %v82 = vsel %vm81, %v74, %v78
    %v83 = vand.u32 2147483647, %v57
    %vm84 = vcmp.eq.f32.partialorder %v83, 8.507059e+37
    %v85 = vand.u32 %v57, 2147483648
    %v86 = vor.u32 1.1754944e-38, %v85
    %v87 = vsel %vm84, %v86, %v82
    %v88 = vmul.f32 1.0, %v87
    %v89 = vrcp.pop %v58
    %v90 = vmul.f32 %v58, %v89
    %v91 = vsub.f32 1.0, %v90
    %v92 = vmul.f32 %v89, %v91
    %v93 = vadd.f32 %v89, %v92
    %vm94 = vweird.f32 %v58
    %vm95 = vweird.f32 %v89
    %vm96 = vmor %vm94, %vm95
    %v97 = vsel %vm96, %v89, %v93
    %v98 = vand.u32 2147483647, %v58
    %vm99 = vcmp.eq.f32.partialorder %v98, 8.507059e+37
    %v100 = vand.u32 %v58, 2147483648
    %v101 = vor.u32 1.1754944e-38, %v100
    %v102 = vsel %vm99, %v101, %v97
    %v103 = vmul.f32 1.0, %v102
    %v104 = vld [vmem:[#allocation4] sm:$0xff]
    %v105 = vld [vmem:[#allocation4 + $0x8] sm:$0xff]
    %v106 = vld [vmem:[#allocation4 + $0x10] sm:$0xff]
    %v107 = vld [vmem:[#allocation4 + $0x18] sm:$0xff]
    %v108 = vld [vmem:[#allocation4 + $0x20] sm:$0xff]
    %v109 = vld [vmem:[#allocation4 + $0x28] sm:$0xff]
    %v110 = vld [vmem:[#allocation4 + $0x30] sm:$0xff]
    %v111 = vld [vmem:[#allocation4 + $0x38] sm:$0xff]
    %v112 = vld [vmem:[#allocation4 + $0x40] sm:$0xff]
    %v113 = vld [vmem:[#allocation4 + $0x48] sm:$0xff]
    %v114 = vld [vmem:[#allocation4 + $0x50] sm:$0xff]
    %v115 = vld [vmem:[#allocation4 + $0x58] sm:$0xff]
    %v116 = vld [vmem:[#allocation4 + $0x60] sm:$0xff]
    %v117 = vld [vmem:[#allocation4 + $0x68] sm:$0xff]
    %v118 = vld [vmem:[#allocation4 + $0x70] sm:$0xff]
    %v119 = vld [vmem:[#allocation4 + $0x78] sm:$0xff]
    %v120 = vld [vmem:[#allocation4 + $0x80] sm:$0xff]
    %v121 = vld [vmem:[#allocation4 + $0x88] sm:$0xff]
    %v122 = vld [vmem:[#allocation4 + $0x90] sm:$0xff]
    %v123 = vld [vmem:[#allocation4 + $0x98] sm:$0xff]
    %v124 = vld [vmem:[#allocation4 + $0xa0] sm:$0xff]
    %v125 = vld [vmem:[#allocation4 + $0xa8] sm:$0xff]
    %v126 = vld [vmem:[#allocation4 + $0xb0] sm:$0xff]
    %v127 = vld [vmem:[#allocation4 + $0xb8] sm:$0xff]
    %v128 = vld [vmem:[#allocation4 + $0xc0] sm:$0xff]
    %v129 = vld [vmem:[#allocation4 + $0xc8] sm:$0xff]
    %v130 = vld [vmem:[#allocation4 + $0xd0] sm:$0xff]
    %v131 = vld [vmem:[#allocation4 + $0xd8] sm:$0xff]
    %v132 = vld [vmem:[#allocation4 + $0xe0] sm:$0xff]
    %v133 = vld [vmem:[#allocation4 + $0xe8] sm:$0xff]
    %v134 = vld [vmem:[#allocation4 + $0xf0] sm:$0xff]
    %v135 = vld [vmem:[#allocation4 + $0xf8] sm:$0xff]
    %v136 = vld [vmem:[#allocation4 + $0x100] sm:$0xff]
    %v137 = vld [vmem:[#allocation4 + $0x108] sm:$0xff]
    %v138 = vld [vmem:[#allocation4 + $0x110] sm:$0xff]
    %v139 = vld [vmem:[#allocation4 + $0x118] sm:$0xff]
    %v140 = vld [vmem:[#allocation4 + $0x120] sm:$0xff]
    %v141 = vld [vmem:[#allocation4 + $0x128] sm:$0xff]
    %v142 = vld [vmem:[#allocation4 + $0x130] sm:$0xff]
    %v143 = vld [vmem:[#allocation4 + $0x138] sm:$0xff]
    %v144 = vld [vmem:[#allocation4 + $0x140] sm:$0xff]
    %v145 = vld [vmem:[#allocation4 + $0x148] sm:$0xff]
    %v146 = vld [vmem:[#allocation4 + $0x150] sm:$0xff]
    %v147 = vld [vmem:[#allocation4 + $0x158] sm:$0xff]
    %v148 = vld [vmem:[#allocation4 + $0x160] sm:$0xff]
    %v149 = vld [vmem:[#allocation4 + $0x168] sm:$0xff]
    %v150 = vld [vmem:[#allocation4 + $0x170] sm:$0xff]
    %v151 = vld [vmem:[#allocation4 + $0x178] sm:$0xff]
    %v152 = vld [vmem:[#allocation4 + $0x180] sm:$0xff]
    %v153 = vld [vmem:[#allocation4 + $0x188] sm:$0xff]
    %v154 = vld [vmem:[#allocation4 + $0x190] sm:$0xff]
    %v155 = vld [vmem:[#allocation4 + $0x198] sm:$0xff]
    %v156 = vld [vmem:[#allocation4 + $0x1a0] sm:$0xff]
    %v157 = vld [vmem:[#allocation4 + $0x1a8] sm:$0xff]
    %v158 = vld [vmem:[#allocation4 + $0x1b0] sm:$0xff]
    %v159 = vld [vmem:[#allocation4 + $0x1b8] sm:$0xff]
    %v160 = vld [vmem:[#allocation4 + $0x1c0] sm:$0xff]
    %v161 = vld [vmem:[#allocation4 + $0x1c8] sm:$0xff]
    %v162 = vld [vmem:[#allocation4 + $0x1d0] sm:$0xff]
    %v163 = vld [vmem:[#allocation4 + $0x1d8] sm:$0xff]
    %v164 = vld [vmem:[#allocation4 + $0x1e0] sm:$0xff]
    %v165 = vld [vmem:[#allocation4 + $0x1e8] sm:$0xff]
    %v166 = vld [vmem:[#allocation4 + $0x1f0] sm:$0xff]
    %v167 = vld [vmem:[#allocation4 + $0x1f8] sm:$0xff]
    %v168 = vld [vmem:[#allocation4 + $0x200] sm:$0xff]
    %v169 = vld [vmem:[#allocation4 + $0x208] sm:$0xff]
    %v170 = vld [vmem:[#allocation4 + $0x210] sm:$0xff]
    %v171 = vld [vmem:[#allocation4 + $0x218] sm:$0xff]
    %v172 = vld [vmem:[#allocation4 + $0x220] sm:$0xff]
    %v173 = vld [vmem:[#allocation4 + $0x228] sm:$0xff]
    %v174 = vld [vmem:[#allocation4 + $0x230] sm:$0xff]
    %v175 = vld [vmem:[#allocation4 + $0x238] sm:$0xff]
    %v176 = vld [vmem:[#allocation4 + $0x240] sm:$0xff]
    %v177 = vld [vmem:[#allocation4 + $0x248] sm:$0xff]
    %v178 = vld [vmem:[#allocation4 + $0x250] sm:$0xff]
    %v179 = vld [vmem:[#allocation4 + $0x258] sm:$0xff]
    %v180 = vld [vmem:[#allocation4 + $0x260] sm:$0xff]
    %v181 = vld [vmem:[#allocation4 + $0x268] sm:$0xff]
    %v182 = vld [vmem:[#allocation4 + $0x270] sm:$0xff]
    %v183 = vld [vmem:[#allocation4 + $0x278] sm:$0xff]
    %v184 = vld [vmem:[#allocation4 + $0x280] sm:$0xff]
    %v185 = vld [vmem:[#allocation4 + $0x288] sm:$0xff]
    %v186 = vld [vmem:[#allocation4 + $0x290] sm:$0xff]
    %v187 = vld [vmem:[#allocation4 + $0x298] sm:$0xff]
    %v188 = vld [vmem:[#allocation4 + $0x2a0] sm:$0xff]
    %v189 = vld [vmem:[#allocation4 + $0x2a8] sm:$0xff]
    %v190 = vld [vmem:[#allocation4 + $0x2b0] sm:$0xff]
    %v191 = vld [vmem:[#allocation4 + $0x2b8] sm:$0xff]
    %v192 = vld [vmem:[#allocation4 + $0x2c0] sm:$0xff]
    %v193 = vld [vmem:[#allocation4 + $0x2c8] sm:$0xff]
    %v194 = vld [vmem:[#allocation4 + $0x2d0] sm:$0xff]
    %v195 = vld [vmem:[#allocation4 + $0x2d8] sm:$0xff]
    %v196 = vld [vmem:[#allocation4 + $0x2e0] sm:$0xff]
    %v197 = vld [vmem:[#allocation4 + $0x2e8] sm:$0xff]
    %v198 = vld [vmem:[#allocation4 + $0x2f0] sm:$0xff]
    %v199 = vld [vmem:[#allocation4 + $0x2f8] sm:$0xff]
    %v200 = vld [vmem:[#allocation4 + $0x300] sm:$0xff]
    %v201 = vld [vmem:[#allocation4 + $0x308] sm:$0xff]
    %v202 = vld [vmem:[#allocation4 + $0x310] sm:$0xff]
    %v203 = vld [vmem:[#allocation4 + $0x318] sm:$0xff]
    %v204 = vld [vmem:[#allocation4 + $0x320] sm:$0xff]
    %v205 = vld [vmem:[#allocation4 + $0x328] sm:$0xff]
    %v206 = vld [vmem:[#allocation4 + $0x330] sm:$0xff]
    %v207 = vld [vmem:[#allocation4 + $0x338] sm:$0xff]
    %v208 = vld [vmem:[#allocation4 + $0x340] sm:$0xff]
    %v209 = vld [vmem:[#allocation4 + $0x348] sm:$0xff]
    %v210 = vld [vmem:[#allocation4 + $0x350] sm:$0xff]
    %v211 = vld [vmem:[#allocation4 + $0x358] sm:$0xff]
    %v212 = vld [vmem:[#allocation4 + $0x360] sm:$0xff]
    %v213 = vld [vmem:[#allocation4 + $0x368] sm:$0xff]
    %v214 = vld [vmem:[#allocation4 + $0x370] sm:$0xff]
    %v215 = vld [vmem:[#allocation4 + $0x378] sm:$0xff]
    %v216 = vld [vmem:[#allocation4 + $0x380] sm:$0xff]
    %v217 = vld [vmem:[#allocation4 + $0x388] sm:$0xff]
    %v218 = vld [vmem:[#allocation4 + $0x390] sm:$0xff]
    %v219 = vld [vmem:[#allocation4 + $0x398] sm:$0xff]
    %v220 = vld [vmem:[#allocation4 + $0x3a0] sm:$0xff]
    %v221 = vld [vmem:[#allocation4 + $0x3a8] sm:$0xff]
    %v222 = vld [vmem:[#allocation4 + $0x3b0] sm:$0xff]
    %v223 = vld [vmem:[#allocation4 + $0x3b8] sm:$0xff]
    %v224 = vld [vmem:[#allocation4 + $0x3c0] sm:$0xff]
    %v225 = vld [vmem:[#allocation4 + $0x3c8] sm:$0xff]
    %v226 = vld [vmem:[#allocation4 + $0x3d0] sm:$0xff]
    %v227 = vld [vmem:[#allocation4 + $0x3d8] sm:$0xff]
    %v228 = vld [vmem:[#allocation4 + $0x3e0] sm:$0xff]
    %v229 = vld [vmem:[#allocation4 + $0x3e8] sm:$0xff]
    %v230 = vld [vmem:[#allocation4 + $0x3f0] sm:$0xff]
    %v231 = vld [vmem:[#allocation4 + $0x3f8] sm:$0xff]
    %v232 = vld [vmem:[#allocation4 + $0x400] sm:$0xff]
    %v233 = vld [vmem:[#allocation4 + $0x408] sm:$0xff]
    %v234 = vld [vmem:[#allocation4 + $0x410] sm:$0xff]
    %v235 = vld [vmem:[#allocation4 + $0x418] sm:$0xff]
    %v236 = vld [vmem:[#allocation4 + $0x420] sm:$0xff]
    %v237 = vld [vmem:[#allocation4 + $0x428] sm:$0xff]
    %v238 = vld [vmem:[#allocation4 + $0x430] sm:$0xff]
    %v239 = vld [vmem:[#allocation4 + $0x438] sm:$0xff]
    %v240 = vld [vmem:[#allocation4 + $0x440] sm:$0xff]
    %v241 = vld [vmem:[#allocation4 + $0x448] sm:$0xff]
    %v242 = vld [vmem:[#allocation4 + $0x450] sm:$0xff]
    %v243 = vld [vmem:[#allocation4 + $0x458] sm:$0xff]
    %v244 = vld [vmem:[#allocation4 + $0x460] sm:$0xff]
    %v245 = vld [vmem:[#allocation4 + $0x468] sm:$0xff]
    %v246 = vld [vmem:[#allocation4 + $0x470] sm:$0xff]
    %v247 = vld [vmem:[#allocation4 + $0x478] sm:$0xff]
    %v248 = vld [vmem:[#allocation4 + $0x480] sm:$0xff]
    %v249 = vld [vmem:[#allocation4 + $0x488] sm:$0xff]
    %v250 = vld [vmem:[#allocation4 + $0x490] sm:$0xff]
    %v251 = vld [vmem:[#allocation4 + $0x498] sm:$0xff]
    %v252 = vld [vmem:[#allocation4 + $0x4a0] sm:$0xff]
    %v253 = vld [vmem:[#allocation4 + $0x4a8] sm:$0xff]
    %v254 = vld [vmem:[#allocation4 + $0x4b0] sm:$0xff]
    %v255 = vld [vmem:[#allocation4 + $0x4b8] sm:$0xff]
    %v256 = vld [vmem:[#allocation4 + $0x4c0] sm:$0xff]
    %v257 = vld [vmem:[#allocation4 + $0x4c8] sm:$0xff]
    %v258 = vld [vmem:[#allocation4 + $0x4d0] sm:$0xff]
    %v259 = vld [vmem:[#allocation4 + $0x4d8] sm:$0xff]
    %v260 = vld [vmem:[#allocation4 + $0x4e0] sm:$0xff]
    %v261 = vld [vmem:[#allocation4 + $0x4e8] sm:$0xff]
    %v262 = vld [vmem:[#allocation4 + $0x4f0] sm:$0xff]
    %v263 = vld [vmem:[#allocation4 + $0x4f8] sm:$0xff]
    %v264 = vld [vmem:[#allocation4 + $0x500] sm:$0xff]
    %v265 = vld [vmem:[#allocation4 + $0x508] sm:$0xff]
    %v266 = vld [vmem:[#allocation4 + $0x510] sm:$0xff]
    %v267 = vld [vmem:[#allocation4 + $0x518] sm:$0xff]
    %v268 = vld [vmem:[#allocation4 + $0x520] sm:$0xff]
    %v269 = vld [vmem:[#allocation4 + $0x528] sm:$0xff]
    %v270 = vld [vmem:[#allocation4 + $0x530] sm:$0xff]
    %v271 = vld [vmem:[#allocation4 + $0x538] sm:$0xff]
    %v272 = vld [vmem:[#allocation4 + $0x540] sm:$0xff]
    %v273 = vld [vmem:[#allocation4 + $0x548] sm:$0xff]
    %v274 = vld [vmem:[#allocation4 + $0x550] sm:$0xff]
    %v275 = vld [vmem:[#allocation4 + $0x558] sm:$0xff]
    %v276 = vld [vmem:[#allocation4 + $0x560] sm:$0xff]
    %v277 = vld [vmem:[#allocation4 + $0x568] sm:$0xff]
    %v278 = vld [vmem:[#allocation4 + $0x570] sm:$0xff]
    %v279 = vld [vmem:[#allocation4 + $0x578] sm:$0xff]
    %v280 = vld [vmem:[#allocation4 + $0x580] sm:$0xff]
    %v281 = vld [vmem:[#allocation4 + $0x588] sm:$0xff]
    %v282 = vld [vmem:[#allocation4 + $0x590] sm:$0xff]
    %v283 = vld [vmem:[#allocation4 + $0x598] sm:$0xff]
    %v284 = vld [vmem:[#allocation4 + $0x5a0] sm:$0xff]
    %v285 = vld [vmem:[#allocation4 + $0x5a8] sm:$0xff]
    %v286 = vld [vmem:[#allocation4 + $0x5b0] sm:$0xff]
    %v287 = vld [vmem:[#allocation4 + $0x5b8] sm:$0xff]
    %v288 = vld [vmem:[#allocation4 + $0x5c0] sm:$0xff]
    %v289 = vld [vmem:[#allocation4 + $0x5c8] sm:$0xff]
    %v290 = vld [vmem:[#allocation4 + $0x5d0] sm:$0xff]
    %v291 = vld [vmem:[#allocation4 + $0x5d8] sm:$0xff]
    %v292 = vld [vmem:[#allocation4 + $0x5e0] sm:$0xff]
    %v293 = vld [vmem:[#allocation4 + $0x5e8] sm:$0xff]
    %v294 = vld [vmem:[#allocation4 + $0x5f0] sm:$0xff]
    %v295 = vld [vmem:[#allocation4 + $0x5f8] sm:$0xff]
    %v296 = vld [vmem:[#allocation4 + $0x600] sm:$0xff]
    %v297 = vld [vmem:[#allocation4 + $0x608] sm:$0xff]
    %v298 = vld [vmem:[#allocation4 + $0x610] sm:$0xff]
    %v299 = vld [vmem:[#allocation4 + $0x618] sm:$0xff]
    %v300 = vld [vmem:[#allocation4 + $0x620] sm:$0xff]
    %v301 = vld [vmem:[#allocation4 + $0x628] sm:$0xff]
    %v302 = vld [vmem:[#allocation4 + $0x630] sm:$0xff]
    %v303 = vld [vmem:[#allocation4 + $0x638] sm:$0xff]
    %v304 = vld [vmem:[#allocation4 + $0x640] sm:$0xff]
    %v305 = vld [vmem:[#allocation4 + $0x648] sm:$0xff]
    %v306 = vld [vmem:[#allocation4 + $0x650] sm:$0xff]
    %v307 = vld [vmem:[#allocation4 + $0x658] sm:$0xff]
    %v308 = vld [vmem:[#allocation4 + $0x660] sm:$0xff]
    %v309 = vld [vmem:[#allocation4 + $0x668] sm:$0xff]
    %v310 = vld [vmem:[#allocation4 + $0x670] sm:$0xff]
    %v311 = vld [vmem:[#allocation4 + $0x678] sm:$0xff]
    %v312 = vld [vmem:[#allocation4 + $0x680] sm:$0xff]
    %v313 = vld [vmem:[#allocation4 + $0x688] sm:$0xff]
    %v314 = vld [vmem:[#allocation4 + $0x690] sm:$0xff]
    %v315 = vld [vmem:[#allocation4 + $0x698] sm:$0xff]
    %v316 = vld [vmem:[#allocation4 + $0x6a0] sm:$0xff]
    %v317 = vld [vmem:[#allocation4 + $0x6a8] sm:$0xff]
    %v318 = vld [vmem:[#allocation4 + $0x6b0] sm:$0xff]
    %v319 = vld [vmem:[#allocation4 + $0x6b8] sm:$0xff]
    %v320 = vld [vmem:[#allocation4 + $0x6c0] sm:$0xff]
    %v321 = vld [vmem:[#allocation4 + $0x6c8] sm:$0xff]
    %v322 = vld [vmem:[#allocation4 + $0x6d0] sm:$0xff]
    %v323 = vld [vmem:[#allocation4 + $0x6d8] sm:$0xff]
    %v324 = vld [vmem:[#allocation4 + $0x6e0] sm:$0xff]
    %v325 = vld [vmem:[#allocation4 + $0x6e8] sm:$0xff]
    %v326 = vld [vmem:[#allocation4 + $0x6f0] sm:$0xff]
    %v327 = vld [vmem:[#allocation4 + $0x6f8] sm:$0xff]
    %v328 = vld [vmem:[#allocation4 + $0x700] sm:$0xff]
    %v329 = vld [vmem:[#allocation4 + $0x708] sm:$0xff]
    %v330 = vld [vmem:[#allocation4 + $0x710] sm:$0xff]
    %v331 = vld [vmem:[#allocation4 + $0x718] sm:$0xff]
    %v332 = vld [vmem:[#allocation4 + $0x720] sm:$0xff]
    %v333 = vld [vmem:[#allocation4 + $0x728] sm:$0xff]
    %v334 = vld [vmem:[#allocation4 + $0x730] sm:$0xff]
    %v335 = vld [vmem:[#allocation4 + $0x738] sm:$0xff]
    %v336 = vld [vmem:[#allocation4 + $0x740] sm:$0xff]
    %v337 = vld [vmem:[#allocation4 + $0x748] sm:$0xff]
    %v338 = vld [vmem:[#allocation4 + $0x750] sm:$0xff]
    %v339 = vld [vmem:[#allocation4 + $0x758] sm:$0xff]
    %v340 = vld [vmem:[#allocation4 + $0x760] sm:$0xff]
    %v341 = vld [vmem:[#allocation4 + $0x768] sm:$0xff]
    %v342 = vld [vmem:[#allocation4 + $0x770] sm:$0xff]
    %v343 = vld [vmem:[#allocation4 + $0x778] sm:$0xff]
    %v344 = vld [vmem:[#allocation4 + $0x780] sm:$0xff]
    %v345 = vld [vmem:[#allocation4 + $0x788] sm:$0xff]
    %v346 = vld [vmem:[#allocation4 + $0x790] sm:$0xff]
    %v347 = vld [vmem:[#allocation4 + $0x798] sm:$0xff]
    %v348 = vld [vmem:[#allocation4 + $0x7a0] sm:$0xff]
    %v349 = vld [vmem:[#allocation4 + $0x7a8] sm:$0xff]
    %v350 = vld [vmem:[#allocation4 + $0x7b0] sm:$0xff]
    %v351 = vld [vmem:[#allocation4 + $0x7b8] sm:$0xff]
    %v352 = vld [vmem:[#allocation4 + $0x7c0] sm:$0xff]
    %v353 = vld [vmem:[#allocation4 + $0x7c8] sm:$0xff]
    %v354 = vld [vmem:[#allocation4 + $0x7d0] sm:$0xff]
    %v355 = vld [vmem:[#allocation4 + $0x7d8] sm:$0xff]
    %v356 = vld [vmem:[#allocation4 + $0x7e0] sm:$0xff]
    %v357 = vld [vmem:[#allocation4 + $0x7e8] sm:$0xff]
    %v358 = vld [vmem:[#allocation4 + $0x7f0] sm:$0xff]
    %v359 = vld [vmem:[#allocation4 + $0x7f8] sm:$0xff]
    %v360 = vld [vmem:[#allocation4 + $0x800] sm:$0xff]
    %v361 = vld [vmem:[#allocation4 + $0x808] sm:$0xff]
    %v362 = vld [vmem:[#allocation4 + $0x810] sm:$0xff]
    %v363 = vld [vmem:[#allocation4 + $0x818] sm:$0xff]
    %v364 = vld [vmem:[#allocation4 + $0x820] sm:$0xff]
    %v365 = vld [vmem:[#allocation4 + $0x828] sm:$0xff]
    %v366 = vld [vmem:[#allocation4 + $0x830] sm:$0xff]
    %v367 = vld [vmem:[#allocation4 + $0x838] sm:$0xff]
    %v368 = vld [vmem:[#allocation4 + $0x840] sm:$0xff]
    %v369 = vld [vmem:[#allocation4 + $0x848] sm:$0xff]
    %v370 = vld [vmem:[#allocation4 + $0x850] sm:$0xff]
    %v371 = vld [vmem:[#allocation4 + $0x858] sm:$0xff]
    %v372 = vld [vmem:[#allocation4 + $0x860] sm:$0xff]
    %v373 = vld [vmem:[#allocation4 + $0x868] sm:$0xff]
    %v374 = vld [vmem:[#allocation4 + $0x870] sm:$0xff]
    %v375 = vld [vmem:[#allocation4 + $0x878] sm:$0xff]
    %v376 = vld [vmem:[#allocation4 + $0x880] sm:$0xff]
    %v377 = vld [vmem:[#allocation4 + $0x888] sm:$0xff]
    %v378 = vld [vmem:[#allocation4 + $0x890] sm:$0xff]
    %v379 = vld [vmem:[#allocation4 + $0x898] sm:$0xff]
    %v380 = vld [vmem:[#allocation4 + $0x8a0] sm:$0xff]
    %v381 = vld [vmem:[#allocation4 + $0x8a8] sm:$0xff]
    %v382 = vld [vmem:[#allocation4 + $0x8b0] sm:$0xff]
    %v383 = vld [vmem:[#allocation4 + $0x8b8] sm:$0xff]
    %v384 = vld [vmem:[#allocation4 + $0x8c0] sm:$0xff]
    %v385 = vld [vmem:[#allocation4 + $0x8c8] sm:$0xff]
    %v386 = vld [vmem:[#allocation4 + $0x8d0] sm:$0xff]
    %v387 = vld [vmem:[#allocation4 + $0x8d8] sm:$0xff]
    %v388 = vld [vmem:[#allocation4 + $0x8e0] sm:$0xff]
    %v389 = vld [vmem:[#allocation4 + $0x8e8] sm:$0xff]
    %v390 = vld [vmem:[#allocation4 + $0x8f0] sm:$0xff]
    %v391 = vld [vmem:[#allocation4 + $0x8f8] sm:$0xff]
    %v392 = vld [vmem:[#allocation4 + $0x900] sm:$0xff]
    %v393 = vld [vmem:[#allocation4 + $0x908] sm:$0xff]
    %v394 = vld [vmem:[#allocation4 + $0x910] sm:$0xff]
    %v395 = vld [vmem:[#allocation4 + $0x918] sm:$0xff]
    %v396 = vld [vmem:[#allocation4 + $0x920] sm:$0xff]
    %v397 = vld [vmem:[#allocation4 + $0x928] sm:$0xff]
    %v398 = vld [vmem:[#allocation4 + $0x930] sm:$0xff]
    %v399 = vld [vmem:[#allocation4 + $0x938] sm:$0xff]
    %v400 = vld [vmem:[#allocation4 + $0x940] sm:$0xff]
    %v401 = vld [vmem:[#allocation4 + $0x948] sm:$0xff]
    %v402 = vld [vmem:[#allocation4 + $0x950] sm:$0xff]
    %v403 = vld [vmem:[#allocation4 + $0x958] sm:$0xff]
    %v404 = vld [vmem:[#allocation4 + $0x960] sm:$0xff]
    %v405 = vld [vmem:[#allocation4 + $0x968] sm:$0xff]
    %v406 = vld [vmem:[#allocation4 + $0x970] sm:$0xff]
    %v407 = vld [vmem:[#allocation4 + $0x978] sm:$0xff]
    %v408 = vld [vmem:[#allocation4 + $0x980] sm:$0xff]
    %v409 = vld [vmem:[#allocation4 + $0x988] sm:$0xff]
    %v410 = vld [vmem:[#allocation4 + $0x990] sm:$0xff]
    %v411 = vld [vmem:[#allocation4 + $0x998] sm:$0xff]
    %v412 = vld [vmem:[#allocation4 + $0x9a0] sm:$0xff]
    %v413 = vld [vmem:[#allocation4 + $0x9a8] sm:$0xff]
    %v414 = vld [vmem:[#allocation4 + $0x9b0] sm:$0xff]
    %v415 = vld [vmem:[#allocation4 + $0x9b8] sm:$0xff]
    %v416 = vld [vmem:[#allocation4 + $0x9c0] sm:$0xff]
    %v417 = vld [vmem:[#allocation4 + $0x9c8] sm:$0xff]
    %v418 = vld [vmem:[#allocation4 + $0x9d0] sm:$0xff]
    %v419 = vld [vmem:[#allocation4 + $0x9d8] sm:$0xff]
    %v420 = vld [vmem:[#allocation4 + $0x9e0] sm:$0xff]
    %v421 = vld [vmem:[#allocation4 + $0x9e8] sm:$0xff]
    %v422 = vld [vmem:[#allocation4 + $0x9f0] sm:$0xff]
    %v423 = vld [vmem:[#allocation4 + $0x9f8] sm:$0xff]
    %v424 = vld [vmem:[#allocation4 + $0xa00] sm:$0xff]
    %v425 = vld [vmem:[#allocation4 + $0xa08] sm:$0xff]
    %v426 = vld [vmem:[#allocation4 + $0xa10] sm:$0xff]
    %v427 = vld [vmem:[#allocation4 + $0xa18] sm:$0xff]
    %v428 = vld [vmem:[#allocation4 + $0xa20] sm:$0xff]
    %v429 = vld [vmem:[#allocation4 + $0xa28] sm:$0xff]
    %v430 = vld [vmem:[#allocation4 + $0xa30] sm:$0xff]
    %v431 = vld [vmem:[#allocation4 + $0xa38] sm:$0xff]
    %v432 = vld [vmem:[#allocation4 + $0xa40] sm:$0xff]
    %v433 = vld [vmem:[#allocation4 + $0xa48] sm:$0xff]
    %v434 = vld [vmem:[#allocation4 + $0xa50] sm:$0xff]
    %v435 = vld [vmem:[#allocation4 + $0xa58] sm:$0xff]
    %v436 = vld [vmem:[#allocation4 + $0xa60] sm:$0xff]
    %v437 = vld [vmem:[#allocation4 + $0xa68] sm:$0xff]
    %v438 = vld [vmem:[#allocation4 + $0xa70] sm:$0xff]
    %v439 = vld [vmem:[#allocation4 + $0xa78] sm:$0xff]
    %v440 = vld [vmem:[#allocation4 + $0xa80] sm:$0xff]
    %v441 = vld [vmem:[#allocation4 + $0xa88] sm:$0xff]
    %v442 = vld [vmem:[#allocation4 + $0xa90] sm:$0xff]
    %v443 = vld [vmem:[#allocation4 + $0xa98] sm:$0xff]
    %v444 = vld [vmem:[#allocation4 + $0xaa0] sm:$0xff]
    %v445 = vld [vmem:[#allocation4 + $0xaa8] sm:$0xff]
    %v446 = vld [vmem:[#allocation4 + $0xab0] sm:$0xff]
    %v447 = vld [vmem:[#allocation4 + $0xab8] sm:$0xff]
    %v448 = vld [vmem:[#allocation4 + $0xac0] sm:$0xff]
    %v449 = vld [vmem:[#allocation4 + $0xac8] sm:$0xff]
    %v450 = vld [vmem:[#allocation4 + $0xad0] sm:$0xff]
    %v451 = vld [vmem:[#allocation4 + $0xad8] sm:$0xff]
    %v452 = vld [vmem:[#allocation4 + $0xae0] sm:$0xff]
    %v453 = vld [vmem:[#allocation4 + $0xae8] sm:$0xff]
    %v454 = vld [vmem:[#allocation4 + $0xaf0] sm:$0xff]
    %v455 = vld [vmem:[#allocation4 + $0xaf8] sm:$0xff]
    %v456 = vld [vmem:[#allocation4 + $0xb00] sm:$0xff]
    %v457 = vld [vmem:[#allocation4 + $0xb08] sm:$0xff]
    %v458 = vld [vmem:[#allocation4 + $0xb10] sm:$0xff]
    %v459 = vld [vmem:[#allocation4 + $0xb18] sm:$0xff]
    %v460 = vld [vmem:[#allocation4 + $0xb20] sm:$0xff]
    %v461 = vld [vmem:[#allocation4 + $0xb28] sm:$0xff]
    %v462 = vld [vmem:[#allocation4 + $0xb30] sm:$0xff]
    %v463 = vld [vmem:[#allocation4 + $0xb38] sm:$0xff]
    %v464 = vld [vmem:[#allocation4 + $0xb40] sm:$0xff]
    %v465 = vld [vmem:[#allocation4 + $0xb48] sm:$0xff]
    %v466 = vld [vmem:[#allocation4 + $0xb50] sm:$0xff]
    %v467 = vld [vmem:[#allocation4 + $0xb58] sm:$0xff]
    %v468 = vld [vmem:[#allocation4 + $0xb60] sm:$0xff]
    %v469 = vld [vmem:[#allocation4 + $0xb68] sm:$0xff]
    %v470 = vld [vmem:[#allocation4 + $0xb70] sm:$0xff]
    %v471 = vld [vmem:[#allocation4 + $0xb78] sm:$0xff]
    %v472 = vld [vmem:[#allocation4 + $0xb80] sm:$0xff]
    %v473 = vld [vmem:[#allocation4 + $0xb88] sm:$0xff]
    %v474 = vld [vmem:[#allocation4 + $0xb90] sm:$0xff]
    %v475 = vld [vmem:[#allocation4 + $0xb98] sm:$0xff]
    %v476 = vld [vmem:[#allocation4 + $0xba0] sm:$0xff]
    %v477 = vld [vmem:[#allocation4 + $0xba8] sm:$0xff]
    %v478 = vld [vmem:[#allocation4 + $0xbb0] sm:$0xff]
    %v479 = vld [vmem:[#allocation4 + $0xbb8] sm:$0xff]
    %v480 = vld [vmem:[#allocation4 + $0xbc0] sm:$0xff]
    %v481 = vld [vmem:[#allocation4 + $0xbc8] sm:$0xff]
    %v482 = vld [vmem:[#allocation4 + $0xbd0] sm:$0xff]
    %v483 = vld [vmem:[#allocation4 + $0xbd8] sm:$0xff]
    %v484 = vld [vmem:[#allocation4 + $0xbe0] sm:$0xff]
    %v485 = vld [vmem:[#allocation4 + $0xbe8] sm:$0xff]
    %v486 = vld [vmem:[#allocation4 + $0xbf0] sm:$0xff]
    %v487 = vld [vmem:[#allocation4 + $0xbf8] sm:$0xff]
    %v488 = vld [vmem:[#allocation4 + $0xc00] sm:$0xff]
    %v489 = vld [vmem:[#allocation4 + $0xc08] sm:$0xff]
    %v490 = vld [vmem:[#allocation4 + $0xc10] sm:$0xff]
    %v491 = vld [vmem:[#allocation4 + $0xc18] sm:$0xff]
    %v492 = vld [vmem:[#allocation4 + $0xc20] sm:$0xff]
    %v493 = vld [vmem:[#allocation4 + $0xc28] sm:$0xff]
    %v494 = vld [vmem:[#allocation4 + $0xc30] sm:$0xff]
    %v495 = vld [vmem:[#allocation4 + $0xc38] sm:$0xff]
    %v496 = vld [vmem:[#allocation4 + $0xc40] sm:$0xff]
    %v497 = vld [vmem:[#allocation4 + $0xc48] sm:$0xff]
    %v498 = vld [vmem:[#allocation4 + $0xc50] sm:$0xff]
    %v499 = vld [vmem:[#allocation4 + $0xc58] sm:$0xff]
    %v500 = vld [vmem:[#allocation4 + $0xc60] sm:$0xff]
    %v501 = vld [vmem:[#allocation4 + $0xc68] sm:$0xff]
    %v502 = vld [vmem:[#allocation4 + $0xc70] sm:$0xff]
    %v503 = vld [vmem:[#allocation4 + $0xc78] sm:$0xff]
    %v504 = vld [vmem:[#allocation4 + $0xc80] sm:$0xff]
    %v505 = vld [vmem:[#allocation4 + $0xc88] sm:$0xff]
    %v506 = vld [vmem:[#allocation4 + $0xc90] sm:$0xff]
    %v507 = vld [vmem:[#allocation4 + $0xc98] sm:$0xff]
    %v508 = vld [vmem:[#allocation4 + $0xca0] sm:$0xff]
    %v509 = vld [vmem:[#allocation4 + $0xca8] sm:$0xff]
    %v510 = vld [vmem:[#allocation4 + $0xcb0] sm:$0xff]
    %v511 = vld [vmem:[#allocation4 + $0xcb8] sm:$0xff]
    %v512 = vld [vmem:[#allocation4 + $0xcc0] sm:$0xff]
    %v513 = vld [vmem:[#allocation4 + $0xcc8] sm:$0xff]
    %v514 = vld [vmem:[#allocation4 + $0xcd0] sm:$0xff]
    %v515 = vld [vmem:[#allocation4 + $0xcd8] sm:$0xff]
    %v516 = vld [vmem:[#allocation4 + $0xce0] sm:$0xff]
    %v517 = vld [vmem:[#allocation4 + $0xce8] sm:$0xff]
    %v518 = vld [vmem:[#allocation4 + $0xcf0] sm:$0xff]
    %v519 = vld [vmem:[#allocation4 + $0xcf8] sm:$0xff]
    %v520 = vld [vmem:[#allocation4 + $0xd00] sm:$0xff]
    %v521 = vld [vmem:[#allocation4 + $0xd08] sm:$0xff]
    %v522 = vld [vmem:[#allocation4 + $0xd10] sm:$0xff]
    %v523 = vld [vmem:[#allocation4 + $0xd18] sm:$0xff]
    %v524 = vld [vmem:[#allocation4 + $0xd20] sm:$0xff]
    %v525 = vld [vmem:[#allocation4 + $0xd28] sm:$0xff]
    %v526 = vld [vmem:[#allocation4 + $0xd30] sm:$0xff]
    %v527 = vld [vmem:[#allocation4 + $0xd38] sm:$0xff]
    %v528 = vld [vmem:[#allocation4 + $0xd40] sm:$0xff]
    %v529 = vld [vmem:[#allocation4 + $0xd48] sm:$0xff]
    %v530 = vld [vmem:[#allocation4 + $0xd50] sm:$0xff]
    %v531 = vld [vmem:[#allocation4 + $0xd58] sm:$0xff]
    %v532 = vld [vmem:[#allocation4 + $0xd60] sm:$0xff]
    %v533 = vld [vmem:[#allocation4 + $0xd68] sm:$0xff]
    %v534 = vld [vmem:[#allocation4 + $0xd70] sm:$0xff]
    %v535 = vld [vmem:[#allocation4 + $0xd78] sm:$0xff]
    %v536 = vunpack.c.l.bf16 %v104
    %v537 = vunpack.c.h.bf16 %v104
    %v538 = vunpack.c.l.bf16 %v105
    %v539 = vunpack.c.h.bf16 %v105
    %v540 = vunpack.c.l.bf16 %v106
    %v541 = vunpack.c.h.bf16 %v106
    %v542 = vunpack.c.l.bf16 %v107
    %v543 = vunpack.c.h.bf16 %v107
    %v544 = vunpack.c.l.bf16 %v108
    %v545 = vunpack.c.h.bf16 %v108
    %v546 = vunpack.c.l.bf16 %v109
    %v547 = vunpack.c.h.bf16 %v109
    %v548 = vunpack.c.l.bf16 %v110
    %v549 = vunpack.c.h.bf16 %v110
    %v550 = vunpack.c.l.bf16 %v111
    %v551 = vunpack.c.h.bf16 %v111
    %v552 = vunpack.c.l.bf16 %v112
    %v553 = vunpack.c.h.bf16 %v112
    %v554 = vunpack.c.l.bf16 %v113
    %v555 = vunpack.c.h.bf16 %v113
    %v556 = vunpack.c.l.bf16 %v114
    %v557 = vunpack.c.h.bf16 %v114
    %v558 = vunpack.c.l.bf16 %v115
    %v559 = vunpack.c.h.bf16 %v115
    %v560 = vunpack.c.l.bf16 %v116
    %v561 = vunpack.c.h.bf16 %v116
    %v562 = vunpack.c.l.bf16 %v117
    %v563 = vunpack.c.h.bf16 %v117
    %v564 = vunpack.c.l.bf16 %v118
    %v565 = vunpack.c.h.bf16 %v118
    %v566 = vunpack.c.l.bf16 %v119
    %v567 = vunpack.c.h.bf16 %v119
    %v568 = vunpack.c.l.bf16 %v120
    %v569 = vunpack.c.h.bf16 %v120
    %v570 = vunpack.c.l.bf16 %v121
    %v571 = vunpack.c.h.bf16 %v121
    %v572 = vunpack.c.l.bf16 %v122
    %v573 = vunpack.c.h.bf16 %v122
    %v574 = vunpack.c.l.bf16 %v123
    %v575 = vunpack.c.h.bf16 %v123
    %v576 = vunpack.c.l.bf16 %v124
    %v577 = vunpack.c.h.bf16 %v124
    %v578 = vunpack.c.l.bf16 %v125
    %v579 = vunpack.c.h.bf16 %v125
    %v580 = vunpack.c.l.bf16 %v126
    %v581 = vunpack.c.h.bf16 %v126
    %v582 = vunpack.c.l.bf16 %v127
    %v583 = vunpack.c.h.bf16 %v127
    %v584 = vunpack.c.l.bf16 %v128
    %v585 = vunpack.c.h.bf16 %v128
    %v586 = vunpack.c.l.bf16 %v129
    %v587 = vunpack.c.h.bf16 %v129
    %v588 = vunpack.c.l.bf16 %v130
    %v589 = vunpack.c.h.bf16 %v130
    %v590 = vunpack.c.l.bf16 %v131
    %v591 = vunpack.c.h.bf16 %v131
    %v592 = vunpack.c.l.bf16 %v132
    %v593 = vunpack.c.h.bf16 %v132
    %v594 = vunpack.c.l.bf16 %v133
    %v595 = vunpack.c.h.bf16 %v133
    %v596 = vunpack.c.l.bf16 %v134
    %v597 = vunpack.c.h.bf16 %v134
    %v598 = vunpack.c.l.bf16 %v135
    %v599 = vunpack.c.h.bf16 %v135
    %v600 = vunpack.c.l.bf16 %v136
    %v601 = vunpack.c.h.bf16 %v136
    %v602 = vunpack.c.l.bf16 %v137
    %v603 = vunpack.c.h.bf16 %v137
    %v604 = vunpack.c.l.bf16 %v138
    %v605 = vunpack.c.h.bf16 %v138
    %v606 = vunpack.c.l.bf16 %v139
    %v607 = vunpack.c.h.bf16 %v139
    %v608 = vunpack.c.l.bf16 %v140
    %v609 = vunpack.c.h.bf16 %v140
    %v610 = vunpack.c.l.bf16 %v141
    %v611 = vunpack.c.h.bf16 %v141
    %v612 = vunpack.c.l.bf16 %v142
    %v613 = vunpack.c.h.bf16 %v142
    %v614 = vunpack.c.l.bf16 %v143
    %v615 = vunpack.c.h.bf16 %v143
    %v616 = vunpack.c.l.bf16 %v144
    %v617 = vunpack.c.h.bf16 %v144
    %v618 = vunpack.c.l.bf16 %v145
    %v619 = vunpack.c.h.bf16 %v145
    %v620 = vunpack.c.l.bf16 %v146
    %v621 = vunpack.c.h.bf16 %v146
    %v622 = vunpack.c.l.bf16 %v147
    %v623 = vunpack.c.h.bf16 %v147
    %v624 = vunpack.c.l.bf16 %v148
    %v625 = vunpack.c.h.bf16 %v148
    %v626 = vunpack.c.l.bf16 %v149
    %v627 = vunpack.c.h.bf16 %v149
    %v628 = vunpack.c.l.bf16 %v150
    %v629 = vunpack.c.h.bf16 %v150
    %v630 = vunpack.c.l.bf16 %v151
    %v631 = vunpack.c.h.bf16 %v151
    %v632 = vunpack.c.l.bf16 %v152
    %v633 = vunpack.c.h.bf16 %v152
    %v634 = vunpack.c.l.bf16 %v153
    %v635 = vunpack.c.h.bf16 %v153
    %v636 = vunpack.c.l.bf16 %v154
    %v637 = vunpack.c.h.bf16 %v154
    %v638 = vunpack.c.l.bf16 %v155
    %v639 = vunpack.c.h.bf16 %v155
    %v640 = vunpack.c.l.bf16 %v156
    %v641 = vunpack.c.h.bf16 %v156
    %v642 = vunpack.c.l.bf16 %v157
    %v643 = vunpack.c.h.bf16 %v157
    %v644 = vunpack.c.l.bf16 %v158
    %v645 = vunpack.c.h.bf16 %v158
    %v646 = vunpack.c.l.bf16 %v159
    %v647 = vunpack.c.h.bf16 %v159
    %v648 = vunpack.c.l.bf16 %v160
    %v649 = vunpack.c.h.bf16 %v160
    %v650 = vunpack.c.l.bf16 %v161
    %v651 = vunpack.c.h.bf16 %v161
    %v652 = vunpack.c.l.bf16 %v162
    %v653 = vunpack.c.h.bf16 %v162
    %v654 = vunpack.c.l.bf16 %v163
    %v655 = vunpack.c.h.bf16 %v163
    %v656 = vunpack.c.l.bf16 %v164
    %v657 = vunpack.c.h.bf16 %v164
    %v658 = vunpack.c.l.bf16 %v165
    %v659 = vunpack.c.h.bf16 %v165
    %v660 = vunpack.c.l.bf16 %v166
    %v661 = vunpack.c.h.bf16 %v166
    %v662 = vunpack.c.l.bf16 %v167
    %v663 = vunpack.c.h.bf16 %v167
    %v664 = vunpack.c.l.bf16 %v168
    %v665 = vunpack.c.h.bf16 %v168
    %v666 = vunpack.c.l.bf16 %v169
    %v667 = vunpack.c.h.bf16 %v169
    %v668 = vunpack.c.l.bf16 %v170
    %v669 = vunpack.c.h.bf16 %v170
    %v670 = vunpack.c.l.bf16 %v171
    %v671 = vunpack.c.h.bf16 %v171
    %v672 = vunpack.c.l.bf16 %v172
    %v673 = vunpack.c.h.bf16 %v172
    %v674 = vunpack.c.l.bf16 %v173
    %v675 = vunpack.c.h.bf16 %v173
    %v676 = vunpack.c.l.bf16 %v174
    %v677 = vunpack.c.h.bf16 %v174
    %v678 = vunpack.c.l.bf16 %v175
    %v679 = vunpack.c.h.bf16 %v175
    %v680 = vunpack.c.l.bf16 %v176
    %v681 = vunpack.c.h.bf16 %v176
    %v682 = vunpack.c.l.bf16 %v177
    %v683 = vunpack.c.h.bf16 %v177
    %v684 = vunpack.c.l.bf16 %v178
    %v685 = vunpack.c.h.bf16 %v178
    %v686 = vunpack.c.l.bf16 %v179
    %v687 = vunpack.c.h.bf16 %v179
    %v688 = vunpack.c.l.bf16 %v180
    %v689 = vunpack.c.h.bf16 %v180
    %v690 = vunpack.c.l.bf16 %v181
    %v691 = vunpack.c.h.bf16 %v181
    %v692 = vunpack.c.l.bf16 %v182
    %v693 = vunpack.c.h.bf16 %v182
    %v694 = vunpack.c.l.bf16 %v183
    %v695 = vunpack.c.h.bf16 %v183
    %v696 = vunpack.c.l.bf16 %v184
    %v697 = vunpack.c.h.bf16 %v184
    %v698 = vunpack.c.l.bf16 %v185
    %v699 = vunpack.c.h.bf16 %v185
    %v700 = vunpack.c.l.bf16 %v186
    %v701 = vunpack.c.h.bf16 %v186
    %v702 = vunpack.c.l.bf16 %v187
    %v703 = vunpack.c.h.bf16 %v187
    %v704 = vunpack.c.l.bf16 %v188
    %v705 = vunpack.c.h.bf16 %v188
    %v706 = vunpack.c.l.bf16 %v189
    %v707 = vunpack.c.h.bf16 %v189
    %v708 = vunpack.c.l.bf16 %v190
    %v709 = vunpack.c.h.bf16 %v190
    %v710 = vunpack.c.l.bf16 %v191
    %v711 = vunpack.c.h.bf16 %v191
    %v712 = vunpack.c.l.bf16 %v192
    %v713 = vunpack.c.h.bf16 %v192
    %v714 = vunpack.c.l.bf16 %v193
    %v715 = vunpack.c.h.bf16 %v193
    %v716 = vunpack.c.l.bf16 %v194
    %v717 = vunpack.c.h.bf16 %v194
    %v718 = vunpack.c.l.bf16 %v195
    %v719 = vunpack.c.h.bf16 %v195
    %v720 = vunpack.c.l.bf16 %v196
    %v721 = vunpack.c.h.bf16 %v196
    %v722 = vunpack.c.l.bf16 %v197
    %v723 = vunpack.c.h.bf16 %v197
    %v724 = vunpack.c.l.bf16 %v198
    %v725 = vunpack.c.h.bf16 %v198
    %v726 = vunpack.c.l.bf16 %v199
    %v727 = vunpack.c.h.bf16 %v199
    %v728 = vunpack.c.l.bf16 %v200
    %v729 = vunpack.c.h.bf16 %v200
    %v730 = vunpack.c.l.bf16 %v201
    %v731 = vunpack.c.h.bf16 %v201
    %v732 = vunpack.c.l.bf16 %v202
    %v733 = vunpack.c.h.bf16 %v202
    %v734 = vunpack.c.l.bf16 %v203
    %v735 = vunpack.c.h.bf16 %v203
    %v736 = vunpack.c.l.bf16 %v204
    %v737 = vunpack.c.h.bf16 %v204
    %v738 = vunpack.c.l.bf16 %v205
    %v739 = vunpack.c.h.bf16 %v205
    %v740 = vunpack.c.l.bf16 %v206
    %v741 = vunpack.c.h.bf16 %v206
    %v742 = vunpack.c.l.bf16 %v207
    %v743 = vunpack.c.h.bf16 %v207
    %v744 = vunpack.c.l.bf16 %v208
    %v745 = vunpack.c.h.bf16 %v208
    %v746 = vunpack.c.l.bf16 %v209
    %v747 = vunpack.c.h.bf16 %v209
    %v748 = vunpack.c.l.bf16 %v210
    %v749 = vunpack.c.h.bf16 %v210
    %v750 = vunpack.c.l.bf16 %v211
    %v751 = vunpack.c.h.bf16 %v211
    %v752 = vunpack.c.l.bf16 %v212
    %v753 = vunpack.c.h.bf16 %v212
    %v754 = vunpack.c.l.bf16 %v213
    %v755 = vunpack.c.h.bf16 %v213
    %v756 = vunpack.c.l.bf16 %v214
    %v757 = vunpack.c.h.bf16 %v214
    %v758 = vunpack.c.l.bf16 %v215
    %v759 = vunpack.c.h.bf16 %v215
    %v760 = vunpack.c.l.bf16 %v216
    %v761 = vunpack.c.h.bf16 %v216
    %v762 = vunpack.c.l.bf16 %v217
    %v763 = vunpack.c.h.bf16 %v217
    %v764 = vunpack.c.l.bf16 %v218
    %v765 = vunpack.c.h.bf16 %v218
    %v766 = vunpack.c.l.bf16 %v219
    %v767 = vunpack.c.h.bf16 %v219
    %v768 = vunpack.c.l.bf16 %v220
    %v769 = vunpack.c.h.bf16 %v220
    %v770 = vunpack.c.l.bf16 %v221
    %v771 = vunpack.c.h.bf16 %v221
    %v772 = vunpack.c.l.bf16 %v222
    %v773 = vunpack.c.h.bf16 %v222
    %v774 = vunpack.c.l.bf16 %v223
    %v775 = vunpack.c.h.bf16 %v223
    %v776 = vunpack.c.l.bf16 %v224
    %v777 = vunpack.c.h.bf16 %v224
    %v778 = vunpack.c.l.bf16 %v225
    %v779 = vunpack.c.h.bf16 %v225
    %v780 = vunpack.c.l.bf16 %v226
    %v781 = vunpack.c.h.bf16 %v226
    %v782 = vunpack.c.l.bf16 %v227
    %v783 = vunpack.c.h.bf16 %v227
    %v784 = vunpack.c.l.bf16 %v228
    %v785 = vunpack.c.h.bf16 %v228
    %v786 = vunpack.c.l.bf16 %v229
    %v787 = vunpack.c.h.bf16 %v229
    %v788 = vunpack.c.l.bf16 %v230
    %v789 = vunpack.c.h.bf16 %v230
    %v790 = vunpack.c.l.bf16 %v231
    %v791 = vunpack.c.h.bf16 %v231
    %v792 = vunpack.c.l.bf16 %v232
    %v793 = vunpack.c.h.bf16 %v232
    %v794 = vunpack.c.l.bf16 %v233
    %v795 = vunpack.c.h.bf16 %v233
    %v796 = vunpack.c.l.bf16 %v234
    %v797 = vunpack.c.h.bf16 %v234
    %v798 = vunpack.c.l.bf16 %v235
    %v799 = vunpack.c.h.bf16 %v235
    %v800 = vunpack.c.l.bf16 %v236
    %v801 = vunpack.c.h.bf16 %v236
    %v802 = vunpack.c.l.bf16 %v237
    %v803 = vunpack.c.h.bf16 %v237
    %v804 = vunpack.c.l.bf16 %v238
    %v805 = vunpack.c.h.bf16 %v238
    %v806 = vunpack.c.l.bf16 %v239
    %v807 = vunpack.c.h.bf16 %v239
    %v808 = vunpack.c.l.bf16 %v240
    %v809 = vunpack.c.h.bf16 %v240
    %v810 = vunpack.c.l.bf16 %v241
    %v811 = vunpack.c.h.bf16 %v241
    %v812 = vunpack.c.l.bf16 %v242
    %v813 = vunpack.c.h.bf16 %v242
    %v814 = vunpack.c.l.bf16 %v243
    %v815 = vunpack.c.h.bf16 %v243
    %v816 = vunpack.c.l.bf16 %v244
    %v817 = vunpack.c.h.bf16 %v244
    %v818 = vunpack.c.l.bf16 %v245
    %v819 = vunpack.c.h.bf16 %v245
    %v820 = vunpack.c.l.bf16 %v246
    %v821 = vunpack.c.h.bf16 %v246
    %v822 = vunpack.c.l.bf16 %v247
    %v823 = vunpack.c.h.bf16 %v247
    %v824 = vunpack.c.l.bf16 %v248
    %v825 = vunpack.c.h.bf16 %v248
    %v826 = vunpack.c.l.bf16 %v249
    %v827 = vunpack.c.h.bf16 %v249
    %v828 = vunpack.c.l.bf16 %v250
    %v829 = vunpack.c.h.bf16 %v250
    %v830 = vunpack.c.l.bf16 %v251
    %v831 = vunpack.c.h.bf16 %v251
    %v832 = vunpack.c.l.bf16 %v252
    %v833 = vunpack.c.h.bf16 %v252
    %v834 = vunpack.c.l.bf16 %v253
    %v835 = vunpack.c.h.bf16 %v253
    %v836 = vunpack.c.l.bf16 %v254
    %v837 = vunpack.c.h.bf16 %v254
    %v838 = vunpack.c.l.bf16 %v255
    %v839 = vunpack.c.h.bf16 %v255
    %v840 = vunpack.c.l.bf16 %v256
    %v841 = vunpack.c.h.bf16 %v256
    %v842 = vunpack.c.l.bf16 %v257
    %v843 = vunpack.c.h.bf16 %v257
    %v844 = vunpack.c.l.bf16 %v258
    %v845 = vunpack.c.h.bf16 %v258
    %v846 = vunpack.c.l.bf16 %v259
    %v847 = vunpack.c.h.bf16 %v259
    %v848 = vunpack.c.l.bf16 %v260
    %v849 = vunpack.c.h.bf16 %v260
    %v850 = vunpack.c.l.bf16 %v261
    %v851 = vunpack.c.h.bf16 %v261
    %v852 = vunpack.c.l.bf16 %v262
    %v853 = vunpack.c.h.bf16 %v262
    %v854 = vunpack.c.l.bf16 %v263
    %v855 = vunpack.c.h.bf16 %v263
    %v856 = vunpack.c.l.bf16 %v264
    %v857 = vunpack.c.h.bf16 %v264
    %v858 = vunpack.c.l.bf16 %v265
    %v859 = vunpack.c.h.bf16 %v265
    %v860 = vunpack.c.l.bf16 %v266
    %v861 = vunpack.c.h.bf16 %v266
    %v862 = vunpack.c.l.bf16 %v267
    %v863 = vunpack.c.h.bf16 %v267
    %v864 = vunpack.c.l.bf16 %v268
    %v865 = vunpack.c.h.bf16 %v268
    %v866 = vunpack.c.l.bf16 %v269
    %v867 = vunpack.c.h.bf16 %v269
    %v868 = vunpack.c.l.bf16 %v270
    %v869 = vunpack.c.h.bf16 %v270
    %v870 = vunpack.c.l.bf16 %v271
    %v871 = vunpack.c.h.bf16 %v271
    %v872 = vunpack.c.l.bf16 %v272
    %v873 = vunpack.c.h.bf16 %v272
    %v874 = vunpack.c.l.bf16 %v273
    %v875 = vunpack.c.h.bf16 %v273
    %v876 = vunpack.c.l.bf16 %v274
    %v877 = vunpack.c.h.bf16 %v274
    %v878 = vunpack.c.l.bf16 %v275
    %v879 = vunpack.c.h.bf16 %v275
    %v880 = vunpack.c.l.bf16 %v276
    %v881 = vunpack.c.h.bf16 %v276
    %v882 = vunpack.c.l.bf16 %v277
    %v883 = vunpack.c.h.bf16 %v277
    %v884 = vunpack.c.l.bf16 %v278
    %v885 = vunpack.c.h.bf16 %v278
    %v886 = vunpack.c.l.bf16 %v279
    %v887 = vunpack.c.h.bf16 %v279
    %v888 = vunpack.c.l.bf16 %v280
    %v889 = vunpack.c.h.bf16 %v280
    %v890 = vunpack.c.l.bf16 %v281
    %v891 = vunpack.c.h.bf16 %v281
    %v892 = vunpack.c.l.bf16 %v282
    %v893 = vunpack.c.h.bf16 %v282
    %v894 = vunpack.c.l.bf16 %v283
    %v895 = vunpack.c.h.bf16 %v283
    %v896 = vunpack.c.l.bf16 %v284
    %v897 = vunpack.c.h.bf16 %v284
    %v898 = vunpack.c.l.bf16 %v285
    %v899 = vunpack.c.h.bf16 %v285
    %v900 = vunpack.c.l.bf16 %v286
    %v901 = vunpack.c.h.bf16 %v286
    %v902 = vunpack.c.l.bf16 %v287
    %v903 = vunpack.c.h.bf16 %v287
    %v904 = vunpack.c.l.bf16 %v288
    %v905 = vunpack.c.h.bf16 %v288
    %v906 = vunpack.c.l.bf16 %v289
    %v907 = vunpack.c.h.bf16 %v289
    %v908 = vunpack.c.l.bf16 %v290
    %v909 = vunpack.c.h.bf16 %v290
    %v910 = vunpack.c.l.bf16 %v291
    %v911 = vunpack.c.h.bf16 %v291
    %v912 = vunpack.c.l.bf16 %v292
    %v913 = vunpack.c.h.bf16 %v292
    %v914 = vunpack.c.l.bf16 %v293
    %v915 = vunpack.c.h.bf16 %v293
    %v916 = vunpack.c.l.bf16 %v294
    %v917 = vunpack.c.h.bf16 %v294
    %v918 = vunpack.c.l.bf16 %v295
    %v919 = vunpack.c.h.bf16 %v295
    %v920 = vunpack.c.l.bf16 %v296
    %v921 = vunpack.c.h.bf16 %v296
    %v922 = vunpack.c.l.bf16 %v297
    %v923 = vunpack.c.h.bf16 %v297
    %v924 = vunpack.c.l.bf16 %v298
    %v925 = vunpack.c.h.bf16 %v298
    %v926 = vunpack.c.l.bf16 %v299
    %v927 = vunpack.c.h.bf16 %v299
    %v928 = vunpack.c.l.bf16 %v300
    %v929 = vunpack.c.h.bf16 %v300
    %v930 = vunpack.c.l.bf16 %v301
    %v931 = vunpack.c.h.bf16 %v301
    %v932 = vunpack.c.l.bf16 %v302
    %v933 = vunpack.c.h.bf16 %v302
    %v934 = vunpack.c.l.bf16 %v303
    %v935 = vunpack.c.h.bf16 %v303
    %v936 = vunpack.c.l.bf16 %v304
    %v937 = vunpack.c.h.bf16 %v304
    %v938 = vunpack.c.l.bf16 %v305
    %v939 = vunpack.c.h.bf16 %v305
    %v940 = vunpack.c.l.bf16 %v306
    %v941 = vunpack.c.h.bf16 %v306
    %v942 = vunpack.c.l.bf16 %v307
    %v943 = vunpack.c.h.bf16 %v307
    %v944 = vunpack.c.l.bf16 %v308
    %v945 = vunpack.c.h.bf16 %v308
    %v946 = vunpack.c.l.bf16 %v309
    %v947 = vunpack.c.h.bf16 %v309
    %v948 = vunpack.c.l.bf16 %v310
    %v949 = vunpack.c.h.bf16 %v310
    %v950 = vunpack.c.l.bf16 %v311
    %v951 = vunpack.c.h.bf16 %v311
    %v952 = vunpack.c.l.bf16 %v312
    %v953 = vunpack.c.h.bf16 %v312
    %v954 = vunpack.c.l.bf16 %v313
    %v955 = vunpack.c.h.bf16 %v313
    %v956 = vunpack.c.l.bf16 %v314
    %v957 = vunpack.c.h.bf16 %v314
    %v958 = vunpack.c.l.bf16 %v315
    %v959 = vunpack.c.h.bf16 %v315
    %v960 = vunpack.c.l.bf16 %v316
    %v961 = vunpack.c.h.bf16 %v316
    %v962 = vunpack.c.l.bf16 %v317
    %v963 = vunpack.c.h.bf16 %v317
    %v964 = vunpack.c.l.bf16 %v318
    %v965 = vunpack.c.h.bf16 %v318
    %v966 = vunpack.c.l.bf16 %v319
    %v967 = vunpack.c.h.bf16 %v319
    %v968 = vunpack.c.l.bf16 %v320
    %v969 = vunpack.c.h.bf16 %v320
    %v970 = vunpack.c.l.bf16 %v321
    %v971 = vunpack.c.h.bf16 %v321
    %v972 = vunpack.c.l.bf16 %v322
    %v973 = vunpack.c.h.bf16 %v322
    %v974 = vunpack.c.l.bf16 %v323
    %v975 = vunpack.c.h.bf16 %v323
    %v976 = vunpack.c.l.bf16 %v324
    %v977 = vunpack.c.h.bf16 %v324
    %v978 = vunpack.c.l.bf16 %v325
    %v979 = vunpack.c.h.bf16 %v325
    %v980 = vunpack.c.l.bf16 %v326
    %v981 = vunpack.c.h.bf16 %v326
    %v982 = vunpack.c.l.bf16 %v327
    %v983 = vunpack.c.h.bf16 %v327
    %v984 = vunpack.c.l.bf16 %v328
    %v985 = vunpack.c.h.bf16 %v328
    %v986 = vunpack.c.l.bf16 %v329
    %v987 = vunpack.c.h.bf16 %v329
    %v988 = vunpack.c.l.bf16 %v330
    %v989 = vunpack.c.h.bf16 %v330
    %v990 = vunpack.c.l.bf16 %v331
    %v991 = vunpack.c.h.bf16 %v331
    %v992 = vunpack.c.l.bf16 %v332
    %v993 = vunpack.c.h.bf16 %v332
    %v994 = vunpack.c.l.bf16 %v333
    %v995 = vunpack.c.h.bf16 %v333
    %v996 = vunpack.c.l.bf16 %v334
    %v997 = vunpack.c.h.bf16 %v334
    %v998 = vunpack.c.l.bf16 %v335
    %v999 = vunpack.c.h.bf16 %v335
    %v1000 = vunpack.c.l.bf16 %v336
    %v1001 = vunpack.c.h.bf16 %v336
    %v1002 = vunpack.c.l.bf16 %v337
    %v1003 = vunpack.c.h.bf16 %v337
    %v1004 = vunpack.c.l.bf16 %v338
    %v1005 = vunpack.c.h.bf16 %v338
    %v1006 = vunpack.c.l.bf16 %v339
    %v1007 = vunpack.c.h.bf16 %v339
    %v1008 = vunpack.c.l.bf16 %v340
    %v1009 = vunpack.c.h.bf16 %v340
    %v1010 = vunpack.c.l.bf16 %v341
    %v1011 = vunpack.c.h.bf16 %v341
    %v1012 = vunpack.c.l.bf16 %v342
    %v1013 = vunpack.c.h.bf16 %v342
    %v1014 = vunpack.c.l.bf16 %v343
    %v1015 = vunpack.c.h.bf16 %v343
    %v1016 = vunpack.c.l.bf16 %v344
    %v1017 = vunpack.c.h.bf16 %v344
    %v1018 = vunpack.c.l.bf16 %v345
    %v1019 = vunpack.c.h.bf16 %v345
    %v1020 = vunpack.c.l.bf16 %v346
    %v1021 = vunpack.c.h.bf16 %v346
    %v1022 = vunpack.c.l.bf16 %v347
    %v1023 = vunpack.c.h.bf16 %v347
    %v1024 = vunpack.c.l.bf16 %v348
    %v1025 = vunpack.c.h.bf16 %v348
    %v1026 = vunpack.c.l.bf16 %v349
    %v1027 = vunpack.c.h.bf16 %v349
    %v1028 = vunpack.c.l.bf16 %v350
    %v1029 = vunpack.c.h.bf16 %v350
    %v1030 = vunpack.c.l.bf16 %v351
    %v1031 = vunpack.c.h.bf16 %v351
    %v1032 = vunpack.c.l.bf16 %v352
    %v1033 = vunpack.c.h.bf16 %v352
    %v1034 = vunpack.c.l.bf16 %v353
    %v1035 = vunpack.c.h.bf16 %v353
    %v1036 = vunpack.c.l.bf16 %v354
    %v1037 = vunpack.c.h.bf16 %v354
    %v1038 = vunpack.c.l.bf16 %v355
    %v1039 = vunpack.c.h.bf16 %v355
    %v1040 = vunpack.c.l.bf16 %v356
    %v1041 = vunpack.c.h.bf16 %v356
    %v1042 = vunpack.c.l.bf16 %v357
    %v1043 = vunpack.c.h.bf16 %v357
    %v1044 = vunpack.c.l.bf16 %v358
    %v1045 = vunpack.c.h.bf16 %v358
    %v1046 = vunpack.c.l.bf16 %v359
    %v1047 = vunpack.c.h.bf16 %v359
    %v1048 = vunpack.c.l.bf16 %v360
    %v1049 = vunpack.c.h.bf16 %v360
    %v1050 = vunpack.c.l.bf16 %v361
    %v1051 = vunpack.c.h.bf16 %v361
    %v1052 = vunpack.c.l.bf16 %v362
    %v1053 = vunpack.c.h.bf16 %v362
    %v1054 = vunpack.c.l.bf16 %v363
    %v1055 = vunpack.c.h.bf16 %v363
    %v1056 = vunpack.c.l.bf16 %v364
    %v1057 = vunpack.c.h.bf16 %v364
    %v1058 = vunpack.c.l.bf16 %v365
    %v1059 = vunpack.c.h.bf16 %v365
    %v1060 = vunpack.c.l.bf16 %v366
    %v1061 = vunpack.c.h.bf16 %v366
    %v1062 = vunpack.c.l.bf16 %v367
    %v1063 = vunpack.c.h.bf16 %v367
    %v1064 = vunpack.c.l.bf16 %v368
    %v1065 = vunpack.c.h.bf16 %v368
    %v1066 = vunpack.c.l.bf16 %v369
    %v1067 = vunpack.c.h.bf16 %v369
    %v1068 = vunpack.c.l.bf16 %v370
    %v1069 = vunpack.c.h.bf16 %v370
    %v1070 = vunpack.c.l.bf16 %v371
    %v1071 = vunpack.c.h.bf16 %v371
    %v1072 = vunpack.c.l.bf16 %v372
    %v1073 = vunpack.c.h.bf16 %v372
    %v1074 = vunpack.c.l.bf16 %v373
    %v1075 = vunpack.c.h.bf16 %v373
    %v1076 = vunpack.c.l.bf16 %v374
    %v1077 = vunpack.c.h.bf16 %v374
    %v1078 = vunpack.c.l.bf16 %v375
    %v1079 = vunpack.c.h.bf16 %v375
    %v1080 = vunpack.c.l.bf16 %v376
    %v1081 = vunpack.c.h.bf16 %v376
    %v1082 = vunpack.c.l.bf16 %v377
    %v1083 = vunpack.c.h.bf16 %v377
    %v1084 = vunpack.c.l.bf16 %v378
    %v1085 = vunpack.c.h.bf16 %v378
    %v1086 = vunpack.c.l.bf16 %v379
    %v1087 = vunpack.c.h.bf16 %v379
    %v1088 = vunpack.c.l.bf16 %v380
    %v1089 = vunpack.c.h.bf16 %v380
    %v1090 = vunpack.c.l.bf16 %v381
    %v1091 = vunpack.c.h.bf16 %v381
    %v1092 = vunpack.c.l.bf16 %v382
    %v1093 = vunpack.c.h.bf16 %v382
    %v1094 = vunpack.c.l.bf16 %v383
    %v1095 = vunpack.c.h.bf16 %v383
    %v1096 = vunpack.c.l.bf16 %v384
    %v1097 = vunpack.c.h.bf16 %v384
    %v1098 = vunpack.c.l.bf16 %v385
    %v1099 = vunpack.c.h.bf16 %v385
    %v1100 = vunpack.c.l.bf16 %v386
    %v1101 = vunpack.c.h.bf16 %v386
    %v1102 = vunpack.c.l.bf16 %v387
    %v1103 = vunpack.c.h.bf16 %v387
    %v1104 = vunpack.c.l.bf16 %v388
    %v1105 = vunpack.c.h.bf16 %v388
    %v1106 = vunpack.c.l.bf16 %v389
    %v1107 = vunpack.c.h.bf16 %v389
    %v1108 = vunpack.c.l.bf16 %v390
    %v1109 = vunpack.c.h.bf16 %v390
    %v1110 = vunpack.c.l.bf16 %v391
    %v1111 = vunpack.c.h.bf16 %v391
    %v1112 = vunpack.c.l.bf16 %v392
    %v1113 = vunpack.c.h.bf16 %v392
    %v1114 = vunpack.c.l.bf16 %v393
    %v1115 = vunpack.c.h.bf16 %v393
    %v1116 = vunpack.c.l.bf16 %v394
    %v1117 = vunpack.c.h.bf16 %v394
    %v1118 = vunpack.c.l.bf16 %v395
    %v1119 = vunpack.c.h.bf16 %v395
    %v1120 = vunpack.c.l.bf16 %v396
    %v1121 = vunpack.c.h.bf16 %v396
    %v1122 = vunpack.c.l.bf16 %v397
    %v1123 = vunpack.c.h.bf16 %v397
    %v1124 = vunpack.c.l.bf16 %v398
    %v1125 = vunpack.c.h.bf16 %v398
    %v1126 = vunpack.c.l.bf16 %v399
    %v1127 = vunpack.c.h.bf16 %v399
    %v1128 = vunpack.c.l.bf16 %v400
    %v1129 = vunpack.c.h.bf16 %v400
    %v1130 = vunpack.c.l.bf16 %v401
    %v1131 = vunpack.c.h.bf16 %v401
    %v1132 = vunpack.c.l.bf16 %v402
    %v1133 = vunpack.c.h.bf16 %v402
    %v1134 = vunpack.c.l.bf16 %v403
    %v1135 = vunpack.c.h.bf16 %v403
    %v1136 = vunpack.c.l.bf16 %v404
    %v1137 = vunpack.c.h.bf16 %v404
    %v1138 = vunpack.c.l.bf16 %v405
    %v1139 = vunpack.c.h.bf16 %v405
    %v1140 = vunpack.c.l.bf16 %v406
    %v1141 = vunpack.c.h.bf16 %v406
    %v1142 = vunpack.c.l.bf16 %v407
    %v1143 = vunpack.c.h.bf16 %v407
    %v1144 = vunpack.c.l.bf16 %v408
    %v1145 = vunpack.c.h.bf16 %v408
    %v1146 = vunpack.c.l.bf16 %v409
    %v1147 = vunpack.c.h.bf16 %v409
    %v1148 = vunpack.c.l.bf16 %v410
    %v1149 = vunpack.c.h.bf16 %v410
    %v1150 = vunpack.c.l.bf16 %v411
    %v1151 = vunpack.c.h.bf16 %v411
    %v1152 = vunpack.c.l.bf16 %v412
    %v1153 = vunpack.c.h.bf16 %v412
    %v1154 = vunpack.c.l.bf16 %v413
    %v1155 = vunpack.c.h.bf16 %v413
    %v1156 = vunpack.c.l.bf16 %v414
    %v1157 = vunpack.c.h.bf16 %v414
    %v1158 = vunpack.c.l.bf16 %v415
    %v1159 = vunpack.c.h.bf16 %v415
    %v1160 = vunpack.c.l.bf16 %v416
    %v1161 = vunpack.c.h.bf16 %v416
    %v1162 = vunpack.c.l.bf16 %v417
    %v1163 = vunpack.c.h.bf16 %v417
    %v1164 = vunpack.c.l.bf16 %v418
    %v1165 = vunpack.c.h.bf16 %v418
    %v1166 = vunpack.c.l.bf16 %v419
    %v1167 = vunpack.c.h.bf16 %v419
    %v1168 = vunpack.c.l.bf16 %v420
    %v1169 = vunpack.c.h.bf16 %v420
    %v1170 = vunpack.c.l.bf16 %v421
    %v1171 = vunpack.c.h.bf16 %v421
    %v1172 = vunpack.c.l.bf16 %v422
    %v1173 = vunpack.c.h.bf16 %v422
    %v1174 = vunpack.c.l.bf16 %v423
    %v1175 = vunpack.c.h.bf16 %v423
    %v1176 = vunpack.c.l.bf16 %v424
    %v1177 = vunpack.c.h.bf16 %v424
    %v1178 = vunpack.c.l.bf16 %v425
    %v1179 = vunpack.c.h.bf16 %v425
    %v1180 = vunpack.c.l.bf16 %v426
    %v1181 = vunpack.c.h.bf16 %v426
    %v1182 = vunpack.c.l.bf16 %v427
    %v1183 = vunpack.c.h.bf16 %v427
    %v1184 = vunpack.c.l.bf16 %v428
    %v1185 = vunpack.c.h.bf16 %v428
    %v1186 = vunpack.c.l.bf16 %v429
    %v1187 = vunpack.c.h.bf16 %v429
    %v1188 = vunpack.c.l.bf16 %v430
    %v1189 = vunpack.c.h.bf16 %v430
    %v1190 = vunpack.c.l.bf16 %v431
    %v1191 = vunpack.c.h.bf16 %v431
    %v1192 = vunpack.c.l.bf16 %v432
    %v1193 = vunpack.c.h.bf16 %v432
    %v1194 = vunpack.c.l.bf16 %v433
    %v1195 = vunpack.c.h.bf16 %v433
    %v1196 = vunpack.c.l.bf16 %v434
    %v1197 = vunpack.c.h.bf16 %v434
    %v1198 = vunpack.c.l.bf16 %v435
    %v1199 = vunpack.c.h.bf16 %v435
    %v1200 = vunpack.c.l.bf16 %v436
    %v1201 = vunpack.c.h.bf16 %v436
    %v1202 = vunpack.c.l.bf16 %v437
    %v1203 = vunpack.c.h.bf16 %v437
    %v1204 = vunpack.c.l.bf16 %v438
    %v1205 = vunpack.c.h.bf16 %v438
    %v1206 = vunpack.c.l.bf16 %v439
    %v1207 = vunpack.c.h.bf16 %v439
    %v1208 = vunpack.c.l.bf16 %v440
    %v1209 = vunpack.c.h.bf16 %v440
    %v1210 = vunpack.c.l.bf16 %v441
    %v1211 = vunpack.c.h.bf16 %v441
    %v1212 = vunpack.c.l.bf16 %v442
    %v1213 = vunpack.c.h.bf16 %v442
    %v1214 = vunpack.c.l.bf16 %v443
    %v1215 = vunpack.c.h.bf16 %v443
    %v1216 = vunpack.c.l.bf16 %v444
    %v1217 = vunpack.c.h.bf16 %v444
    %v1218 = vunpack.c.l.bf16 %v445
    %v1219 = vunpack.c.h.bf16 %v445
    %v1220 = vunpack.c.l.bf16 %v446
    %v1221 = vunpack.c.h.bf16 %v446
    %v1222 = vunpack.c.l.bf16 %v447
    %v1223 = vunpack.c.h.bf16 %v447
    %v1224 = vunpack.c.l.bf16 %v448
    %v1225 = vunpack.c.h.bf16 %v448
    %v1226 = vunpack.c.l.bf16 %v449
    %v1227 = vunpack.c.h.bf16 %v449
    %v1228 = vunpack.c.l.bf16 %v450
    %v1229 = vunpack.c.h.bf16 %v450
    %v1230 = vunpack.c.l.bf16 %v451
    %v1231 = vunpack.c.h.bf16 %v451
    %v1232 = vunpack.c.l.bf16 %v452
    %v1233 = vunpack.c.h.bf16 %v452
    %v1234 = vunpack.c.l.bf16 %v453
    %v1235 = vunpack.c.h.bf16 %v453
    %v1236 = vunpack.c.l.bf16 %v454
    %v1237 = vunpack.c.h.bf16 %v454
    %v1238 = vunpack.c.l.bf16 %v455
    %v1239 = vunpack.c.h.bf16 %v455
    %v1240 = vunpack.c.l.bf16 %v456
    %v1241 = vunpack.c.h.bf16 %v456
    %v1242 = vunpack.c.l.bf16 %v457
    %v1243 = vunpack.c.h.bf16 %v457
    %v1244 = vunpack.c.l.bf16 %v458
    %v1245 = vunpack.c.h.bf16 %v458
    %v1246 = vunpack.c.l.bf16 %v459
    %v1247 = vunpack.c.h.bf16 %v459
    %v1248 = vunpack.c.l.bf16 %v460
    %v1249 = vunpack.c.h.bf16 %v460
    %v1250 = vunpack.c.l.bf16 %v461
    %v1251 = vunpack.c.h.bf16 %v461
    %v1252 = vunpack.c.l.bf16 %v462
    %v1253 = vunpack.c.h.bf16 %v462
    %v1254 = vunpack.c.l.bf16 %v463
    %v1255 = vunpack.c.h.bf16 %v463
    %v1256 = vunpack.c.l.bf16 %v464
    %v1257 = vunpack.c.h.bf16 %v464
    %v1258 = vunpack.c.l.bf16 %v465
    %v1259 = vunpack.c.h.bf16 %v465
    %v1260 = vunpack.c.l.bf16 %v466
    %v1261 = vunpack.c.h.bf16 %v466
    %v1262 = vunpack.c.l.bf16 %v467
    %v1263 = vunpack.c.h.bf16 %v467
    %v1264 = vunpack.c.l.bf16 %v468
    %v1265 = vunpack.c.h.bf16 %v468
    %v1266 = vunpack.c.l.bf16 %v469
    %v1267 = vunpack.c.h.bf16 %v469
    %v1268 = vunpack.c.l.bf16 %v470
    %v1269 = vunpack.c.h.bf16 %v470
    %v1270 = vunpack.c.l.bf16 %v471
    %v1271 = vunpack.c.h.bf16 %v471
    %v1272 = vunpack.c.l.bf16 %v472
    %v1273 = vunpack.c.h.bf16 %v472
    %v1274 = vunpack.c.l.bf16 %v473
    %v1275 = vunpack.c.h.bf16 %v473
    %v1276 = vunpack.c.l.bf16 %v474
    %v1277 = vunpack.c.h.bf16 %v474
    %v1278 = vunpack.c.l.bf16 %v475
    %v1279 = vunpack.c.h.bf16 %v475
    %v1280 = vunpack.c.l.bf16 %v476
    %v1281 = vunpack.c.h.bf16 %v476
    %v1282 = vunpack.c.l.bf16 %v477
    %v1283 = vunpack.c.h.bf16 %v477
    %v1284 = vunpack.c.l.bf16 %v478
    %v1285 = vunpack.c.h.bf16 %v478
    %v1286 = vunpack.c.l.bf16 %v479
    %v1287 = vunpack.c.h.bf16 %v479
    %v1288 = vunpack.c.l.bf16 %v480
    %v1289 = vunpack.c.h.bf16 %v480
    %v1290 = vunpack.c.l.bf16 %v481
    %v1291 = vunpack.c.h.bf16 %v481
    %v1292 = vunpack.c.l.bf16 %v482
    %v1293 = vunpack.c.h.bf16 %v482
    %v1294 = vunpack.c.l.bf16 %v483
    %v1295 = vunpack.c.h.bf16 %v483
    %v1296 = vunpack.c.l.bf16 %v484
    %v1297 = vunpack.c.h.bf16 %v484
    %v1298 = vunpack.c.l.bf16 %v485
    %v1299 = vunpack.c.h.bf16 %v485
    %v1300 = vunpack.c.l.bf16 %v486
    %v1301 = vunpack.c.h.bf16 %v486
    %v1302 = vunpack.c.l.bf16 %v487
    %v1303 = vunpack.c.h.bf16 %v487
    %v1304 = vunpack.c.l.bf16 %v488
    %v1305 = vunpack.c.h.bf16 %v488
    %v1306 = vunpack.c.l.bf16 %v489
    %v1307 = vunpack.c.h.bf16 %v489
    %v1308 = vunpack.c.l.bf16 %v490
    %v1309 = vunpack.c.h.bf16 %v490
    %v1310 = vunpack.c.l.bf16 %v491
    %v1311 = vunpack.c.h.bf16 %v491
    %v1312 = vunpack.c.l.bf16 %v492
    %v1313 = vunpack.c.h.bf16 %v492
    %v1314 = vunpack.c.l.bf16 %v493
    %v1315 = vunpack.c.h.bf16 %v493
    %v1316 = vunpack.c.l.bf16 %v494
    %v1317 = vunpack.c.h.bf16 %v494
    %v1318 = vunpack.c.l.bf16 %v495
    %v1319 = vunpack.c.h.bf16 %v495
    %v1320 = vunpack.c.l.bf16 %v496
    %v1321 = vunpack.c.h.bf16 %v496
    %v1322 = vunpack.c.l.bf16 %v497
    %v1323 = vunpack.c.h.bf16 %v497
    %v1324 = vunpack.c.l.bf16 %v498
    %v1325 = vunpack.c.h.bf16 %v498
    %v1326 = vunpack.c.l.bf16 %v499
    %v1327 = vunpack.c.h.bf16 %v499
    %v1328 = vunpack.c.l.bf16 %v500
    %v1329 = vunpack.c.h.bf16 %v500
    %v1330 = vunpack.c.l.bf16 %v501
    %v1331 = vunpack.c.h.bf16 %v501
    %v1332 = vunpack.c.l.bf16 %v502
    %v1333 = vunpack.c.h.bf16 %v502
    %v1334 = vunpack.c.l.bf16 %v503
    %v1335 = vunpack.c.h.bf16 %v503
    %v1336 = vunpack.c.l.bf16 %v504
    %v1337 = vunpack.c.h.bf16 %v504
    %v1338 = vunpack.c.l.bf16 %v505
    %v1339 = vunpack.c.h.bf16 %v505
    %v1340 = vunpack.c.l.bf16 %v506
    %v1341 = vunpack.c.h.bf16 %v506
    %v1342 = vunpack.c.l.bf16 %v507
    %v1343 = vunpack.c.h.bf16 %v507
    %v1344 = vunpack.c.l.bf16 %v508
    %v1345 = vunpack.c.h.bf16 %v508
    %v1346 = vunpack.c.l.bf16 %v509
    %v1347 = vunpack.c.h.bf16 %v509
    %v1348 = vunpack.c.l.bf16 %v510
    %v1349 = vunpack.c.h.bf16 %v510
    %v1350 = vunpack.c.l.bf16 %v511
    %v1351 = vunpack.c.h.bf16 %v511
    %v1352 = vunpack.c.l.bf16 %v512
    %v1353 = vunpack.c.h.bf16 %v512
    %v1354 = vunpack.c.l.bf16 %v513
    %v1355 = vunpack.c.h.bf16 %v513
    %v1356 = vunpack.c.l.bf16 %v514
    %v1357 = vunpack.c.h.bf16 %v514
    %v1358 = vunpack.c.l.bf16 %v515
    %v1359 = vunpack.c.h.bf16 %v515
    %v1360 = vunpack.c.l.bf16 %v516
    %v1361 = vunpack.c.h.bf16 %v516
    %v1362 = vunpack.c.l.bf16 %v517
    %v1363 = vunpack.c.h.bf16 %v517
    %v1364 = vunpack.c.l.bf16 %v518
    %v1365 = vunpack.c.h.bf16 %v518
    %v1366 = vunpack.c.l.bf16 %v519
    %v1367 = vunpack.c.h.bf16 %v519
    %v1368 = vunpack.c.l.bf16 %v520
    %v1369 = vunpack.c.h.bf16 %v520
    %v1370 = vunpack.c.l.bf16 %v521
    %v1371 = vunpack.c.h.bf16 %v521
    %v1372 = vunpack.c.l.bf16 %v522
    %v1373 = vunpack.c.h.bf16 %v522
    %v1374 = vunpack.c.l.bf16 %v523
    %v1375 = vunpack.c.h.bf16 %v523
    %v1376 = vunpack.c.l.bf16 %v524
    %v1377 = vunpack.c.h.bf16 %v524
    %v1378 = vunpack.c.l.bf16 %v525
    %v1379 = vunpack.c.h.bf16 %v525
    %v1380 = vunpack.c.l.bf16 %v526
    %v1381 = vunpack.c.h.bf16 %v526
    %v1382 = vunpack.c.l.bf16 %v527
    %v1383 = vunpack.c.h.bf16 %v527
    %v1384 = vunpack.c.l.bf16 %v528
    %v1385 = vunpack.c.h.bf16 %v528
    %v1386 = vunpack.c.l.bf16 %v529
    %v1387 = vunpack.c.h.bf16 %v529
    %v1388 = vunpack.c.l.bf16 %v530
    %v1389 = vunpack.c.h.bf16 %v530
    %v1390 = vunpack.c.l.bf16 %v531
    %v1391 = vunpack.c.h.bf16 %v531
    %v1392 = vunpack.c.l.bf16 %v532
    %v1393 = vunpack.c.h.bf16 %v532
    %v1394 = vunpack.c.l.bf16 %v533
    %v1395 = vunpack.c.h.bf16 %v533
    %v1396 = vunpack.c.l.bf16 %v534
    %v1397 = vunpack.c.h.bf16 %v534
    %v1398 = vunpack.c.l.bf16 %v535
    %v1399 = vunpack.c.h.bf16 %v535
    %v1403 = vperm.slane %v73, 0
    %v1404 = vperm.slane %v73, 1
    %v1405 = vperm.slane %v73, 2
    %v1406 = vperm.slane %v73, 3
    %v1407 = vperm.slane %v73, 4
    %v1408 = vperm.slane %v73, 5
    %v1409 = vperm.slane %v73, 6
    %v1410 = vperm.slane %v73, 7
    %v1411 = vperm.slane %v88, 0
    %v1412 = vperm.slane %v88, 1
    %v1413 = vperm.slane %v88, 2
    %v1414 = vperm.slane %v88, 3
    %v1415 = vperm.slane %v88, 4
    %v1416 = vperm.slane %v88, 5
    %v1417 = vperm.slane %v88, 6
    %v1418 = vperm.slane %v88, 7
    %v1419 = vperm.slane %v103, 0
    %v1420 = vperm.slane %v103, 1
    %v1439 = vmul.f32 %v536, %v1403
    %v1440 = vmul.f32 %v537, %v1404
    %v1441 = vmul.f32 %v538, %v1405
    %v1442 = vmul.f32 %v539, %v1406
    %v1443 = vmul.f32 %v540, %v1407
    %v1444 = vmul.f32 %v541, %v1408
    %v1445 = vmul.f32 %v542, %v1409
    %v1446 = vmul.f32 %v543, %v1410
    %v1447 = vmul.f32 %v544, %v1411
    %v1448 = vmul.f32 %v545, %v1412
    %v1449 = vmul.f32 %v546, %v1413
    %v1450 = vmul.f32 %v547, %v1414
    %v1451 = vmul.f32 %v548, %v1415
    %v1452 = vmul.f32 %v549, %v1416
    %v1453 = vmul.f32 %v550, %v1417
    %v1454 = vmul.f32 %v551, %v1418
    %v1455 = vmul.f32 %v552, %v1419
    %v1456 = vmul.f32 %v553, %v1420
    %v1457 = vmul.f32 %v554, %v1403
    %v1458 = vmul.f32 %v555, %v1404
    %v1459 = vmul.f32 %v556, %v1405
    %v1460 = vmul.f32 %v557, %v1406
    %v1461 = vmul.f32 %v558, %v1407
    %v1462 = vmul.f32 %v559, %v1408
    %v1463 = vmul.f32 %v560, %v1409
    %v1464 = vmul.f32 %v561, %v1410
    %v1465 = vmul.f32 %v562, %v1411
    %v1466 = vmul.f32 %v563, %v1412
    %v1467 = vmul.f32 %v564, %v1413
    %v1468 = vmul.f32 %v565, %v1414
    %v1469 = vmul.f32 %v566, %v1415
    %v1470 = vmul.f32 %v567, %v1416
    %v1471 = vmul.f32 %v568, %v1417
    %v1472 = vmul.f32 %v569, %v1418
    %v1473 = vmul.f32 %v570, %v1419
    %v1474 = vmul.f32 %v571, %v1420
    %v1475 = vmul.f32 %v572, %v1403
    %v1476 = vmul.f32 %v573, %v1404
    %v1477 = vmul.f32 %v574, %v1405
    %v1478 = vmul.f32 %v575, %v1406
    %v1479 = vmul.f32 %v576, %v1407
    %v1480 = vmul.f32 %v577, %v1408
    %v1481 = vmul.f32 %v578, %v1409
    %v1482 = vmul.f32 %v579, %v1410
    %v1483 = vmul.f32 %v580, %v1411
    %v1484 = vmul.f32 %v581, %v1412
    %v1485 = vmul.f32 %v582, %v1413
    %v1486 = vmul.f32 %v583, %v1414
    %v1487 = vmul.f32 %v584, %v1415
    %v1488 = vmul.f32 %v585, %v1416
    %v1489 = vmul.f32 %v586, %v1417
    %v1490 = vmul.f32 %v587, %v1418
    %v1491 = vmul.f32 %v588, %v1419
    %v1492 = vmul.f32 %v589, %v1420
    %v1493 = vmul.f32 %v590, %v1403
    %v1494 = vmul.f32 %v591, %v1404
    %v1495 = vmul.f32 %v592, %v1405
    %v1496 = vmul.f32 %v593, %v1406
    %v1497 = vmul.f32 %v594, %v1407
    %v1498 = vmul.f32 %v595, %v1408
    %v1499 = vmul.f32 %v596, %v1409
    %v1500 = vmul.f32 %v597, %v1410
    %v1501 = vmul.f32 %v598, %v1411
    %v1502 = vmul.f32 %v599, %v1412
    %v1503 = vmul.f32 %v600, %v1413
    %v1504 = vmul.f32 %v601, %v1414
    %v1505 = vmul.f32 %v602, %v1415
    %v1506 = vmul.f32 %v603, %v1416
    %v1507 = vmul.f32 %v604, %v1417
    %v1508 = vmul.f32 %v605, %v1418
    %v1509 = vmul.f32 %v606, %v1419
    %v1510 = vmul.f32 %v607, %v1420
    %v1511 = vmul.f32 %v608, %v1403
    %v1512 = vmul.f32 %v609, %v1404
    %v1513 = vmul.f32 %v610, %v1405
    %v1514 = vmul.f32 %v611, %v1406
    %v1515 = vmul.f32 %v612, %v1407
    %v1516 = vmul.f32 %v613, %v1408
    %v1517 = vmul.f32 %v614, %v1409
    %v1518 = vmul.f32 %v615, %v1410
    %v1519 = vmul.f32 %v616, %v1411
    %v1520 = vmul.f32 %v617, %v1412
    %v1521 = vmul.f32 %v618, %v1413
    %v1522 = vmul.f32 %v619, %v1414
    %v1523 = vmul.f32 %v620, %v1415
    %v1524 = vmul.f32 %v621, %v1416
    %v1525 = vmul.f32 %v622, %v1417
    %v1526 = vmul.f32 %v623, %v1418
    %v1527 = vmul.f32 %v624, %v1419
    %v1528 = vmul.f32 %v625, %v1420
    %v1529 = vmul.f32 %v626, %v1403
    %v1530 = vmul.f32 %v627, %v1404
    %v1531 = vmul.f32 %v628, %v1405
    %v1532 = vmul.f32 %v629, %v1406
    %v1533 = vmul.f32 %v630, %v1407
    %v1534 = vmul.f32 %v631, %v1408
    %v1535 = vmul.f32 %v632, %v1409
    %v1536 = vmul.f32 %v633, %v1410
    %v1537 = vmul.f32 %v634, %v1411
    %v1538 = vmul.f32 %v635, %v1412
    %v1539 = vmul.f32 %v636, %v1413
    %v1540 = vmul.f32 %v637, %v1414
    %v1541 = vmul.f32 %v638, %v1415
    %v1542 = vmul.f32 %v639, %v1416
    %v1543 = vmul.f32 %v640, %v1417
    %v1544 = vmul.f32 %v641, %v1418
    %v1545 = vmul.f32 %v642, %v1419
    %v1546 = vmul.f32 %v643, %v1420
    %v1547 = vmul.f32 %v644, %v1403
    %v1548 = vmul.f32 %v645, %v1404
    %v1549 = vmul.f32 %v646, %v1405
    %v1550 = vmul.f32 %v647, %v1406
    %v1551 = vmul.f32 %v648, %v1407
    %v1552 = vmul.f32 %v649, %v1408
    %v1553 = vmul.f32 %v650, %v1409
    %v1554 = vmul.f32 %v651, %v1410
    %v1555 = vmul.f32 %v652, %v1411
    %v1556 = vmul.f32 %v653, %v1412
    %v1557 = vmul.f32 %v654, %v1413
    %v1558 = vmul.f32 %v655, %v1414
    %v1559 = vmul.f32 %v656, %v1415
    %v1560 = vmul.f32 %v657, %v1416
    %v1561 = vmul.f32 %v658, %v1417
    %v1562 = vmul.f32 %v659, %v1418
    %v1563 = vmul.f32 %v660, %v1419
    %v1564 = vmul.f32 %v661, %v1420
    %v1565 = vmul.f32 %v662, %v1403
    %v1566 = vmul.f32 %v663, %v1404
    %v1567 = vmul.f32 %v664, %v1405
    %v1568 = vmul.f32 %v665, %v1406
    %v1569 = vmul.f32 %v666, %v1407
    %v1570 = vmul.f32 %v667, %v1408
    %v1571 = vmul.f32 %v668, %v1409
    %v1572 = vmul.f32 %v669, %v1410
    %v1573 = vmul.f32 %v670, %v1411
    %v1574 = vmul.f32 %v671, %v1412
    %v1575 = vmul.f32 %v672, %v1413
    %v1576 = vmul.f32 %v673, %v1414
    %v1577 = vmul.f32 %v674, %v1415
    %v1578 = vmul.f32 %v675, %v1416
    %v1579 = vmul.f32 %v676, %v1417
    %v1580 = vmul.f32 %v677, %v1418
    %v1581 = vmul.f32 %v678, %v1419
    %v1582 = vmul.f32 %v679, %v1420
    %v1583 = vmul.f32 %v680, %v1403
    %v1584 = vmul.f32 %v681, %v1404
    %v1585 = vmul.f32 %v682, %v1405
    %v1586 = vmul.f32 %v683, %v1406
    %v1587 = vmul.f32 %v684, %v1407
    %v1588 = vmul.f32 %v685, %v1408
    %v1589 = vmul.f32 %v686, %v1409
    %v1590 = vmul.f32 %v687, %v1410
    %v1591 = vmul.f32 %v688, %v1411
    %v1592 = vmul.f32 %v689, %v1412
    %v1593 = vmul.f32 %v690, %v1413
    %v1594 = vmul.f32 %v691, %v1414
    %v1595 = vmul.f32 %v692, %v1415
    %v1596 = vmul.f32 %v693, %v1416
    %v1597 = vmul.f32 %v694, %v1417
    %v1598 = vmul.f32 %v695, %v1418
    %v1599 = vmul.f32 %v696, %v1419
    %v1600 = vmul.f32 %v697, %v1420
    %v1601 = vmul.f32 %v698, %v1403
    %v1602 = vmul.f32 %v699, %v1404
    %v1603 = vmul.f32 %v700, %v1405
    %v1604 = vmul.f32 %v701, %v1406
    %v1605 = vmul.f32 %v702, %v1407
    %v1606 = vmul.f32 %v703, %v1408
    %v1607 = vmul.f32 %v704, %v1409
    %v1608 = vmul.f32 %v705, %v1410
    %v1609 = vmul.f32 %v706, %v1411
    %v1610 = vmul.f32 %v707, %v1412
    %v1611 = vmul.f32 %v708, %v1413
    %v1612 = vmul.f32 %v709, %v1414
    %v1613 = vmul.f32 %v710, %v1415
    %v1614 = vmul.f32 %v711, %v1416
    %v1615 = vmul.f32 %v712, %v1417
    %v1616 = vmul.f32 %v713, %v1418
    %v1617 = vmul.f32 %v714, %v1419
    %v1618 = vmul.f32 %v715, %v1420
    %v1619 = vmul.f32 %v716, %v1403
    %v1620 = vmul.f32 %v717, %v1404
    %v1621 = vmul.f32 %v718, %v1405
    %v1622 = vmul.f32 %v719, %v1406
    %v1623 = vmul.f32 %v720, %v1407
    %v1624 = vmul.f32 %v721, %v1408
    %v1625 = vmul.f32 %v722, %v1409
    %v1626 = vmul.f32 %v723, %v1410
    %v1627 = vmul.f32 %v724, %v1411
    %v1628 = vmul.f32 %v725, %v1412
    %v1629 = vmul.f32 %v726, %v1413
    %v1630 = vmul.f32 %v727, %v1414
    %v1631 = vmul.f32 %v728, %v1415
    %v1632 = vmul.f32 %v729, %v1416
    %v1633 = vmul.f32 %v730, %v1417
    %v1634 = vmul.f32 %v731, %v1418
    %v1635 = vmul.f32 %v732, %v1419
    %v1636 = vmul.f32 %v733, %v1420
    %v1637 = vmul.f32 %v734, %v1403
    %v1638 = vmul.f32 %v735, %v1404
    %v1639 = vmul.f32 %v736, %v1405
    %v1640 = vmul.f32 %v737, %v1406
    %v1641 = vmul.f32 %v738, %v1407
    %v1642 = vmul.f32 %v739, %v1408
    %v1643 = vmul.f32 %v740, %v1409
    %v1644 = vmul.f32 %v741, %v1410
    %v1645 = vmul.f32 %v742, %v1411
    %v1646 = vmul.f32 %v743, %v1412
    %v1647 = vmul.f32 %v744, %v1413
    %v1648 = vmul.f32 %v745, %v1414
    %v1649 = vmul.f32 %v746, %v1415
    %v1650 = vmul.f32 %v747, %v1416
    %v1651 = vmul.f32 %v748, %v1417
    %v1652 = vmul.f32 %v749, %v1418
    %v1653 = vmul.f32 %v750, %v1419
    %v1654 = vmul.f32 %v751, %v1420
    %v1655 = vmul.f32 %v752, %v1403
    %v1656 = vmul.f32 %v753, %v1404
    %v1657 = vmul.f32 %v754, %v1405
    %v1658 = vmul.f32 %v755, %v1406
    %v1659 = vmul.f32 %v756, %v1407
    %v1660 = vmul.f32 %v757, %v1408
    %v1661 = vmul.f32 %v758, %v1409
    %v1662 = vmul.f32 %v759, %v1410
    %v1663 = vmul.f32 %v760, %v1411
    %v1664 = vmul.f32 %v761, %v1412
    %v1665 = vmul.f32 %v762, %v1413
    %v1666 = vmul.f32 %v763, %v1414
    %v1667 = vmul.f32 %v764, %v1415
    %v1668 = vmul.f32 %v765, %v1416
    %v1669 = vmul.f32 %v766, %v1417
    %v1670 = vmul.f32 %v767, %v1418
    %v1671 = vmul.f32 %v768, %v1419
    %v1672 = vmul.f32 %v769, %v1420
    %v1673 = vmul.f32 %v770, %v1403
    %v1674 = vmul.f32 %v771, %v1404
    %v1675 = vmul.f32 %v772, %v1405
    %v1676 = vmul.f32 %v773, %v1406
    %v1677 = vmul.f32 %v774, %v1407
    %v1678 = vmul.f32 %v775, %v1408
    %v1679 = vmul.f32 %v776, %v1409
    %v1680 = vmul.f32 %v777, %v1410
    %v1681 = vmul.f32 %v778, %v1411
    %v1682 = vmul.f32 %v779, %v1412
    %v1683 = vmul.f32 %v780, %v1413
    %v1684 = vmul.f32 %v781, %v1414
    %v1685 = vmul.f32 %v782, %v1415
    %v1686 = vmul.f32 %v783, %v1416
    %v1687 = vmul.f32 %v784, %v1417
    %v1688 = vmul.f32 %v785, %v1418
    %v1689 = vmul.f32 %v786, %v1419
    %v1690 = vmul.f32 %v787, %v1420
    %v1691 = vmul.f32 %v788, %v1403
    %v1692 = vmul.f32 %v789, %v1404
    %v1693 = vmul.f32 %v790, %v1405
    %v1694 = vmul.f32 %v791, %v1406
    %v1695 = vmul.f32 %v792, %v1407
    %v1696 = vmul.f32 %v793, %v1408
    %v1697 = vmul.f32 %v794, %v1409
    %v1698 = vmul.f32 %v795, %v1410
    %v1699 = vmul.f32 %v796, %v1411
    %v1700 = vmul.f32 %v797, %v1412
    %v1701 = vmul.f32 %v798, %v1413
    %v1702 = vmul.f32 %v799, %v1414
    %v1703 = vmul.f32 %v800, %v1415
    %v1704 = vmul.f32 %v801, %v1416
    %v1705 = vmul.f32 %v802, %v1417
    %v1706 = vmul.f32 %v803, %v1418
    %v1707 = vmul.f32 %v804, %v1419
    %v1708 = vmul.f32 %v805, %v1420
    %v1709 = vmul.f32 %v806, %v1403
    %v1710 = vmul.f32 %v807, %v1404
    %v1711 = vmul.f32 %v808, %v1405
    %v1712 = vmul.f32 %v809, %v1406
    %v1713 = vmul.f32 %v810, %v1407
    %v1714 = vmul.f32 %v811, %v1408
    %v1715 = vmul.f32 %v812, %v1409
    %v1716 = vmul.f32 %v813, %v1410
    %v1717 = vmul.f32 %v814, %v1411
    %v1718 = vmul.f32 %v815, %v1412
    %v1719 = vmul.f32 %v816, %v1413
    %v1720 = vmul.f32 %v817, %v1414
    %v1721 = vmul.f32 %v818, %v1415
    %v1722 = vmul.f32 %v819, %v1416
    %v1723 = vmul.f32 %v820, %v1417
    %v1724 = vmul.f32 %v821, %v1418
    %v1725 = vmul.f32 %v822, %v1419
    %v1726 = vmul.f32 %v823, %v1420
    %v1727 = vmul.f32 %v824, %v1403
    %v1728 = vmul.f32 %v825, %v1404
    %v1729 = vmul.f32 %v826, %v1405
    %v1730 = vmul.f32 %v827, %v1406
    %v1731 = vmul.f32 %v828, %v1407
    %v1732 = vmul.f32 %v829, %v1408
    %v1733 = vmul.f32 %v830, %v1409
    %v1734 = vmul.f32 %v831, %v1410
    %v1735 = vmul.f32 %v832, %v1411
    %v1736 = vmul.f32 %v833, %v1412
    %v1737 = vmul.f32 %v834, %v1413
    %v1738 = vmul.f32 %v835, %v1414
    %v1739 = vmul.f32 %v836, %v1415
    %v1740 = vmul.f32 %v837, %v1416
    %v1741 = vmul.f32 %v838, %v1417
    %v1742 = vmul.f32 %v839, %v1418
    %v1743 = vmul.f32 %v840, %v1419
    %v1744 = vmul.f32 %v841, %v1420
    %v1745 = vmul.f32 %v842, %v1403
    %v1746 = vmul.f32 %v843, %v1404
    %v1747 = vmul.f32 %v844, %v1405
    %v1748 = vmul.f32 %v845, %v1406
    %v1749 = vmul.f32 %v846, %v1407
    %v1750 = vmul.f32 %v847, %v1408
    %v1751 = vmul.f32 %v848, %v1409
    %v1752 = vmul.f32 %v849, %v1410
    %v1753 = vmul.f32 %v850, %v1411
    %v1754 = vmul.f32 %v851, %v1412
    %v1755 = vmul.f32 %v852, %v1413
    %v1756 = vmul.f32 %v853, %v1414
    %v1757 = vmul.f32 %v854, %v1415
    %v1758 = vmul.f32 %v855, %v1416
    %v1759 = vmul.f32 %v856, %v1417
    %v1760 = vmul.f32 %v857, %v1418
    %v1761 = vmul.f32 %v858, %v1419
    %v1762 = vmul.f32 %v859, %v1420
    %v1763 = vmul.f32 %v860, %v1403
    %v1764 = vmul.f32 %v861, %v1404
    %v1765 = vmul.f32 %v862, %v1405
    %v1766 = vmul.f32 %v863, %v1406
    %v1767 = vmul.f32 %v864, %v1407
    %v1768 = vmul.f32 %v865, %v1408
    %v1769 = vmul.f32 %v866, %v1409
    %v1770 = vmul.f32 %v867, %v1410
    %v1771 = vmul.f32 %v868, %v1411
    %v1772 = vmul.f32 %v869, %v1412
    %v1773 = vmul.f32 %v870, %v1413
    %v1774 = vmul.f32 %v871, %v1414
    %v1775 = vmul.f32 %v872, %v1415
    %v1776 = vmul.f32 %v873, %v1416
    %v1777 = vmul.f32 %v874, %v1417
    %v1778 = vmul.f32 %v875, %v1418
    %v1779 = vmul.f32 %v876, %v1419
    %v1780 = vmul.f32 %v877, %v1420
    %v1781 = vmul.f32 %v878, %v1403
    %v1782 = vmul.f32 %v879, %v1404
    %v1783 = vmul.f32 %v880, %v1405
    %v1784 = vmul.f32 %v881, %v1406
    %v1785 = vmul.f32 %v882, %v1407
    %v1786 = vmul.f32 %v883, %v1408
    %v1787 = vmul.f32 %v884, %v1409
    %v1788 = vmul.f32 %v885, %v1410
    %v1789 = vmul.f32 %v886, %v1411
    %v1790 = vmul.f32 %v887, %v1412
    %v1791 = vmul.f32 %v888, %v1413
    %v1792 = vmul.f32 %v889, %v1414
    %v1793 = vmul.f32 %v890, %v1415
    %v1794 = vmul.f32 %v891, %v1416
    %v1795 = vmul.f32 %v892, %v1417
    %v1796 = vmul.f32 %v893, %v1418
    %v1797 = vmul.f32 %v894, %v1419
    %v1798 = vmul.f32 %v895, %v1420
    %v1799 = vmul.f32 %v896, %v1403
    %v1800 = vmul.f32 %v897, %v1404
    %v1801 = vmul.f32 %v898, %v1405
    %v1802 = vmul.f32 %v899, %v1406
    %v1803 = vmul.f32 %v900, %v1407
    %v1804 = vmul.f32 %v901, %v1408
    %v1805 = vmul.f32 %v902, %v1409
    %v1806 = vmul.f32 %v903, %v1410
    %v1807 = vmul.f32 %v904, %v1411
    %v1808 = vmul.f32 %v905, %v1412
    %v1809 = vmul.f32 %v906, %v1413
    %v1810 = vmul.f32 %v907, %v1414
    %v1811 = vmul.f32 %v908, %v1415
    %v1812 = vmul.f32 %v909, %v1416
    %v1813 = vmul.f32 %v910, %v1417
    %v1814 = vmul.f32 %v911, %v1418
    %v1815 = vmul.f32 %v912, %v1419
    %v1816 = vmul.f32 %v913, %v1420
    %v1817 = vmul.f32 %v914, %v1403
    %v1818 = vmul.f32 %v915, %v1404
    %v1819 = vmul.f32 %v916, %v1405
    %v1820 = vmul.f32 %v917, %v1406
    %v1821 = vmul.f32 %v918, %v1407
    %v1822 = vmul.f32 %v919, %v1408
    %v1823 = vmul.f32 %v920, %v1409
    %v1824 = vmul.f32 %v921, %v1410
    %v1825 = vmul.f32 %v922, %v1411
    %v1826 = vmul.f32 %v923, %v1412
    %v1827 = vmul.f32 %v924, %v1413
    %v1828 = vmul.f32 %v925, %v1414
    %v1829 = vmul.f32 %v926, %v1415
    %v1830 = vmul.f32 %v927, %v1416
    %v1831 = vmul.f32 %v928, %v1417
    %v1832 = vmul.f32 %v929, %v1418
    %v1833 = vmul.f32 %v930, %v1419
    %v1834 = vmul.f32 %v931, %v1420
    %v1835 = vmul.f32 %v932, %v1403
    %v1836 = vmul.f32 %v933, %v1404
    %v1837 = vmul.f32 %v934, %v1405
    %v1838 = vmul.f32 %v935, %v1406
    %v1839 = vmul.f32 %v936, %v1407
    %v1840 = vmul.f32 %v937, %v1408
    %v1841 = vmul.f32 %v938, %v1409
    %v1842 = vmul.f32 %v939, %v1410
    %v1843 = vmul.f32 %v940, %v1411
    %v1844 = vmul.f32 %v941, %v1412
    %v1845 = vmul.f32 %v942, %v1413
    %v1846 = vmul.f32 %v943, %v1414
    %v1847 = vmul.f32 %v944, %v1415
    %v1848 = vmul.f32 %v945, %v1416
    %v1849 = vmul.f32 %v946, %v1417
    %v1850 = vmul.f32 %v947, %v1418
    %v1851 = vmul.f32 %v948, %v1419
    %v1852 = vmul.f32 %v949, %v1420
    %v1853 = vmul.f32 %v950, %v1403
    %v1854 = vmul.f32 %v951, %v1404
    %v1855 = vmul.f32 %v952, %v1405
    %v1856 = vmul.f32 %v953, %v1406
    %v1857 = vmul.f32 %v954, %v1407
    %v1858 = vmul.f32 %v955, %v1408
    %v1859 = vmul.f32 %v956, %v1409
    %v1860 = vmul.f32 %v957, %v1410
    %v1861 = vmul.f32 %v958, %v1411
    %v1862 = vmul.f32 %v959, %v1412
    %v1863 = vmul.f32 %v960, %v1413
    %v1864 = vmul.f32 %v961, %v1414
    %v1865 = vmul.f32 %v962, %v1415
    %v1866 = vmul.f32 %v963, %v1416
    %v1867 = vmul.f32 %v964, %v1417
    %v1868 = vmul.f32 %v965, %v1418
    %v1869 = vmul.f32 %v966, %v1419
    %v1870 = vmul.f32 %v967, %v1420
    %v1871 = vmul.f32 %v968, %v1403
    %v1872 = vmul.f32 %v969, %v1404
    %v1873 = vmul.f32 %v970, %v1405
    %v1874 = vmul.f32 %v971, %v1406
    %v1875 = vmul.f32 %v972, %v1407
    %v1876 = vmul.f32 %v973, %v1408
    %v1877 = vmul.f32 %v974, %v1409
    %v1878 = vmul.f32 %v975, %v1410
    %v1879 = vmul.f32 %v976, %v1411
    %v1880 = vmul.f32 %v977, %v1412
    %v1881 = vmul.f32 %v978, %v1413
    %v1882 = vmul.f32 %v979, %v1414
    %v1883 = vmul.f32 %v980, %v1415
    %v1884 = vmul.f32 %v981, %v1416
    %v1885 = vmul.f32 %v982, %v1417
    %v1886 = vmul.f32 %v983, %v1418
    %v1887 = vmul.f32 %v984, %v1419
    %v1888 = vmul.f32 %v985, %v1420
    %v1889 = vmul.f32 %v986, %v1403
    %v1890 = vmul.f32 %v987, %v1404
    %v1891 = vmul.f32 %v988, %v1405
    %v1892 = vmul.f32 %v989, %v1406
    %v1893 = vmul.f32 %v990, %v1407
    %v1894 = vmul.f32 %v991, %v1408
    %v1895 = vmul.f32 %v992, %v1409
    %v1896 = vmul.f32 %v993, %v1410
    %v1897 = vmul.f32 %v994, %v1411
    %v1898 = vmul.f32 %v995, %v1412
    %v1899 = vmul.f32 %v996, %v1413
    %v1900 = vmul.f32 %v997, %v1414
    %v1901 = vmul.f32 %v998, %v1415
    %v1902 = vmul.f32 %v999, %v1416
    %v1903 = vmul.f32 %v1000, %v1417
    %v1904 = vmul.f32 %v1001, %v1418
    %v1905 = vmul.f32 %v1002, %v1419
    %v1906 = vmul.f32 %v1003, %v1420
    %v1907 = vmul.f32 %v1004, %v1403
    %v1908 = vmul.f32 %v1005, %v1404
    %v1909 = vmul.f32 %v1006, %v1405
    %v1910 = vmul.f32 %v1007, %v1406
    %v1911 = vmul.f32 %v1008, %v1407
    %v1912 = vmul.f32 %v1009, %v1408
    %v1913 = vmul.f32 %v1010, %v1409
    %v1914 = vmul.f32 %v1011, %v1410
    %v1915 = vmul.f32 %v1012, %v1411
    %v1916 = vmul.f32 %v1013, %v1412
    %v1917 = vmul.f32 %v1014, %v1413
    %v1918 = vmul.f32 %v1015, %v1414
    %v1919 = vmul.f32 %v1016, %v1415
    %v1920 = vmul.f32 %v1017, %v1416
    %v1921 = vmul.f32 %v1018, %v1417
    %v1922 = vmul.f32 %v1019, %v1418
    %v1923 = vmul.f32 %v1020, %v1419
    %v1924 = vmul.f32 %v1021, %v1420
    %v1925 = vmul.f32 %v1022, %v1403
    %v1926 = vmul.f32 %v1023, %v1404
    %v1927 = vmul.f32 %v1024, %v1405
    %v1928 = vmul.f32 %v1025, %v1406
    %v1929 = vmul.f32 %v1026, %v1407
    %v1930 = vmul.f32 %v1027, %v1408
    %v1931 = vmul.f32 %v1028, %v1409
    %v1932 = vmul.f32 %v1029, %v1410
    %v1933 = vmul.f32 %v1030, %v1411
    %v1934 = vmul.f32 %v1031, %v1412
    %v1935 = vmul.f32 %v1032, %v1413
    %v1936 = vmul.f32 %v1033, %v1414
    %v1937 = vmul.f32 %v1034, %v1415
    %v1938 = vmul.f32 %v1035, %v1416
    %v1939 = vmul.f32 %v1036, %v1417
    %v1940 = vmul.f32 %v1037, %v1418
    %v1941 = vmul.f32 %v1038, %v1419
    %v1942 = vmul.f32 %v1039, %v1420
    %v1943 = vmul.f32 %v1040, %v1403
    %v1944 = vmul.f32 %v1041, %v1404
    %v1945 = vmul.f32 %v1042, %v1405
    %v1946 = vmul.f32 %v1043, %v1406
    %v1947 = vmul.f32 %v1044, %v1407
    %v1948 = vmul.f32 %v1045, %v1408
    %v1949 = vmul.f32 %v1046, %v1409
    %v1950 = vmul.f32 %v1047, %v1410
    %v1951 = vmul.f32 %v1048, %v1411
    %v1952 = vmul.f32 %v1049, %v1412
    %v1953 = vmul.f32 %v1050, %v1413
    %v1954 = vmul.f32 %v1051, %v1414
    %v1955 = vmul.f32 %v1052, %v1415
    %v1956 = vmul.f32 %v1053, %v1416
    %v1957 = vmul.f32 %v1054, %v1417
    %v1958 = vmul.f32 %v1055, %v1418
    %v1959 = vmul.f32 %v1056, %v1419
    %v1960 = vmul.f32 %v1057, %v1420
    %v1961 = vmul.f32 %v1058, %v1403
    %v1962 = vmul.f32 %v1059, %v1404
    %v1963 = vmul.f32 %v1060, %v1405
    %v1964 = vmul.f32 %v1061, %v1406
    %v1965 = vmul.f32 %v1062, %v1407
    %v1966 = vmul.f32 %v1063, %v1408
    %v1967 = vmul.f32 %v1064, %v1409
    %v1968 = vmul.f32 %v1065, %v1410
    %v1969 = vmul.f32 %v1066, %v1411
    %v1970 = vmul.f32 %v1067, %v1412
    %v1971 = vmul.f32 %v1068, %v1413
    %v1972 = vmul.f32 %v1069, %v1414
    %v1973 = vmul.f32 %v1070, %v1415
    %v1974 = vmul.f32 %v1071, %v1416
    %v1975 = vmul.f32 %v1072, %v1417
    %v1976 = vmul.f32 %v1073, %v1418
    %v1977 = vmul.f32 %v1074, %v1419
    %v1978 = vmul.f32 %v1075, %v1420
    %v1979 = vmul.f32 %v1076, %v1403
    %v1980 = vmul.f32 %v1077, %v1404
    %v1981 = vmul.f32 %v1078, %v1405
    %v1982 = vmul.f32 %v1079, %v1406
    %v1983 = vmul.f32 %v1080, %v1407
    %v1984 = vmul.f32 %v1081, %v1408
    %v1985 = vmul.f32 %v1082, %v1409
    %v1986 = vmul.f32 %v1083, %v1410
    %v1987 = vmul.f32 %v1084, %v1411
    %v1988 = vmul.f32 %v1085, %v1412
    %v1989 = vmul.f32 %v1086, %v1413
    %v1990 = vmul.f32 %v1087, %v1414
    %v1991 = vmul.f32 %v1088, %v1415
    %v1992 = vmul.f32 %v1089, %v1416
    %v1993 = vmul.f32 %v1090, %v1417
    %v1994 = vmul.f32 %v1091, %v1418
    %v1995 = vmul.f32 %v1092, %v1419
    %v1996 = vmul.f32 %v1093, %v1420
    %v1997 = vmul.f32 %v1094, %v1403
    %v1998 = vmul.f32 %v1095, %v1404
    %v1999 = vmul.f32 %v1096, %v1405
    %v2000 = vmul.f32 %v1097, %v1406
    %v2001 = vmul.f32 %v1098, %v1407
    %v2002 = vmul.f32 %v1099, %v1408
    %v2003 = vmul.f32 %v1100, %v1409
    %v2004 = vmul.f32 %v1101, %v1410
    %v2005 = vmul.f32 %v1102, %v1411
    %v2006 = vmul.f32 %v1103, %v1412
    %v2007 = vmul.f32 %v1104, %v1413
    %v2008 = vmul.f32 %v1105, %v1414
    %v2009 = vmul.f32 %v1106, %v1415
    %v2010 = vmul.f32 %v1107, %v1416
    %v2011 = vmul.f32 %v1108, %v1417
    %v2012 = vmul.f32 %v1109, %v1418
    %v2013 = vmul.f32 %v1110, %v1419
    %v2014 = vmul.f32 %v1111, %v1420
    %v2015 = vmul.f32 %v1112, %v1403
    %v2016 = vmul.f32 %v1113, %v1404
    %v2017 = vmul.f32 %v1114, %v1405
    %v2018 = vmul.f32 %v1115, %v1406
    %v2019 = vmul.f32 %v1116, %v1407
    %v2020 = vmul.f32 %v1117, %v1408
    %v2021 = vmul.f32 %v1118, %v1409
    %v2022 = vmul.f32 %v1119, %v1410
    %v2023 = vmul.f32 %v1120, %v1411
    %v2024 = vmul.f32 %v1121, %v1412
    %v2025 = vmul.f32 %v1122, %v1413
    %v2026 = vmul.f32 %v1123, %v1414
    %v2027 = vmul.f32 %v1124, %v1415
    %v2028 = vmul.f32 %v1125, %v1416
    %v2029 = vmul.f32 %v1126, %v1417
    %v2030 = vmul.f32 %v1127, %v1418
    %v2031 = vmul.f32 %v1128, %v1419
    %v2032 = vmul.f32 %v1129, %v1420
    %v2033 = vmul.f32 %v1130, %v1403
    %v2034 = vmul.f32 %v1131, %v1404
    %v2035 = vmul.f32 %v1132, %v1405
    %v2036 = vmul.f32 %v1133, %v1406
    %v2037 = vmul.f32 %v1134, %v1407
    %v2038 = vmul.f32 %v1135, %v1408
    %v2039 = vmul.f32 %v1136, %v1409
    %v2040 = vmul.f32 %v1137, %v1410
    %v2041 = vmul.f32 %v1138, %v1411
    %v2042 = vmul.f32 %v1139, %v1412
    %v2043 = vmul.f32 %v1140, %v1413
    %v2044 = vmul.f32 %v1141, %v1414
    %v2045 = vmul.f32 %v1142, %v1415
    %v2046 = vmul.f32 %v1143, %v1416
    %v2047 = vmul.f32 %v1144, %v1417
    %v2048 = vmul.f32 %v1145, %v1418
    %v2049 = vmul.f32 %v1146, %v1419
    %v2050 = vmul.f32 %v1147, %v1420
    %v2051 = vmul.f32 %v1148, %v1403
    %v2052 = vmul.f32 %v1149, %v1404
    %v2053 = vmul.f32 %v1150, %v1405
    %v2054 = vmul.f32 %v1151, %v1406
    %v2055 = vmul.f32 %v1152, %v1407
    %v2056 = vmul.f32 %v1153, %v1408
    %v2057 = vmul.f32 %v1154, %v1409
    %v2058 = vmul.f32 %v1155, %v1410
    %v2059 = vmul.f32 %v1156, %v1411
    %v2060 = vmul.f32 %v1157, %v1412
    %v2061 = vmul.f32 %v1158, %v1413
    %v2062 = vmul.f32 %v1159, %v1414
    %v2063 = vmul.f32 %v1160, %v1415
    %v2064 = vmul.f32 %v1161, %v1416
    %v2065 = vmul.f32 %v1162, %v1417
    %v2066 = vmul.f32 %v1163, %v1418
    %v2067 = vmul.f32 %v1164, %v1419
    %v2068 = vmul.f32 %v1165, %v1420
    %v2069 = vmul.f32 %v1166, %v1403
    %v2070 = vmul.f32 %v1167, %v1404
    %v2071 = vmul.f32 %v1168, %v1405
    %v2072 = vmul.f32 %v1169, %v1406
    %v2073 = vmul.f32 %v1170, %v1407
    %v2074 = vmul.f32 %v1171, %v1408
    %v2075 = vmul.f32 %v1172, %v1409
    %v2076 = vmul.f32 %v1173, %v1410
    %v2077 = vmul.f32 %v1174, %v1411
    %v2078 = vmul.f32 %v1175, %v1412
    %v2079 = vmul.f32 %v1176, %v1413
    %v2080 = vmul.f32 %v1177, %v1414
    %v2081 = vmul.f32 %v1178, %v1415
    %v2082 = vmul.f32 %v1179, %v1416
    %v2083 = vmul.f32 %v1180, %v1417
    %v2084 = vmul.f32 %v1181, %v1418
    %v2085 = vmul.f32 %v1182, %v1419
    %v2086 = vmul.f32 %v1183, %v1420
    %v2087 = vmul.f32 %v1184, %v1403
    %v2088 = vmul.f32 %v1185, %v1404
    %v2089 = vmul.f32 %v1186, %v1405
    %v2090 = vmul.f32 %v1187, %v1406
    %v2091 = vmul.f32 %v1188, %v1407
    %v2092 = vmul.f32 %v1189, %v1408
    %v2093 = vmul.f32 %v1190, %v1409
    %v2094 = vmul.f32 %v1191, %v1410
    %v2095 = vmul.f32 %v1192, %v1411
    %v2096 = vmul.f32 %v1193, %v1412
    %v2097 = vmul.f32 %v1194, %v1413
    %v2098 = vmul.f32 %v1195, %v1414
    %v2099 = vmul.f32 %v1196, %v1415
    %v2100 = vmul.f32 %v1197, %v1416
    %v2101 = vmul.f32 %v1198, %v1417
    %v2102 = vmul.f32 %v1199, %v1418
    %v2103 = vmul.f32 %v1200, %v1419
    %v2104 = vmul.f32 %v1201, %v1420
    %v2105 = vmul.f32 %v1202, %v1403
    %v2106 = vmul.f32 %v1203, %v1404
    %v2107 = vmul.f32 %v1204, %v1405
    %v2108 = vmul.f32 %v1205, %v1406
    %v2109 = vmul.f32 %v1206, %v1407
    %v2110 = vmul.f32 %v1207, %v1408
    %v2111 = vmul.f32 %v1208, %v1409
    %v2112 = vmul.f32 %v1209, %v1410
    %v2113 = vmul.f32 %v1210, %v1411
    %v2114 = vmul.f32 %v1211, %v1412
    %v2115 = vmul.f32 %v1212, %v1413
    %v2116 = vmul.f32 %v1213, %v1414
    %v2117 = vmul.f32 %v1214, %v1415
    %v2118 = vmul.f32 %v1215, %v1416
    %v2119 = vmul.f32 %v1216, %v1417
    %v2120 = vmul.f32 %v1217, %v1418
    %v2121 = vmul.f32 %v1218, %v1419
    %v2122 = vmul.f32 %v1219, %v1420
    %v2123 = vmul.f32 %v1220, %v1403
    %v2124 = vmul.f32 %v1221, %v1404
    %v2125 = vmul.f32 %v1222, %v1405
    %v2126 = vmul.f32 %v1223, %v1406
    %v2127 = vmul.f32 %v1224, %v1407
    %v2128 = vmul.f32 %v1225, %v1408
    %v2129 = vmul.f32 %v1226, %v1409
    %v2130 = vmul.f32 %v1227, %v1410
    %v2131 = vmul.f32 %v1228, %v1411
    %v2132 = vmul.f32 %v1229, %v1412
    %v2133 = vmul.f32 %v1230, %v1413
    %v2134 = vmul.f32 %v1231, %v1414
    %v2135 = vmul.f32 %v1232, %v1415
    %v2136 = vmul.f32 %v1233, %v1416
    %v2137 = vmul.f32 %v1234, %v1417
    %v2138 = vmul.f32 %v1235, %v1418
    %v2139 = vmul.f32 %v1236, %v1419
    %v2140 = vmul.f32 %v1237, %v1420
    %v2141 = vmul.f32 %v1238, %v1403
    %v2142 = vmul.f32 %v1239, %v1404
    %v2143 = vmul.f32 %v1240, %v1405
    %v2144 = vmul.f32 %v1241, %v1406
    %v2145 = vmul.f32 %v1242, %v1407
    %v2146 = vmul.f32 %v1243, %v1408
    %v2147 = vmul.f32 %v1244, %v1409
    %v2148 = vmul.f32 %v1245, %v1410
    %v2149 = vmul.f32 %v1246, %v1411
    %v2150 = vmul.f32 %v1247, %v1412
    %v2151 = vmul.f32 %v1248, %v1413
    %v2152 = vmul.f32 %v1249, %v1414
    %v2153 = vmul.f32 %v1250, %v1415
    %v2154 = vmul.f32 %v1251, %v1416
    %v2155 = vmul.f32 %v1252, %v1417
    %v2156 = vmul.f32 %v1253, %v1418
    %v2157 = vmul.f32 %v1254, %v1419
    %v2158 = vmul.f32 %v1255, %v1420
    %v2159 = vmul.f32 %v1256, %v1403
    %v2160 = vmul.f32 %v1257, %v1404
    %v2161 = vmul.f32 %v1258, %v1405
    %v2162 = vmul.f32 %v1259, %v1406
    %v2163 = vmul.f32 %v1260, %v1407
    %v2164 = vmul.f32 %v1261, %v1408
    %v2165 = vmul.f32 %v1262, %v1409
    %v2166 = vmul.f32 %v1263, %v1410
    %v2167 = vmul.f32 %v1264, %v1411
    %v2168 = vmul.f32 %v1265, %v1412
    %v2169 = vmul.f32 %v1266, %v1413
    %v2170 = vmul.f32 %v1267, %v1414
    %v2171 = vmul.f32 %v1268, %v1415
    %v2172 = vmul.f32 %v1269, %v1416
    %v2173 = vmul.f32 %v1270, %v1417
    %v2174 = vmul.f32 %v1271, %v1418
    %v2175 = vmul.f32 %v1272, %v1419
    %v2176 = vmul.f32 %v1273, %v1420
    %v2177 = vmul.f32 %v1274, %v1403
    %v2178 = vmul.f32 %v1275, %v1404
    %v2179 = vmul.f32 %v1276, %v1405
    %v2180 = vmul.f32 %v1277, %v1406
    %v2181 = vmul.f32 %v1278, %v1407
    %v2182 = vmul.f32 %v1279, %v1408
    %v2183 = vmul.f32 %v1280, %v1409
    %v2184 = vmul.f32 %v1281, %v1410
    %v2185 = vmul.f32 %v1282, %v1411
    %v2186 = vmul.f32 %v1283, %v1412
    %v2187 = vmul.f32 %v1284, %v1413
    %v2188 = vmul.f32 %v1285, %v1414
    %v2189 = vmul.f32 %v1286, %v1415
    %v2190 = vmul.f32 %v1287, %v1416
    %v2191 = vmul.f32 %v1288, %v1417
    %v2192 = vmul.f32 %v1289, %v1418
    %v2193 = vmul.f32 %v1290, %v1419
    %v2194 = vmul.f32 %v1291, %v1420
    %v2195 = vmul.f32 %v1292, %v1403
    %v2196 = vmul.f32 %v1293, %v1404
    %v2197 = vmul.f32 %v1294, %v1405
    %v2198 = vmul.f32 %v1295, %v1406
    %v2199 = vmul.f32 %v1296, %v1407
    %v2200 = vmul.f32 %v1297, %v1408
    %v2201 = vmul.f32 %v1298, %v1409
    %v2202 = vmul.f32 %v1299, %v1410
    %v2203 = vmul.f32 %v1300, %v1411
    %v2204 = vmul.f32 %v1301, %v1412
    %v2205 = vmul.f32 %v1302, %v1413
    %v2206 = vmul.f32 %v1303, %v1414
    %v2207 = vmul.f32 %v1304, %v1415
    %v2208 = vmul.f32 %v1305, %v1416
    %v2209 = vmul.f32 %v1306, %v1417
    %v2210 = vmul.f32 %v1307, %v1418
    %v2211 = vmul.f32 %v1308, %v1419
    %v2212 = vmul.f32 %v1309, %v1420
    %v2213 = vmul.f32 %v1310, %v1403
    %v2214 = vmul.f32 %v1311, %v1404
    %v2215 = vmul.f32 %v1312, %v1405
    %v2216 = vmul.f32 %v1313, %v1406
    %v2217 = vmul.f32 %v1314, %v1407
    %v2218 = vmul.f32 %v1315, %v1408
    %v2219 = vmul.f32 %v1316, %v1409
    %v2220 = vmul.f32 %v1317, %v1410
    %v2221 = vmul.f32 %v1318, %v1411
    %v2222 = vmul.f32 %v1319, %v1412
    %v2223 = vmul.f32 %v1320, %v1413
    %v2224 = vmul.f32 %v1321, %v1414
    %v2225 = vmul.f32 %v1322, %v1415
    %v2226 = vmul.f32 %v1323, %v1416
    %v2227 = vmul.f32 %v1324, %v1417
    %v2228 = vmul.f32 %v1325, %v1418
    %v2229 = vmul.f32 %v1326, %v1419
    %v2230 = vmul.f32 %v1327, %v1420
    %v2231 = vmul.f32 %v1328, %v1403
    %v2232 = vmul.f32 %v1329, %v1404
    %v2233 = vmul.f32 %v1330, %v1405
    %v2234 = vmul.f32 %v1331, %v1406
    %v2235 = vmul.f32 %v1332, %v1407
    %v2236 = vmul.f32 %v1333, %v1408
    %v2237 = vmul.f32 %v1334, %v1409
    %v2238 = vmul.f32 %v1335, %v1410
    %v2239 = vmul.f32 %v1336, %v1411
    %v2240 = vmul.f32 %v1337, %v1412
    %v2241 = vmul.f32 %v1338, %v1413
    %v2242 = vmul.f32 %v1339, %v1414
    %v2243 = vmul.f32 %v1340, %v1415
    %v2244 = vmul.f32 %v1341, %v1416
    %v2245 = vmul.f32 %v1342, %v1417
    %v2246 = vmul.f32 %v1343, %v1418
    %v2247 = vmul.f32 %v1344, %v1419
    %v2248 = vmul.f32 %v1345, %v1420
    %v2249 = vmul.f32 %v1346, %v1403
    %v2250 = vmul.f32 %v1347, %v1404
    %v2251 = vmul.f32 %v1348, %v1405
    %v2252 = vmul.f32 %v1349, %v1406
    %v2253 = vmul.f32 %v1350, %v1407
    %v2254 = vmul.f32 %v1351, %v1408
    %v2255 = vmul.f32 %v1352, %v1409
    %v2256 = vmul.f32 %v1353, %v1410
    %v2257 = vmul.f32 %v1354, %v1411
    %v2258 = vmul.f32 %v1355, %v1412
    %v2259 = vmul.f32 %v1356, %v1413
    %v2260 = vmul.f32 %v1357, %v1414
    %v2261 = vmul.f32 %v1358, %v1415
    %v2262 = vmul.f32 %v1359, %v1416
    %v2263 = vmul.f32 %v1360, %v1417
    %v2264 = vmul.f32 %v1361, %v1418
    %v2265 = vmul.f32 %v1362, %v1419
    %v2266 = vmul.f32 %v1363, %v1420
    %v2267 = vmul.f32 %v1364, %v1403
    %v2268 = vmul.f32 %v1365, %v1404
    %v2269 = vmul.f32 %v1366, %v1405
    %v2270 = vmul.f32 %v1367, %v1406
    %v2271 = vmul.f32 %v1368, %v1407
    %v2272 = vmul.f32 %v1369, %v1408
    %v2273 = vmul.f32 %v1370, %v1409
    %v2274 = vmul.f32 %v1371, %v1410
    %v2275 = vmul.f32 %v1372, %v1411
    %v2276 = vmul.f32 %v1373, %v1412
    %v2277 = vmul.f32 %v1374, %v1413
    %v2278 = vmul.f32 %v1375, %v1414
    %v2279 = vmul.f32 %v1376, %v1415
    %v2280 = vmul.f32 %v1377, %v1416
    %v2281 = vmul.f32 %v1378, %v1417
    %v2282 = vmul.f32 %v1379, %v1418
    %v2283 = vmul.f32 %v1380, %v1419
    %v2284 = vmul.f32 %v1381, %v1420
    %v2285 = vmul.f32 %v1382, %v1403
    %v2286 = vmul.f32 %v1383, %v1404
    %v2287 = vmul.f32 %v1384, %v1405
    %v2288 = vmul.f32 %v1385, %v1406
    %v2289 = vmul.f32 %v1386, %v1407
    %v2290 = vmul.f32 %v1387, %v1408
    %v2291 = vmul.f32 %v1388, %v1409
    %v2292 = vmul.f32 %v1389, %v1410
    %v2293 = vmul.f32 %v1390, %v1411
    %v2294 = vmul.f32 %v1391, %v1412
    %v2295 = vmul.f32 %v1392, %v1413
    %v2296 = vmul.f32 %v1393, %v1414
    %v2297 = vmul.f32 %v1394, %v1415
    %v2298 = vmul.f32 %v1395, %v1416
    %v2299 = vmul.f32 %v1396, %v1417
    %v2300 = vmul.f32 %v1397, %v1418
    %v2301 = vmul.f32 %v1398, %v1419
    %v2302 = vmul.f32 %v1399, %v1420
    %v2303 = vpack.c.bf16 %v1457, %v1439
    %v2304 = vpack.c.bf16 %v1458, %v1440
    %v2305 = vpack.c.bf16 %v1459, %v1441
    %v2306 = vpack.c.bf16 %v1460, %v1442
    %v2307 = vpack.c.bf16 %v1461, %v1443
    %v2308 = vpack.c.bf16 %v1462, %v1444
    %v2309 = vpack.c.bf16 %v1463, %v1445
    %v2310 = vpack.c.bf16 %v1464, %v1446
    %v2311 = vpack.c.bf16 %v1465, %v1447
    %v2312 = vpack.c.bf16 %v1466, %v1448
    %v2313 = vpack.c.bf16 %v1467, %v1449
    %v2314 = vpack.c.bf16 %v1468, %v1450
    %v2315 = vpack.c.bf16 %v1469, %v1451
    %v2316 = vpack.c.bf16 %v1470, %v1452
    %v2317 = vpack.c.bf16 %v1471, %v1453
    %v2318 = vpack.c.bf16 %v1472, %v1454
    %v2319 = vpack.c.bf16 %v1473, %v1455
    %v2320 = vpack.c.bf16 %v1474, %v1456
    %v2321 = vpack.c.bf16 %v1493, %v1475
    %v2322 = vpack.c.bf16 %v1494, %v1476
    %v2323 = vpack.c.bf16 %v1495, %v1477
    %v2324 = vpack.c.bf16 %v1496, %v1478
    %v2325 = vpack.c.bf16 %v1497, %v1479
    %v2326 = vpack.c.bf16 %v1498, %v1480
    %v2327 = vpack.c.bf16 %v1499, %v1481
    %v2328 = vpack.c.bf16 %v1500, %v1482
    %v2329 = vpack.c.bf16 %v1501, %v1483
    %v2330 = vpack.c.bf16 %v1502, %v1484
    %v2331 = vpack.c.bf16 %v1503, %v1485
    %v2332 = vpack.c.bf16 %v1504, %v1486
    %v2333 = vpack.c.bf16 %v1505, %v1487
    %v2334 = vpack.c.bf16 %v1506, %v1488
    %v2335 = vpack.c.bf16 %v1507, %v1489
    %v2336 = vpack.c.bf16 %v1508, %v1490
    %v2337 = vpack.c.bf16 %v1509, %v1491
    %v2338 = vpack.c.bf16 %v1510, %v1492
    %v2339 = vpack.c.bf16 %v1529, %v1511
    %v2340 = vpack.c.bf16 %v1530, %v1512
    %v2341 = vpack.c.bf16 %v1531, %v1513
    %v2342 = vpack.c.bf16 %v1532, %v1514
    %v2343 = vpack.c.bf16 %v1533, %v1515
    %v2344 = vpack.c.bf16 %v1534, %v1516
    %v2345 = vpack.c.bf16 %v1535, %v1517
    %v2346 = vpack.c.bf16 %v1536, %v1518
    %v2347 = vpack.c.bf16 %v1537, %v1519
    %v2348 = vpack.c.bf16 %v1538, %v1520
    %v2349 = vpack.c.bf16 %v1539, %v1521
    %v2350 = vpack.c.bf16 %v1540, %v1522
    %v2351 = vpack.c.bf16 %v1541, %v1523
    %v2352 = vpack.c.bf16 %v1542, %v1524
    %v2353 = vpack.c.bf16 %v1543, %v1525
    %v2354 = vpack.c.bf16 %v1544, %v1526
    %v2355 = vpack.c.bf16 %v1545, %v1527
    %v2356 = vpack.c.bf16 %v1546, %v1528
    %v2357 = vpack.c.bf16 %v1565, %v1547
    %v2358 = vpack.c.bf16 %v1566, %v1548
    %v2359 = vpack.c.bf16 %v1567, %v1549
    %v2360 = vpack.c.bf16 %v1568, %v1550
    %v2361 = vpack.c.bf16 %v1569, %v1551
    %v2362 = vpack.c.bf16 %v1570, %v1552
    %v2363 = vpack.c.bf16 %v1571, %v1553
    %v2364 = vpack.c.bf16 %v1572, %v1554
    %v2365 = vpack.c.bf16 %v1573, %v1555
    %v2366 = vpack.c.bf16 %v1574, %v1556
    %v2367 = vpack.c.bf16 %v1575, %v1557
    %v2368 = vpack.c.bf16 %v1576, %v1558
    %v2369 = vpack.c.bf16 %v1577, %v1559
    %v2370 = vpack.c.bf16 %v1578, %v1560
    %v2371 = vpack.c.bf16 %v1579, %v1561
    %v2372 = vpack.c.bf16 %v1580, %v1562
    %v2373 = vpack.c.bf16 %v1581, %v1563
    %v2374 = vpack.c.bf16 %v1582, %v1564
    %v2375 = vpack.c.bf16 %v1601, %v1583
    %v2376 = vpack.c.bf16 %v1602, %v1584
    %v2377 = vpack.c.bf16 %v1603, %v1585
    %v2378 = vpack.c.bf16 %v1604, %v1586
    %v2379 = vpack.c.bf16 %v1605, %v1587
    %v2380 = vpack.c.bf16 %v1606, %v1588
    %v2381 = vpack.c.bf16 %v1607, %v1589
    %v2382 = vpack.c.bf16 %v1608, %v1590
    %v2383 = vpack.c.bf16 %v1609, %v1591
    %v2384 = vpack.c.bf16 %v1610, %v1592
    %v2385 = vpack.c.bf16 %v1611, %v1593
    %v2386 = vpack.c.bf16 %v1612, %v1594
    %v2387 = vpack.c.bf16 %v1613, %v1595
    %v2388 = vpack.c.bf16 %v1614, %v1596
    %v2389 = vpack.c.bf16 %v1615, %v1597
    %v2390 = vpack.c.bf16 %v1616, %v1598
    %v2391 = vpack.c.bf16 %v1617, %v1599
    %v2392 = vpack.c.bf16 %v1618, %v1600
    %v2393 = vpack.c.bf16 %v1637, %v1619
    %v2394 = vpack.c.bf16 %v1638, %v1620
    %v2395 = vpack.c.bf16 %v1639, %v1621
    %v2396 = vpack.c.bf16 %v1640, %v1622
    %v2397 = vpack.c.bf16 %v1641, %v1623
    %v2398 = vpack.c.bf16 %v1642, %v1624
    %v2399 = vpack.c.bf16 %v1643, %v1625
    %v2400 = vpack.c.bf16 %v1644, %v1626
    %v2401 = vpack.c.bf16 %v1645, %v1627
    %v2402 = vpack.c.bf16 %v1646, %v1628
    %v2403 = vpack.c.bf16 %v1647, %v1629
    %v2404 = vpack.c.bf16 %v1648, %v1630
    %v2405 = vpack.c.bf16 %v1649, %v1631
    %v2406 = vpack.c.bf16 %v1650, %v1632
    %v2407 = vpack.c.bf16 %v1651, %v1633
    %v2408 = vpack.c.bf16 %v1652, %v1634
    %v2409 = vpack.c.bf16 %v1653, %v1635
    %v2410 = vpack.c.bf16 %v1654, %v1636
    %v2411 = vpack.c.bf16 %v1673, %v1655
    %v2412 = vpack.c.bf16 %v1674, %v1656
    %v2413 = vpack.c.bf16 %v1675, %v1657
    %v2414 = vpack.c.bf16 %v1676, %v1658
    %v2415 = vpack.c.bf16 %v1677, %v1659
    %v2416 = vpack.c.bf16 %v1678, %v1660
    %v2417 = vpack.c.bf16 %v1679, %v1661
    %v2418 = vpack.c.bf16 %v1680, %v1662
    %v2419 = vpack.c.bf16 %v1681, %v1663
    %v2420 = vpack.c.bf16 %v1682, %v1664
    %v2421 = vpack.c.bf16 %v1683, %v1665
    %v2422 = vpack.c.bf16 %v1684, %v1666
    %v2423 = vpack.c.bf16 %v1685, %v1667
    %v2424 = vpack.c.bf16 %v1686, %v1668
    %v2425 = vpack.c.bf16 %v1687, %v1669
    %v2426 = vpack.c.bf16 %v1688, %v1670
    %v2427 = vpack.c.bf16 %v1689, %v1671
    %v2428 = vpack.c.bf16 %v1690, %v1672
    %v2429 = vpack.c.bf16 %v1709, %v1691
    %v2430 = vpack.c.bf16 %v1710, %v1692
    %v2431 = vpack.c.bf16 %v1711, %v1693
    %v2432 = vpack.c.bf16 %v1712, %v1694
    %v2433 = vpack.c.bf16 %v1713, %v1695
    %v2434 = vpack.c.bf16 %v1714, %v1696
    %v2435 = vpack.c.bf16 %v1715, %v1697
    %v2436 = vpack.c.bf16 %v1716, %v1698
    %v2437 = vpack.c.bf16 %v1717, %v1699
    %v2438 = vpack.c.bf16 %v1718, %v1700
    %v2439 = vpack.c.bf16 %v1719, %v1701
    %v2440 = vpack.c.bf16 %v1720, %v1702
    %v2441 = vpack.c.bf16 %v1721, %v1703
    %v2442 = vpack.c.bf16 %v1722, %v1704
    %v2443 = vpack.c.bf16 %v1723, %v1705
    %v2444 = vpack.c.bf16 %v1724, %v1706
    %v2445 = vpack.c.bf16 %v1725, %v1707
    %v2446 = vpack.c.bf16 %v1726, %v1708
    %v2447 = vpack.c.bf16 %v1745, %v1727
    %v2448 = vpack.c.bf16 %v1746, %v1728
    %v2449 = vpack.c.bf16 %v1747, %v1729
    %v2450 = vpack.c.bf16 %v1748, %v1730
    %v2451 = vpack.c.bf16 %v1749, %v1731
    %v2452 = vpack.c.bf16 %v1750, %v1732
    %v2453 = vpack.c.bf16 %v1751, %v1733
    %v2454 = vpack.c.bf16 %v1752, %v1734
    %v2455 = vpack.c.bf16 %v1753, %v1735
    %v2456 = vpack.c.bf16 %v1754, %v1736
    %v2457 = vpack.c.bf16 %v1755, %v1737
    %v2458 = vpack.c.bf16 %v1756, %v1738
    %v2459 = vpack.c.bf16 %v1757, %v1739
    %v2460 = vpack.c.bf16 %v1758, %v1740
    %v2461 = vpack.c.bf16 %v1759, %v1741
    %v2462 = vpack.c.bf16 %v1760, %v1742
    %v2463 = vpack.c.bf16 %v1761, %v1743
    %v2464 = vpack.c.bf16 %v1762, %v1744
    %v2465 = vpack.c.bf16 %v1781, %v1763
    %v2466 = vpack.c.bf16 %v1782, %v1764
    %v2467 = vpack.c.bf16 %v1783, %v1765
    %v2468 = vpack.c.bf16 %v1784, %v1766
    %v2469 = vpack.c.bf16 %v1785, %v1767
    %v2470 = vpack.c.bf16 %v1786, %v1768
    %v2471 = vpack.c.bf16 %v1787, %v1769
    %v2472 = vpack.c.bf16 %v1788, %v1770
    %v2473 = vpack.c.bf16 %v1789, %v1771
    %v2474 = vpack.c.bf16 %v1790, %v1772
    %v2475 = vpack.c.bf16 %v1791, %v1773
    %v2476 = vpack.c.bf16 %v1792, %v1774
    %v2477 = vpack.c.bf16 %v1793, %v1775
    %v2478 = vpack.c.bf16 %v1794, %v1776
    %v2479 = vpack.c.bf16 %v1795, %v1777
    %v2480 = vpack.c.bf16 %v1796, %v1778
    %v2481 = vpack.c.bf16 %v1797, %v1779
    %v2482 = vpack.c.bf16 %v1798, %v1780
    %v2483 = vpack.c.bf16 %v1817, %v1799
    %v2484 = vpack.c.bf16 %v1818, %v1800
    %v2485 = vpack.c.bf16 %v1819, %v1801
    %v2486 = vpack.c.bf16 %v1820, %v1802
    %v2487 = vpack.c.bf16 %v1821, %v1803
    %v2488 = vpack.c.bf16 %v1822, %v1804
    %v2489 = vpack.c.bf16 %v1823, %v1805
    %v2490 = vpack.c.bf16 %v1824, %v1806
    %v2491 = vpack.c.bf16 %v1825, %v1807
    %v2492 = vpack.c.bf16 %v1826, %v1808
    %v2493 = vpack.c.bf16 %v1827, %v1809
    %v2494 = vpack.c.bf16 %v1828, %v1810
    %v2495 = vpack.c.bf16 %v1829, %v1811
    %v2496 = vpack.c.bf16 %v1830, %v1812
    %v2497 = vpack.c.bf16 %v1831, %v1813
    %v2498 = vpack.c.bf16 %v1832, %v1814
    %v2499 = vpack.c.bf16 %v1833, %v1815
    %v2500 = vpack.c.bf16 %v1834, %v1816
    %v2501 = vpack.c.bf16 %v1853, %v1835
    %v2502 = vpack.c.bf16 %v1854, %v1836
    %v2503 = vpack.c.bf16 %v1855, %v1837
    %v2504 = vpack.c.bf16 %v1856, %v1838
    %v2505 = vpack.c.bf16 %v1857, %v1839
    %v2506 = vpack.c.bf16 %v1858, %v1840
    %v2507 = vpack.c.bf16 %v1859, %v1841
    %v2508 = vpack.c.bf16 %v1860, %v1842
    %v2509 = vpack.c.bf16 %v1861, %v1843
    %v2510 = vpack.c.bf16 %v1862, %v1844
    %v2511 = vpack.c.bf16 %v1863, %v1845
    %v2512 = vpack.c.bf16 %v1864, %v1846
    %v2513 = vpack.c.bf16 %v1865, %v1847
    %v2514 = vpack.c.bf16 %v1866, %v1848
    %v2515 = vpack.c.bf16 %v1867, %v1849
    %v2516 = vpack.c.bf16 %v1868, %v1850
    %v2517 = vpack.c.bf16 %v1869, %v1851
    %v2518 = vpack.c.bf16 %v1870, %v1852
    %v2519 = vpack.c.bf16 %v1889, %v1871
    %v2520 = vpack.c.bf16 %v1890, %v1872
    %v2521 = vpack.c.bf16 %v1891, %v1873
    %v2522 = vpack.c.bf16 %v1892, %v1874
    %v2523 = vpack.c.bf16 %v1893, %v1875
    %v2524 = vpack.c.bf16 %v1894, %v1876
    %v2525 = vpack.c.bf16 %v1895, %v1877
    %v2526 = vpack.c.bf16 %v1896, %v1878
    %v2527 = vpack.c.bf16 %v1897, %v1879
    %v2528 = vpack.c.bf16 %v1898, %v1880
    %v2529 = vpack.c.bf16 %v1899, %v1881
    %v2530 = vpack.c.bf16 %v1900, %v1882
    %v2531 = vpack.c.bf16 %v1901, %v1883
    %v2532 = vpack.c.bf16 %v1902, %v1884
    %v2533 = vpack.c.bf16 %v1903, %v1885
    %v2534 = vpack.c.bf16 %v1904, %v1886
    %v2535 = vpack.c.bf16 %v1905, %v1887
    %v2536 = vpack.c.bf16 %v1906, %v1888
    %v2537 = vpack.c.bf16 %v1925, %v1907
    %v2538 = vpack.c.bf16 %v1926, %v1908
    %v2539 = vpack.c.bf16 %v1927, %v1909
    %v2540 = vpack.c.bf16 %v1928, %v1910
    %v2541 = vpack.c.bf16 %v1929, %v1911
    %v2542 = vpack.c.bf16 %v1930, %v1912
    %v2543 = vpack.c.bf16 %v1931, %v1913
    %v2544 = vpack.c.bf16 %v1932, %v1914
    %v2545 = vpack.c.bf16 %v1933, %v1915
    %v2546 = vpack.c.bf16 %v1934, %v1916
    %v2547 = vpack.c.bf16 %v1935, %v1917
    %v2548 = vpack.c.bf16 %v1936, %v1918
    %v2549 = vpack.c.bf16 %v1937, %v1919
    %v2550 = vpack.c.bf16 %v1938, %v1920
    %v2551 = vpack.c.bf16 %v1939, %v1921
    %v2552 = vpack.c.bf16 %v1940, %v1922
    %v2553 = vpack.c.bf16 %v1941, %v1923
    %v2554 = vpack.c.bf16 %v1942, %v1924
    %v2555 = vpack.c.bf16 %v1961, %v1943
    %v2556 = vpack.c.bf16 %v1962, %v1944
    %v2557 = vpack.c.bf16 %v1963, %v1945
    %v2558 = vpack.c.bf16 %v1964, %v1946
    %v2559 = vpack.c.bf16 %v1965, %v1947
    %v2560 = vpack.c.bf16 %v1966, %v1948
    %v2561 = vpack.c.bf16 %v1967, %v1949
    %v2562 = vpack.c.bf16 %v1968, %v1950
    %v2563 = vpack.c.bf16 %v1969, %v1951
    %v2564 = vpack.c.bf16 %v1970, %v1952
    %v2565 = vpack.c.bf16 %v1971, %v1953
    %v2566 = vpack.c.bf16 %v1972, %v1954
    %v2567 = vpack.c.bf16 %v1973, %v1955
    %v2568 = vpack.c.bf16 %v1974, %v1956
    %v2569 = vpack.c.bf16 %v1975, %v1957
    %v2570 = vpack.c.bf16 %v1976, %v1958
    %v2571 = vpack.c.bf16 %v1977, %v1959
    %v2572 = vpack.c.bf16 %v1978, %v1960
    %v2573 = vpack.c.bf16 %v1997, %v1979
    %v2574 = vpack.c.bf16 %v1998, %v1980
    %v2575 = vpack.c.bf16 %v1999, %v1981
    %v2576 = vpack.c.bf16 %v2000, %v1982
    %v2577 = vpack.c.bf16 %v2001, %v1983
    %v2578 = vpack.c.bf16 %v2002, %v1984
    %v2579 = vpack.c.bf16 %v2003, %v1985
    %v2580 = vpack.c.bf16 %v2004, %v1986
    %v2581 = vpack.c.bf16 %v2005, %v1987
    %v2582 = vpack.c.bf16 %v2006, %v1988
    %v2583 = vpack.c.bf16 %v2007, %v1989
    %v2584 = vpack.c.bf16 %v2008, %v1990
    %v2585 = vpack.c.bf16 %v2009, %v1991
    %v2586 = vpack.c.bf16 %v2010, %v1992
    %v2587 = vpack.c.bf16 %v2011, %v1993
    %v2588 = vpack.c.bf16 %v2012, %v1994
    %v2589 = vpack.c.bf16 %v2013, %v1995
    %v2590 = vpack.c.bf16 %v2014, %v1996
    %v2591 = vpack.c.bf16 %v2033, %v2015
    %v2592 = vpack.c.bf16 %v2034, %v2016
    %v2593 = vpack.c.bf16 %v2035, %v2017
    %v2594 = vpack.c.bf16 %v2036, %v2018
    %v2595 = vpack.c.bf16 %v2037, %v2019
    %v2596 = vpack.c.bf16 %v2038, %v2020
    %v2597 = vpack.c.bf16 %v2039, %v2021
    %v2598 = vpack.c.bf16 %v2040, %v2022
    %v2599 = vpack.c.bf16 %v2041, %v2023
    %v2600 = vpack.c.bf16 %v2042, %v2024
    %v2601 = vpack.c.bf16 %v2043, %v2025
    %v2602 = vpack.c.bf16 %v2044, %v2026
    %v2603 = vpack.c.bf16 %v2045, %v2027
    %v2604 = vpack.c.bf16 %v2046, %v2028
    %v2605 = vpack.c.bf16 %v2047, %v2029
    %v2606 = vpack.c.bf16 %v2048, %v2030
    %v2607 = vpack.c.bf16 %v2049, %v2031
    %v2608 = vpack.c.bf16 %v2050, %v2032
    %v2609 = vpack.c.bf16 %v2069, %v2051
    %v2610 = vpack.c.bf16 %v2070, %v2052
    %v2611 = vpack.c.bf16 %v2071, %v2053
    %v2612 = vpack.c.bf16 %v2072, %v2054
    %v2613 = vpack.c.bf16 %v2073, %v2055
    %v2614 = vpack.c.bf16 %v2074, %v2056
    %v2615 = vpack.c.bf16 %v2075, %v2057
    %v2616 = vpack.c.bf16 %v2076, %v2058
    %v2617 = vpack.c.bf16 %v2077, %v2059
    %v2618 = vpack.c.bf16 %v2078, %v2060
    %v2619 = vpack.c.bf16 %v2079, %v2061
    %v2620 = vpack.c.bf16 %v2080, %v2062
    %v2621 = vpack.c.bf16 %v2081, %v2063
    %v2622 = vpack.c.bf16 %v2082, %v2064
    %v2623 = vpack.c.bf16 %v2083, %v2065
    %v2624 = vpack.c.bf16 %v2084, %v2066
    %v2625 = vpack.c.bf16 %v2085, %v2067
    %v2626 = vpack.c.bf16 %v2086, %v2068
    %v2627 = vpack.c.bf16 %v2105, %v2087
    %v2628 = vpack.c.bf16 %v2106, %v2088
    %v2629 = vpack.c.bf16 %v2107, %v2089
    %v2630 = vpack.c.bf16 %v2108, %v2090
    %v2631 = vpack.c.bf16 %v2109, %v2091
    %v2632 = vpack.c.bf16 %v2110, %v2092
    %v2633 = vpack.c.bf16 %v2111, %v2093
    %v2634 = vpack.c.bf16 %v2112, %v2094
    %v2635 = vpack.c.bf16 %v2113, %v2095
    %v2636 = vpack.c.bf16 %v2114, %v2096
    %v2637 = vpack.c.bf16 %v2115, %v2097
    %v2638 = vpack.c.bf16 %v2116, %v2098
    %v2639 = vpack.c.bf16 %v2117, %v2099
    %v2640 = vpack.c.bf16 %v2118, %v2100
    %v2641 = vpack.c.bf16 %v2119, %v2101
    %v2642 = vpack.c.bf16 %v2120, %v2102
    %v2643 = vpack.c.bf16 %v2121, %v2103
    %v2644 = vpack.c.bf16 %v2122, %v2104
    %v2645 = vpack.c.bf16 %v2141, %v2123
    %v2646 = vpack.c.bf16 %v2142, %v2124
    %v2647 = vpack.c.bf16 %v2143, %v2125
    %v2648 = vpack.c.bf16 %v2144, %v2126
    %v2649 = vpack.c.bf16 %v2145, %v2127
    %v2650 = vpack.c.bf16 %v2146, %v2128
    %v2651 = vpack.c.bf16 %v2147, %v2129
    %v2652 = vpack.c.bf16 %v2148, %v2130
    %v2653 = vpack.c.bf16 %v2149, %v2131
    %v2654 = vpack.c.bf16 %v2150, %v2132
    %v2655 = vpack.c.bf16 %v2151, %v2133
    %v2656 = vpack.c.bf16 %v2152, %v2134
    %v2657 = vpack.c.bf16 %v2153, %v2135
    %v2658 = vpack.c.bf16 %v2154, %v2136
    %v2659 = vpack.c.bf16 %v2155, %v2137
    %v2660 = vpack.c.bf16 %v2156, %v2138
    %v2661 = vpack.c.bf16 %v2157, %v2139
    %v2662 = vpack.c.bf16 %v2158, %v2140
    %v2663 = vpack.c.bf16 %v2177, %v2159
    %v2664 = vpack.c.bf16 %v2178, %v2160
    %v2665 = vpack.c.bf16 %v2179, %v2161
    %v2666 = vpack.c.bf16 %v2180, %v2162
    %v2667 = vpack.c.bf16 %v2181, %v2163
    %v2668 = vpack.c.bf16 %v2182, %v2164
    %v2669 = vpack.c.bf16 %v2183, %v2165
    %v2670 = vpack.c.bf16 %v2184, %v2166
    %v2671 = vpack.c.bf16 %v2185, %v2167
    %v2672 = vpack.c.bf16 %v2186, %v2168
    %v2673 = vpack.c.bf16 %v2187, %v2169
    %v2674 = vpack.c.bf16 %v2188, %v2170
    %v2675 = vpack.c.bf16 %v2189, %v2171
    %v2676 = vpack.c.bf16 %v2190, %v2172
    %v2677 = vpack.c.bf16 %v2191, %v2173
    %v2678 = vpack.c.bf16 %v2192, %v2174
    %v2679 = vpack.c.bf16 %v2193, %v2175
    %v2680 = vpack.c.bf16 %v2194, %v2176
    %v2681 = vpack.c.bf16 %v2213, %v2195
    %v2682 = vpack.c.bf16 %v2214, %v2196
    %v2683 = vpack.c.bf16 %v2215, %v2197
    %v2684 = vpack.c.bf16 %v2216, %v2198
    %v2685 = vpack.c.bf16 %v2217, %v2199
    %v2686 = vpack.c.bf16 %v2218, %v2200
    %v2687 = vpack.c.bf16 %v2219, %v2201
    %v2688 = vpack.c.bf16 %v2220, %v2202
    %v2689 = vpack.c.bf16 %v2221, %v2203
    %v2690 = vpack.c.bf16 %v2222, %v2204
    %v2691 = vpack.c.bf16 %v2223, %v2205
    %v2692 = vpack.c.bf16 %v2224, %v2206
    %v2693 = vpack.c.bf16 %v2225, %v2207
    %v2694 = vpack.c.bf16 %v2226, %v2208
    %v2695 = vpack.c.bf16 %v2227, %v2209
    %v2696 = vpack.c.bf16 %v2228, %v2210
    %v2697 = vpack.c.bf16 %v2229, %v2211
    %v2698 = vpack.c.bf16 %v2230, %v2212
    %v2699 = vpack.c.bf16 %v2249, %v2231
    %v2700 = vpack.c.bf16 %v2250, %v2232
    %v2701 = vpack.c.bf16 %v2251, %v2233
    %v2702 = vpack.c.bf16 %v2252, %v2234
    %v2703 = vpack.c.bf16 %v2253, %v2235
    %v2704 = vpack.c.bf16 %v2254, %v2236
    %v2705 = vpack.c.bf16 %v2255, %v2237
    %v2706 = vpack.c.bf16 %v2256, %v2238
    %v2707 = vpack.c.bf16 %v2257, %v2239
    %v2708 = vpack.c.bf16 %v2258, %v2240
    %v2709 = vpack.c.bf16 %v2259, %v2241
    %v2710 = vpack.c.bf16 %v2260, %v2242
    %v2711 = vpack.c.bf16 %v2261, %v2243
    %v2712 = vpack.c.bf16 %v2262, %v2244
    %v2713 = vpack.c.bf16 %v2263, %v2245
    %v2714 = vpack.c.bf16 %v2264, %v2246
    %v2715 = vpack.c.bf16 %v2265, %v2247
    %v2716 = vpack.c.bf16 %v2266, %v2248
    %v2717 = vpack.c.bf16 %v2285, %v2267
    %v2718 = vpack.c.bf16 %v2286, %v2268
    %v2719 = vpack.c.bf16 %v2287, %v2269
    %v2720 = vpack.c.bf16 %v2288, %v2270
    %v2721 = vpack.c.bf16 %v2289, %v2271
    %v2722 = vpack.c.bf16 %v2290, %v2272
    %v2723 = vpack.c.bf16 %v2291, %v2273
    %v2724 = vpack.c.bf16 %v2292, %v2274
    %v2725 = vpack.c.bf16 %v2293, %v2275
    %v2726 = vpack.c.bf16 %v2294, %v2276
    %v2727 = vpack.c.bf16 %v2295, %v2277
    %v2728 = vpack.c.bf16 %v2296, %v2278
    %v2729 = vpack.c.bf16 %v2297, %v2279
    %v2730 = vpack.c.bf16 %v2298, %v2280
    %v2731 = vpack.c.bf16 %v2299, %v2281
    %v2732 = vpack.c.bf16 %v2300, %v2282
    %v2733 = vpack.c.bf16 %v2301, %v2283
    %v2734 = vpack.c.bf16 %v2302, %v2284
    %v2735 = vld [vmem:[%s0] sm:$0xff]
    %v2736 = vld [vmem:[%s0 + $0x8] sm:$0xff]
    %v2737 = vld [vmem:[%s0 + $0x10] sm:$0xff]
    %v2738 = vld [vmem:[%s0 + $0x18] sm:$0xff]
    %v2739 = vld [vmem:[%s0 + $0x20] sm:$0xff]
    %v2740 = vld [vmem:[%s0 + $0x28] sm:$0xff]
    %v2741 = vld [vmem:[%s0 + $0x30] sm:$0xff]
    %v2742 = vld [vmem:[%s0 + $0x38] sm:$0xff]
    %v2743 = vld [vmem:[%s0 + $0x40] sm:$0xff]
    %v2744 = vld [vmem:[%s0 + $0x48] sm:$0xff]
    %v2745 = vld [vmem:[%s0 + $0x50] sm:$0xff]
    %v2746 = vld [vmem:[%s0 + $0x58] sm:$0xff]
    %v2747 = vld [vmem:[%s0 + $0x60] sm:$0xff]
    %v2748 = vld [vmem:[%s0 + $0x68] sm:$0xff]
    %v2749 = vld [vmem:[%s0 + $0x70] sm:$0xff]
    %v2750 = vld [vmem:[%s0 + $0x78] sm:$0xff]
    %v2751 = vld [vmem:[%s0 + $0x80] sm:$0xff]
    %v2752 = vld [vmem:[%s0 + $0x88] sm:$0xff]
    %v2753 = vld [vmem:[%s0 + $0x90] sm:$0xff]
    %v2754 = vld [vmem:[%s0 + $0x98] sm:$0xff]
    %v2755 = vld [vmem:[%s0 + $0xa0] sm:$0xff]
    %v2756 = vld [vmem:[%s0 + $0xa8] sm:$0xff]
    %v2757 = vld [vmem:[%s0 + $0xb0] sm:$0xff]
    %v2758 = vld [vmem:[%s0 + $0xb8] sm:$0xff]
    %v2759 = vld [vmem:[%s0 + $0xc0] sm:$0xff]
    %v2760 = vld [vmem:[%s0 + $0xc8] sm:$0xff]
    %v2761 = vld [vmem:[%s0 + $0xd0] sm:$0xff]
    %v2762 = vld [vmem:[%s0 + $0xd8] sm:$0xff]
    %v2763 = vld [vmem:[%s0 + $0xe0] sm:$0xff]
    %v2764 = vld [vmem:[%s0 + $0xe8] sm:$0xff]
    %v2765 = vld [vmem:[%s0 + $0xf0] sm:$0xff]
    %v2766 = vld [vmem:[%s0 + $0xf8] sm:$0xff]
    %v2767 = vld [vmem:[%s0 + $0x100] sm:$0xff]
    %v2768 = vld [vmem:[%s0 + $0x108] sm:$0xff]
    %v2769 = vld [vmem:[%s0 + $0x110] sm:$0xff]
    %v2770 = vld [vmem:[%s0 + $0x118] sm:$0xff]
    %v2771 = vld [vmem:[%s0 + $0x120] sm:$0xff]
    %v2772 = vld [vmem:[%s0 + $0x128] sm:$0xff]
    %v2773 = vld [vmem:[%s0 + $0x130] sm:$0xff]
    %v2774 = vld [vmem:[%s0 + $0x138] sm:$0xff]
    %v2775 = vld [vmem:[%s0 + $0x140] sm:$0xff]
    %v2776 = vld [vmem:[%s0 + $0x148] sm:$0xff]
    %v2777 = vld [vmem:[%s0 + $0x150] sm:$0xff]
    %v2778 = vld [vmem:[%s0 + $0x158] sm:$0xff]
    %v2779 = vld [vmem:[%s0 + $0x160] sm:$0xff]
    %v2780 = vld [vmem:[%s0 + $0x168] sm:$0xff]
    %v2781 = vld [vmem:[%s0 + $0x170] sm:$0xff]
    %v2782 = vld [vmem:[%s0 + $0x178] sm:$0xff]
    %v2783 = vld [vmem:[%s0 + $0x180] sm:$0xff]
    %v2784 = vld [vmem:[%s0 + $0x188] sm:$0xff]
    %v2785 = vld [vmem:[%s0 + $0x190] sm:$0xff]
    %v2786 = vld [vmem:[%s0 + $0x198] sm:$0xff]
    %v2787 = vld [vmem:[%s0 + $0x1a0] sm:$0xff]
    %v2788 = vld [vmem:[%s0 + $0x1a8] sm:$0xff]
    %v2789 = vld [vmem:[%s0 + $0x1b0] sm:$0xff]
    %v2790 = vld [vmem:[%s0 + $0x1b8] sm:$0xff]
    %v2791 = vld [vmem:[%s0 + $0x1c0] sm:$0xff]
    %v2792 = vld [vmem:[%s0 + $0x1c8] sm:$0xff]
    %v2793 = vld [vmem:[%s0 + $0x1d0] sm:$0xff]
    %v2794 = vld [vmem:[%s0 + $0x1d8] sm:$0xff]
    %v2795 = vld [vmem:[%s0 + $0x1e0] sm:$0xff]
    %v2796 = vld [vmem:[%s0 + $0x1e8] sm:$0xff]
    %v2797 = vld [vmem:[%s0 + $0x1f0] sm:$0xff]
    %v2798 = vld [vmem:[%s0 + $0x1f8] sm:$0xff]
    %v2799 = vld [vmem:[%s0 + $0x200] sm:$0xff]
    %v2800 = vld [vmem:[%s0 + $0x208] sm:$0xff]
    %v2801 = vld [vmem:[%s0 + $0x210] sm:$0xff]
    %v2802 = vld [vmem:[%s0 + $0x218] sm:$0xff]
    %v2803 = vld [vmem:[%s0 + $0x220] sm:$0xff]
    %v2804 = vld [vmem:[%s0 + $0x228] sm:$0xff]
    %v2805 = vld [vmem:[%s0 + $0x230] sm:$0xff]
    %v2806 = vld [vmem:[%s0 + $0x238] sm:$0xff]
    %v2807 = vld [vmem:[%s0 + $0x240] sm:$0xff]
    %v2808 = vld [vmem:[%s0 + $0x248] sm:$0xff]
    %v2809 = vld [vmem:[%s0 + $0x250] sm:$0xff]
    %v2810 = vld [vmem:[%s0 + $0x258] sm:$0xff]
    %v2811 = vld [vmem:[%s0 + $0x260] sm:$0xff]
    %v2812 = vld [vmem:[%s0 + $0x268] sm:$0xff]
    %v2813 = vld [vmem:[%s0 + $0x270] sm:$0xff]
    %v2814 = vld [vmem:[%s0 + $0x278] sm:$0xff]
    %v2815 = vld [vmem:[%s0 + $0x280] sm:$0xff]
    %v2816 = vld [vmem:[%s0 + $0x288] sm:$0xff]
    %v2817 = vld [vmem:[%s0 + $0x290] sm:$0xff]
    %v2818 = vld [vmem:[%s0 + $0x298] sm:$0xff]
    %v2819 = vld [vmem:[%s0 + $0x2a0] sm:$0xff]
    %v2820 = vld [vmem:[%s0 + $0x2a8] sm:$0xff]
    %v2821 = vld [vmem:[%s0 + $0x2b0] sm:$0xff]
    %v2822 = vld [vmem:[%s0 + $0x2b8] sm:$0xff]
    %v2823 = vld [vmem:[%s0 + $0x2c0] sm:$0xff]
    %v2824 = vld [vmem:[%s0 + $0x2c8] sm:$0xff]
    %v2825 = vld [vmem:[%s0 + $0x2d0] sm:$0xff]
    %v2826 = vld [vmem:[%s0 + $0x2d8] sm:$0xff]
    %v2827 = vld [vmem:[%s0 + $0x2e0] sm:$0xff]
    %v2828 = vld [vmem:[%s0 + $0x2e8] sm:$0xff]
    %v2829 = vld [vmem:[%s0 + $0x2f0] sm:$0xff]
    %v2830 = vld [vmem:[%s0 + $0x2f8] sm:$0xff]
    %v2831 = vld [vmem:[%s0 + $0x300] sm:$0xff]
    %v2832 = vld [vmem:[%s0 + $0x308] sm:$0xff]
    %v2833 = vld [vmem:[%s0 + $0x310] sm:$0xff]
    %v2834 = vld [vmem:[%s0 + $0x318] sm:$0xff]
    %v2835 = vld [vmem:[%s0 + $0x320] sm:$0xff]
    %v2836 = vld [vmem:[%s0 + $0x328] sm:$0xff]
    %v2837 = vld [vmem:[%s0 + $0x330] sm:$0xff]
    %v2838 = vld [vmem:[%s0 + $0x338] sm:$0xff]
    %v2839 = vld [vmem:[%s0 + $0x340] sm:$0xff]
    %v2840 = vld [vmem:[%s0 + $0x348] sm:$0xff]
    %v2841 = vld [vmem:[%s0 + $0x350] sm:$0xff]
    %v2842 = vld [vmem:[%s0 + $0x358] sm:$0xff]
    %v2843 = vld [vmem:[%s0 + $0x360] sm:$0xff]
    %v2844 = vld [vmem:[%s0 + $0x368] sm:$0xff]
    %v2845 = vld [vmem:[%s0 + $0x370] sm:$0xff]
    %v2846 = vld [vmem:[%s0 + $0x378] sm:$0xff]
    %v2847 = vld [vmem:[%s0 + $0x380] sm:$0xff]
    %v2848 = vld [vmem:[%s0 + $0x388] sm:$0xff]
    %v2849 = vld [vmem:[%s0 + $0x390] sm:$0xff]
    %v2850 = vld [vmem:[%s0 + $0x398] sm:$0xff]
    %v2851 = vld [vmem:[%s0 + $0x3a0] sm:$0xff]
    %v2852 = vld [vmem:[%s0 + $0x3a8] sm:$0xff]
    %v2853 = vld [vmem:[%s0 + $0x3b0] sm:$0xff]
    %v2854 = vld [vmem:[%s0 + $0x3b8] sm:$0xff]
    %v2855 = vld [vmem:[%s0 + $0x3c0] sm:$0xff]
    %v2856 = vld [vmem:[%s0 + $0x3c8] sm:$0xff]
    %v2857 = vld [vmem:[%s0 + $0x3d0] sm:$0xff]
    %v2858 = vld [vmem:[%s0 + $0x3d8] sm:$0xff]
    %v2859 = vld [vmem:[%s0 + $0x3e0] sm:$0xff]
    %v2860 = vld [vmem:[%s0 + $0x3e8] sm:$0xff]
    %v2861 = vld [vmem:[%s0 + $0x3f0] sm:$0xff]
    %v2862 = vld [vmem:[%s0 + $0x3f8] sm:$0xff]
    %v2863 = vld [vmem:[%s0 + $0x400] sm:$0xff]
    %v2864 = vld [vmem:[%s0 + $0x408] sm:$0xff]
    %v2865 = vld [vmem:[%s0 + $0x410] sm:$0xff]
    %v2866 = vld [vmem:[%s0 + $0x418] sm:$0xff]
    %v2867 = vld [vmem:[%s0 + $0x420] sm:$0xff]
    %v2868 = vld [vmem:[%s0 + $0x428] sm:$0xff]
    %v2869 = vld [vmem:[%s0 + $0x430] sm:$0xff]
    %v2870 = vld [vmem:[%s0 + $0x438] sm:$0xff]
    %v2871 = vld [vmem:[%s0 + $0x440] sm:$0xff]
    %v2872 = vld [vmem:[%s0 + $0x448] sm:$0xff]
    %v2873 = vld [vmem:[%s0 + $0x450] sm:$0xff]
    %v2874 = vld [vmem:[%s0 + $0x458] sm:$0xff]
    %v2875 = vld [vmem:[%s0 + $0x460] sm:$0xff]
    %v2876 = vld [vmem:[%s0 + $0x468] sm:$0xff]
    %v2877 = vld [vmem:[%s0 + $0x470] sm:$0xff]
    %v2878 = vld [vmem:[%s0 + $0x478] sm:$0xff]
    %v2879 = vld [vmem:[%s0 + $0x480] sm:$0xff]
    %v2880 = vld [vmem:[%s0 + $0x488] sm:$0xff]
    %v2881 = vld [vmem:[%s0 + $0x490] sm:$0xff]
    %v2882 = vld [vmem:[%s0 + $0x498] sm:$0xff]
    %v2883 = vld [vmem:[%s0 + $0x4a0] sm:$0xff]
    %v2884 = vld [vmem:[%s0 + $0x4a8] sm:$0xff]
    %v2885 = vld [vmem:[%s0 + $0x4b0] sm:$0xff]
    %v2886 = vld [vmem:[%s0 + $0x4b8] sm:$0xff]
    %v2887 = vld [vmem:[%s0 + $0x4c0] sm:$0xff]
    %v2888 = vld [vmem:[%s0 + $0x4c8] sm:$0xff]
    %v2889 = vld [vmem:[%s0 + $0x4d0] sm:$0xff]
    %v2890 = vld [vmem:[%s0 + $0x4d8] sm:$0xff]
    %v2891 = vld [vmem:[%s0 + $0x4e0] sm:$0xff]
    %v2892 = vld [vmem:[%s0 + $0x4e8] sm:$0xff]
    %v2893 = vld [vmem:[%s0 + $0x4f0] sm:$0xff]
    %v2894 = vld [vmem:[%s0 + $0x4f8] sm:$0xff]
    %v2895 = vld [vmem:[%s0 + $0x500] sm:$0xff]
    %v2896 = vld [vmem:[%s0 + $0x508] sm:$0xff]
    %v2897 = vld [vmem:[%s0 + $0x510] sm:$0xff]
    %v2898 = vld [vmem:[%s0 + $0x518] sm:$0xff]
    %v2899 = vld [vmem:[%s0 + $0x520] sm:$0xff]
    %v2900 = vld [vmem:[%s0 + $0x528] sm:$0xff]
    %v2901 = vld [vmem:[%s0 + $0x530] sm:$0xff]
    %v2902 = vld [vmem:[%s0 + $0x538] sm:$0xff]
    %v2903 = vld [vmem:[%s0 + $0x540] sm:$0xff]
    %v2904 = vld [vmem:[%s0 + $0x548] sm:$0xff]
    %v2905 = vld [vmem:[%s0 + $0x550] sm:$0xff]
    %v2906 = vld [vmem:[%s0 + $0x558] sm:$0xff]
    %v2907 = vld [vmem:[%s0 + $0x560] sm:$0xff]
    %v2908 = vld [vmem:[%s0 + $0x568] sm:$0xff]
    %v2909 = vld [vmem:[%s0 + $0x570] sm:$0xff]
    %v2910 = vld [vmem:[%s0 + $0x578] sm:$0xff]
    %v2911 = vld [vmem:[%s0 + $0x580] sm:$0xff]
    %v2912 = vld [vmem:[%s0 + $0x588] sm:$0xff]
    %v2913 = vld [vmem:[%s0 + $0x590] sm:$0xff]
    %v2914 = vld [vmem:[%s0 + $0x598] sm:$0xff]
    %v2915 = vld [vmem:[%s0 + $0x5a0] sm:$0xff]
    %v2916 = vld [vmem:[%s0 + $0x5a8] sm:$0xff]
    %v2917 = vld [vmem:[%s0 + $0x5b0] sm:$0xff]
    %v2918 = vld [vmem:[%s0 + $0x5b8] sm:$0xff]
    %v2919 = vld [vmem:[%s0 + $0x5c0] sm:$0xff]
    %v2920 = vld [vmem:[%s0 + $0x5c8] sm:$0xff]
    %v2921 = vld [vmem:[%s0 + $0x5d0] sm:$0xff]
    %v2922 = vld [vmem:[%s0 + $0x5d8] sm:$0xff]
    %v2923 = vld [vmem:[%s0 + $0x5e0] sm:$0xff]
    %v2924 = vld [vmem:[%s0 + $0x5e8] sm:$0xff]
    %v2925 = vld [vmem:[%s0 + $0x5f0] sm:$0xff]
    %v2926 = vld [vmem:[%s0 + $0x5f8] sm:$0xff]
    %v2927 = vld [vmem:[%s0 + $0x600] sm:$0xff]
    %v2928 = vld [vmem:[%s0 + $0x608] sm:$0xff]
    %v2929 = vld [vmem:[%s0 + $0x610] sm:$0xff]
    %v2930 = vld [vmem:[%s0 + $0x618] sm:$0xff]
    %v2931 = vld [vmem:[%s0 + $0x620] sm:$0xff]
    %v2932 = vld [vmem:[%s0 + $0x628] sm:$0xff]
    %v2933 = vld [vmem:[%s0 + $0x630] sm:$0xff]
    %v2934 = vld [vmem:[%s0 + $0x638] sm:$0xff]
    %v2935 = vld [vmem:[%s0 + $0x640] sm:$0xff]
    %v2936 = vld [vmem:[%s0 + $0x648] sm:$0xff]
    %v2937 = vld [vmem:[%s0 + $0x650] sm:$0xff]
    %v2938 = vld [vmem:[%s0 + $0x658] sm:$0xff]
    %v2939 = vld [vmem:[%s0 + $0x660] sm:$0xff]
    %v2940 = vld [vmem:[%s0 + $0x668] sm:$0xff]
    %v2941 = vld [vmem:[%s0 + $0x670] sm:$0xff]
    %v2942 = vld [vmem:[%s0 + $0x678] sm:$0xff]
    %v2943 = vld [vmem:[%s0 + $0x680] sm:$0xff]
    %v2944 = vld [vmem:[%s0 + $0x688] sm:$0xff]
    %v2945 = vld [vmem:[%s0 + $0x690] sm:$0xff]
    %v2946 = vld [vmem:[%s0 + $0x698] sm:$0xff]
    %v2947 = vld [vmem:[%s0 + $0x6a0] sm:$0xff]
    %v2948 = vld [vmem:[%s0 + $0x6a8] sm:$0xff]
    %v2949 = vld [vmem:[%s0 + $0x6b0] sm:$0xff]
    %v2950 = vld [vmem:[%s0 + $0x6b8] sm:$0xff]
    %v2951 = vld [vmem:[%s0 + $0x6c0] sm:$0xff]
    %v2952 = vld [vmem:[%s0 + $0x6c8] sm:$0xff]
    %v2953 = vld [vmem:[%s0 + $0x6d0] sm:$0xff]
    %v2954 = vld [vmem:[%s0 + $0x6d8] sm:$0xff]
    %v2955 = vld [vmem:[%s0 + $0x6e0] sm:$0xff]
    %v2956 = vld [vmem:[%s0 + $0x6e8] sm:$0xff]
    %v2957 = vld [vmem:[%s0 + $0x6f0] sm:$0xff]
    %v2958 = vld [vmem:[%s0 + $0x6f8] sm:$0xff]
    %v2959 = vld [vmem:[%s0 + $0x700] sm:$0xff]
    %v2960 = vld [vmem:[%s0 + $0x708] sm:$0xff]
    %v2961 = vld [vmem:[%s0 + $0x710] sm:$0xff]
    %v2962 = vld [vmem:[%s0 + $0x718] sm:$0xff]
    %v2963 = vld [vmem:[%s0 + $0x720] sm:$0xff]
    %v2964 = vld [vmem:[%s0 + $0x728] sm:$0xff]
    %v2965 = vld [vmem:[%s0 + $0x730] sm:$0xff]
    %v2966 = vld [vmem:[%s0 + $0x738] sm:$0xff]
    %v2967 = vld [vmem:[%s0 + $0x740] sm:$0xff]
    %v2968 = vld [vmem:[%s0 + $0x748] sm:$0xff]
    %v2969 = vld [vmem:[%s0 + $0x750] sm:$0xff]
    %v2970 = vld [vmem:[%s0 + $0x758] sm:$0xff]
    %v2971 = vld [vmem:[%s0 + $0x760] sm:$0xff]
    %v2972 = vld [vmem:[%s0 + $0x768] sm:$0xff]
    %v2973 = vld [vmem:[%s0 + $0x770] sm:$0xff]
    %v2974 = vld [vmem:[%s0 + $0x778] sm:$0xff]
    %v2975 = vld [vmem:[%s0 + $0x780] sm:$0xff]
    %v2976 = vld [vmem:[%s0 + $0x788] sm:$0xff]
    %v2977 = vld [vmem:[%s0 + $0x790] sm:$0xff]
    %v2978 = vld [vmem:[%s0 + $0x798] sm:$0xff]
    %v2979 = vld [vmem:[%s0 + $0x7a0] sm:$0xff]
    %v2980 = vld [vmem:[%s0 + $0x7a8] sm:$0xff]
    %v2981 = vld [vmem:[%s0 + $0x7b0] sm:$0xff]
    %v2982 = vld [vmem:[%s0 + $0x7b8] sm:$0xff]
    %v2983 = vld [vmem:[%s0 + $0x7c0] sm:$0xff]
    %v2984 = vld [vmem:[%s0 + $0x7c8] sm:$0xff]
    %v2985 = vld [vmem:[%s0 + $0x7d0] sm:$0xff]
    %v2986 = vld [vmem:[%s0 + $0x7d8] sm:$0xff]
    %v2987 = vld [vmem:[%s0 + $0x7e0] sm:$0xff]
    %v2988 = vld [vmem:[%s0 + $0x7e8] sm:$0xff]
    %v2989 = vld [vmem:[%s0 + $0x7f0] sm:$0xff]
    %v2990 = vld [vmem:[%s0 + $0x7f8] sm:$0xff]
    %v2991 = vld [vmem:[%s0 + $0x800] sm:$0xff]
    %v2992 = vld [vmem:[%s0 + $0x808] sm:$0xff]
    %v2993 = vld [vmem:[%s0 + $0x810] sm:$0xff]
    %v2994 = vld [vmem:[%s0 + $0x818] sm:$0xff]
    %v2995 = vld [vmem:[%s0 + $0x820] sm:$0xff]
    %v2996 = vld [vmem:[%s0 + $0x828] sm:$0xff]
    %v2997 = vld [vmem:[%s0 + $0x830] sm:$0xff]
    %v2998 = vld [vmem:[%s0 + $0x838] sm:$0xff]
    %v2999 = vld [vmem:[%s0 + $0x840] sm:$0xff]
    %v3000 = vld [vmem:[%s0 + $0x848] sm:$0xff]
    %v3001 = vld [vmem:[%s0 + $0x850] sm:$0xff]
    %v3002 = vld [vmem:[%s0 + $0x858] sm:$0xff]
    %v3003 = vld [vmem:[%s0 + $0x860] sm:$0xff]
    %v3004 = vld [vmem:[%s0 + $0x868] sm:$0xff]
    %v3005 = vld [vmem:[%s0 + $0x870] sm:$0xff]
    %v3006 = vld [vmem:[%s0 + $0x878] sm:$0xff]
    %v3007 = vld [vmem:[%s0 + $0x880] sm:$0xff]
    %v3008 = vld [vmem:[%s0 + $0x888] sm:$0xff]
    %v3009 = vld [vmem:[%s0 + $0x890] sm:$0xff]
    %v3010 = vld [vmem:[%s0 + $0x898] sm:$0xff]
    %v3011 = vld [vmem:[%s0 + $0x8a0] sm:$0xff]
    %v3012 = vld [vmem:[%s0 + $0x8a8] sm:$0xff]
    %v3013 = vld [vmem:[%s0 + $0x8b0] sm:$0xff]
    %v3014 = vld [vmem:[%s0 + $0x8b8] sm:$0xff]
    %v3015 = vld [vmem:[%s0 + $0x8c0] sm:$0xff]
    %v3016 = vld [vmem:[%s0 + $0x8c8] sm:$0xff]
    %v3017 = vld [vmem:[%s0 + $0x8d0] sm:$0xff]
    %v3018 = vld [vmem:[%s0 + $0x8d8] sm:$0xff]
    %v3019 = vld [vmem:[%s0 + $0x8e0] sm:$0xff]
    %v3020 = vld [vmem:[%s0 + $0x8e8] sm:$0xff]
    %v3021 = vld [vmem:[%s0 + $0x8f0] sm:$0xff]
    %v3022 = vld [vmem:[%s0 + $0x8f8] sm:$0xff]
    %v3023 = vpack.c.bf16 %v2736, %v2735
    %v3024 = vpack.c.bf16 %v2738, %v2737
    %v3025 = vpack.c.bf16 %v2740, %v2739
    %v3026 = vpack.c.bf16 %v2742, %v2741
    %v3027 = vpack.c.bf16 %v2744, %v2743
    %v3028 = vpack.c.bf16 %v2746, %v2745
    %v3029 = vpack.c.bf16 %v2748, %v2747
    %v3030 = vpack.c.bf16 %v2750, %v2749
    %v3031 = vpack.c.bf16 %v2752, %v2751
    %v3032 = vpack.c.bf16 %v2754, %v2753
    %v3033 = vpack.c.bf16 %v2756, %v2755
    %v3034 = vpack.c.bf16 %v2758, %v2757
    %v3035 = vpack.c.bf16 %v2760, %v2759
    %v3036 = vpack.c.bf16 %v2762, %v2761
    %v3037 = vpack.c.bf16 %v2764, %v2763
    %v3038 = vpack.c.bf16 %v2766, %v2765
    %v3039 = vpack.c.bf16 %v2768, %v2767
    %v3040 = vpack.c.bf16 %v2770, %v2769
    %v3041 = vpack.c.bf16 %v2772, %v2771
    %v3042 = vpack.c.bf16 %v2774, %v2773
    %v3043 = vpack.c.bf16 %v2776, %v2775
    %v3044 = vpack.c.bf16 %v2778, %v2777
    %v3045 = vpack.c.bf16 %v2780, %v2779
    %v3046 = vpack.c.bf16 %v2782, %v2781
    %v3047 = vpack.c.bf16 %v2784, %v2783
    %v3048 = vpack.c.bf16 %v2786, %v2785
    %v3049 = vpack.c.bf16 %v2788, %v2787
    %v3050 = vpack.c.bf16 %v2790, %v2789
    %v3051 = vpack.c.bf16 %v2792, %v2791
    %v3052 = vpack.c.bf16 %v2794, %v2793
    %v3053 = vpack.c.bf16 %v2796, %v2795
    %v3054 = vpack.c.bf16 %v2798, %v2797
    %v3055 = vpack.c.bf16 %v2800, %v2799
    %v3056 = vpack.c.bf16 %v2802, %v2801
    %v3057 = vpack.c.bf16 %v2804, %v2803
    %v3058 = vpack.c.bf16 %v2806, %v2805
    %v3059 = vpack.c.bf16 %v2808, %v2807
    %v3060 = vpack.c.bf16 %v2810, %v2809
    %v3061 = vpack.c.bf16 %v2812, %v2811
    %v3062 = vpack.c.bf16 %v2814, %v2813
    %v3063 = vpack.c.bf16 %v2816, %v2815
    %v3064 = vpack.c.bf16 %v2818, %v2817
    %v3065 = vpack.c.bf16 %v2820, %v2819
    %v3066 = vpack.c.bf16 %v2822, %v2821
    %v3067 = vpack.c.bf16 %v2824, %v2823
    %v3068 = vpack.c.bf16 %v2826, %v2825
    %v3069 = vpack.c.bf16 %v2828, %v2827
    %v3070 = vpack.c.bf16 %v2830, %v2829
    %v3071 = vpack.c.bf16 %v2832, %v2831
    %v3072 = vpack.c.bf16 %v2834, %v2833
    %v3073 = vpack.c.bf16 %v2836, %v2835
    %v3074 = vpack.c.bf16 %v2838, %v2837
    %v3075 = vpack.c.bf16 %v2840, %v2839
    %v3076 = vpack.c.bf16 %v2842, %v2841
    %v3077 = vpack.c.bf16 %v2844, %v2843
    %v3078 = vpack.c.bf16 %v2846, %v2845
    %v3079 = vpack.c.bf16 %v2848, %v2847
    %v3080 = vpack.c.bf16 %v2850, %v2849
    %v3081 = vpack.c.bf16 %v2852, %v2851
    %v3082 = vpack.c.bf16 %v2854, %v2853
    %v3083 = vpack.c.bf16 %v2856, %v2855
    %v3084 = vpack.c.bf16 %v2858, %v2857
    %v3085 = vpack.c.bf16 %v2860, %v2859
    %v3086 = vpack.c.bf16 %v2862, %v2861
    %v3087 = vpack.c.bf16 %v2864, %v2863
    %v3088 = vpack.c.bf16 %v2866, %v2865
    %v3089 = vpack.c.bf16 %v2868, %v2867
    %v3090 = vpack.c.bf16 %v2870, %v2869
    %v3091 = vpack.c.bf16 %v2872, %v2871
    %v3092 = vpack.c.bf16 %v2874, %v2873
    %v3093 = vpack.c.bf16 %v2876, %v2875
    %v3094 = vpack.c.bf16 %v2878, %v2877
    %v3095 = vpack.c.bf16 %v2880, %v2879
    %v3096 = vpack.c.bf16 %v2882, %v2881
    %v3097 = vpack.c.bf16 %v2884, %v2883
    %v3098 = vpack.c.bf16 %v2886, %v2885
    %v3099 = vpack.c.bf16 %v2888, %v2887
    %v3100 = vpack.c.bf16 %v2890, %v2889
    %v3101 = vpack.c.bf16 %v2892, %v2891
    %v3102 = vpack.c.bf16 %v2894, %v2893
    %v3103 = vpack.c.bf16 %v2896, %v2895
    %v3104 = vpack.c.bf16 %v2898, %v2897
    %v3105 = vpack.c.bf16 %v2900, %v2899
    %v3106 = vpack.c.bf16 %v2902, %v2901
    %v3107 = vpack.c.bf16 %v2904, %v2903
    %v3108 = vpack.c.bf16 %v2906, %v2905
    %v3109 = vpack.c.bf16 %v2908, %v2907
    %v3110 = vpack.c.bf16 %v2910, %v2909
    %v3111 = vpack.c.bf16 %v2912, %v2911
    %v3112 = vpack.c.bf16 %v2914, %v2913
    %v3113 = vpack.c.bf16 %v2916, %v2915
    %v3114 = vpack.c.bf16 %v2918, %v2917
    %v3115 = vpack.c.bf16 %v2920, %v2919
    %v3116 = vpack.c.bf16 %v2922, %v2921
    %v3117 = vpack.c.bf16 %v2924, %v2923
    %v3118 = vpack.c.bf16 %v2926, %v2925
    %v3119 = vpack.c.bf16 %v2928, %v2927
    %v3120 = vpack.c.bf16 %v2930, %v2929
    %v3121 = vpack.c.bf16 %v2932, %v2931
    %v3122 = vpack.c.bf16 %v2934, %v2933
    %v3123 = vpack.c.bf16 %v2936, %v2935
    %v3124 = vpack.c.bf16 %v2938, %v2937
    %v3125 = vpack.c.bf16 %v2940, %v2939
    %v3126 = vpack.c.bf16 %v2942, %v2941
    %v3127 = vpack.c.bf16 %v2944, %v2943
    %v3128 = vpack.c.bf16 %v2946, %v2945
    %v3129 = vpack.c.bf16 %v2948, %v2947
    %v3130 = vpack.c.bf16 %v2950, %v2949
    %v3131 = vpack.c.bf16 %v2952, %v2951
    %v3132 = vpack.c.bf16 %v2954, %v2953
    %v3133 = vpack.c.bf16 %v2956, %v2955
    %v3134 = vpack.c.bf16 %v2958, %v2957
    %v3135 = vpack.c.bf16 %v2960, %v2959
    %v3136 = vpack.c.bf16 %v2962, %v2961
    %v3137 = vpack.c.bf16 %v2964, %v2963
    %v3138 = vpack.c.bf16 %v2966, %v2965
    %v3139 = vpack.c.bf16 %v2968, %v2967
    %v3140 = vpack.c.bf16 %v2970, %v2969
    %v3141 = vpack.c.bf16 %v2972, %v2971
    %v3142 = vpack.c.bf16 %v2974, %v2973
    %v3143 = vpack.c.bf16 %v2976, %v2975
    %v3144 = vpack.c.bf16 %v2978, %v2977
    %v3145 = vpack.c.bf16 %v2980, %v2979
    %v3146 = vpack.c.bf16 %v2982, %v2981
    %v3147 = vpack.c.bf16 %v2984, %v2983
    %v3148 = vpack.c.bf16 %v2986, %v2985
    %v3149 = vpack.c.bf16 %v2988, %v2987
    %v3150 = vpack.c.bf16 %v2990, %v2989
    %v3151 = vpack.c.bf16 %v2992, %v2991
    %v3152 = vpack.c.bf16 %v2994, %v2993
    %v3153 = vpack.c.bf16 %v2996, %v2995
    %v3154 = vpack.c.bf16 %v2998, %v2997
    %v3155 = vpack.c.bf16 %v3000, %v2999
    %v3156 = vpack.c.bf16 %v3002, %v3001
    %v3157 = vpack.c.bf16 %v3004, %v3003
    %v3158 = vpack.c.bf16 %v3006, %v3005
    %v3159 = vpack.c.bf16 %v3008, %v3007
    %v3160 = vpack.c.bf16 %v3010, %v3009
    %v3161 = vpack.c.bf16 %v3012, %v3011
    %v3162 = vpack.c.bf16 %v3014, %v3013
    %v3163 = vpack.c.bf16 %v3016, %v3015
    %v3164 = vpack.c.bf16 %v3018, %v3017
    %v3165 = vpack.c.bf16 %v3020, %v3019
    %v3166 = vpack.c.bf16 %v3022, %v3021
    %3167 = vmatpush.bf16.msra.mxu0 %v3030
    %3168 = vmatpush.bf16.msra.mxu0 %v3029
    %3169 = vmatpush.bf16.msra.mxu0 %v3028
    %3170 = vmatpush.bf16.msra.mxu0 %v3027
    %3171 = vmatpush.bf16.msra.mxu0 %v3026
    %3172 = vmatpush.bf16.msra.mxu0 %v3025
    %3173 = vmatpush.bf16.msra.mxu0 %v3024
    %3174 = vmatpush.bf16.msra.mxu0 %v3023
    %3175 = vmatmul.bf16.gmra.mxu0 %v2303
    %v3176 = vpop.f32.mrf.mxu0
    %v3177 = vadd.f32 0.0, %v3176
    %v3178 = vpop.f32.mrf.mxu0
    %v3179 = vadd.f32 0.0, %v3178
    %3180 = vmatmul.bf16.gmra.mxu0 %v2321
    %v3181 = vpop.f32.mrf.mxu0
    %v3182 = vadd.f32 0.0, %v3181
    %v3183 = vpop.f32.mrf.mxu0
    %v3184 = vadd.f32 0.0, %v3183
    %3185 = vmatmul.bf16.gmra.mxu0 %v2339
    %v3186 = vpop.f32.mrf.mxu0
    %v3187 = vadd.f32 0.0, %v3186
    %v3188 = vpop.f32.mrf.mxu0
    %v3189 = vadd.f32 0.0, %v3188
    %3190 = vmatmul.bf16.gmra.mxu0 %v2357
    %v3191 = vpop.f32.mrf.mxu0
    %v3192 = vadd.f32 0.0, %v3191
    %v3193 = vpop.f32.mrf.mxu0
    %v3194 = vadd.f32 0.0, %v3193
    %3195 = vmatmul.bf16.gmra.mxu0 %v2375
    %v3196 = vpop.f32.mrf.mxu0
    %v3197 = vadd.f32 0.0, %v3196
    %v3198 = vpop.f32.mrf.mxu0
    %v3199 = vadd.f32 0.0, %v3198
    %3200 = vmatmul.bf16.gmra.mxu0 %v2393
    %v3201 = vpop.f32.mrf.mxu0
    %v3202 = vadd.f32 0.0, %v3201
    %v3203 = vpop.f32.mrf.mxu0
    %v3204 = vadd.f32 0.0, %v3203
    %3205 = vmatmul.bf16.gmra.mxu0 %v2411
    %v3206 = vpop.f32.mrf.mxu0
    %v3207 = vadd.f32 0.0, %v3206
    %v3208 = vpop.f32.mrf.mxu0
    %v3209 = vadd.f32 0.0, %v3208
    %3210 = vmatmul.bf16.gmra.mxu0 %v2429
    %v3211 = vpop.f32.mrf.mxu0
    %v3212 = vadd.f32 0.0, %v3211
    %v3213 = vpop.f32.mrf.mxu0
    %v3214 = vadd.f32 0.0, %v3213
    %3215 = vmatmul.bf16.gmra.mxu0 %v2447
    %v3216 = vpop.f32.mrf.mxu0
    %v3217 = vadd.f32 0.0, %v3216
    %v3218 = vpop.f32.mrf.mxu0
    %v3219 = vadd.f32 0.0, %v3218
    %3220 = vmatmul.bf16.gmra.mxu0 %v2465
    %v3221 = vpop.f32.mrf.mxu0
    %v3222 = vadd.f32 0.0, %v3221
    %v3223 = vpop.f32.mrf.mxu0
    %v3224 = vadd.f32 0.0, %v3223
    %3225 = vmatmul.bf16.gmra.mxu0 %v2483
    %v3226 = vpop.f32.mrf.mxu0
    %v3227 = vadd.f32 0.0, %v3226
    %v3228 = vpop.f32.mrf.mxu0
    %v3229 = vadd.f32 0.0, %v3228
    %3230 = vmatmul.bf16.gmra.mxu0 %v2501
    %v3231 = vpop.f32.mrf.mxu0
    %v3232 = vadd.f32 0.0, %v3231
    %v3233 = vpop.f32.mrf.mxu0
    %v3234 = vadd.f32 0.0, %v3233
    %3235 = vmatmul.bf16.gmra.mxu0 %v2519
    %v3236 = vpop.f32.mrf.mxu0
    %v3237 = vadd.f32 0.0, %v3236
    %v3238 = vpop.f32.mrf.mxu0
    %v3239 = vadd.f32 0.0, %v3238
    %3240 = vmatmul.bf16.gmra.mxu0 %v2537
    %v3241 = vpop.f32.mrf.mxu0
    %v3242 = vadd.f32 0.0, %v3241
    %v3243 = vpop.f32.mrf.mxu0
    %v3244 = vadd.f32 0.0, %v3243
    %3245 = vmatmul.bf16.gmra.mxu0 %v2555
    %v3246 = vpop.f32.mrf.mxu0
    %v3247 = vadd.f32 0.0, %v3246
    %v3248 = vpop.f32.mrf.mxu0
    %v3249 = vadd.f32 0.0, %v3248
    %3250 = vmatmul.bf16.gmra.mxu0 %v2573
    %v3251 = vpop.f32.mrf.mxu0
    %v3252 = vadd.f32 0.0, %v3251
    %v3253 = vpop.f32.mrf.mxu0
    %v3254 = vadd.f32 0.0, %v3253
    %3255 = vmatmul.bf16.gmra.mxu0 %v2591
    %v3256 = vpop.f32.mrf.mxu0
    %v3257 = vadd.f32 0.0, %v3256
    %v3258 = vpop.f32.mrf.mxu0
    %v3259 = vadd.f32 0.0, %v3258
    %3260 = vmatmul.bf16.gmra.mxu0 %v2609
    %v3261 = vpop.f32.mrf.mxu0
    %v3262 = vadd.f32 0.0, %v3261
    %v3263 = vpop.f32.mrf.mxu0
    %v3264 = vadd.f32 0.0, %v3263
    %3265 = vmatmul.bf16.gmra.mxu0 %v2627
    %v3266 = vpop.f32.mrf.mxu0
    %v3267 = vadd.f32 0.0, %v3266
    %v3268 = vpop.f32.mrf.mxu0
    %v3269 = vadd.f32 0.0, %v3268
    %3270 = vmatmul.bf16.gmra.mxu0 %v2645
    %v3271 = vpop.f32.mrf.mxu0
    %v3272 = vadd.f32 0.0, %v3271
    %v3273 = vpop.f32.mrf.mxu0
    %v3274 = vadd.f32 0.0, %v3273
    %3275 = vmatmul.bf16.gmra.mxu0 %v2663
    %v3276 = vpop.f32.mrf.mxu0
    %v3277 = vadd.f32 0.0, %v3276
    %v3278 = vpop.f32.mrf.mxu0
    %v3279 = vadd.f32 0.0, %v3278
    %3280 = vmatmul.bf16.gmra.mxu0 %v2681
    %v3281 = vpop.f32.mrf.mxu0
    %v3282 = vadd.f32 0.0, %v3281
    %v3283 = vpop.f32.mrf.mxu0
    %v3284 = vadd.f32 0.0, %v3283
    %3285 = vmatmul.bf16.gmra.mxu0 %v2699
    %v3286 = vpop.f32.mrf.mxu0
    %v3287 = vadd.f32 0.0, %v3286
    %v3288 = vpop.f32.mrf.mxu0
    %v3289 = vadd.f32 0.0, %v3288
    %3290 = vmatmul.bf16.gmra.mxu0 %v2717
    %v3291 = vpop.f32.mrf.mxu0
    %v3292 = vadd.f32 0.0, %v3291
    %v3293 = vpop.f32.mrf.mxu0
    %v3294 = vadd.f32 0.0, %v3293
    %3295 = vdwg.mxu0
    %3296 = vmatpush.bf16.msra.mxu0 %v3038
    %3297 = vmatpush.bf16.msra.mxu0 %v3037
    %3298 = vmatpush.bf16.msra.mxu0 %v3036
    %3299 = vmatpush.bf16.msra.mxu0 %v3035
    %3300 = vmatpush.bf16.msra.mxu0 %v3034
    %3301 = vmatpush.bf16.msra.mxu0 %v3033
    %3302 = vmatpush.bf16.msra.mxu0 %v3032
    %3303 = vmatpush.bf16.msra.mxu0 %v3031
    %3304 = vmatmul.bf16.gmra.mxu0 %v2304
    %v3305 = vpop.f32.mrf.mxu0
    %v3306 = vadd.f32 %v3177, %v3305
    %v3307 = vpop.f32.mrf.mxu0
    %v3308 = vadd.f32 %v3179, %v3307
    %3309 = vmatmul.bf16.gmra.mxu0 %v2322
    %v3310 = vpop.f32.mrf.mxu0
    %v3311 = vadd.f32 %v3182, %v3310
    %v3312 = vpop.f32.mrf.mxu0
    %v3313 = vadd.f32 %v3184, %v3312
    %3314 = vmatmul.bf16.gmra.mxu0 %v2340
    %v3315 = vpop.f32.mrf.mxu0
    %v3316 = vadd.f32 %v3187, %v3315
    %v3317 = vpop.f32.mrf.mxu0
    %v3318 = vadd.f32 %v3189, %v3317
    %3319 = vmatmul.bf16.gmra.mxu0 %v2358
    %v3320 = vpop.f32.mrf.mxu0
    %v3321 = vadd.f32 %v3192, %v3320
    %v3322 = vpop.f32.mrf.mxu0
    %v3323 = vadd.f32 %v3194, %v3322
    %3324 = vmatmul.bf16.gmra.mxu0 %v2376
    %v3325 = vpop.f32.mrf.mxu0
    %v3326 = vadd.f32 %v3197, %v3325
    %v3327 = vpop.f32.mrf.mxu0
    %v3328 = vadd.f32 %v3199, %v3327
    %3329 = vmatmul.bf16.gmra.mxu0 %v2394
    %v3330 = vpop.f32.mrf.mxu0
    %v3331 = vadd.f32 %v3202, %v3330
    %v3332 = vpop.f32.mrf.mxu0
    %v3333 = vadd.f32 %v3204, %v3332
    %3334 = vmatmul.bf16.gmra.mxu0 %v2412
    %v3335 = vpop.f32.mrf.mxu0
    %v3336 = vadd.f32 %v3207, %v3335
    %v3337 = vpop.f32.mrf.mxu0
    %v3338 = vadd.f32 %v3209, %v3337
    %3339 = vmatmul.bf16.gmra.mxu0 %v2430
    %v3340 = vpop.f32.mrf.mxu0
    %v3341 = vadd.f32 %v3212, %v3340
    %v3342 = vpop.f32.mrf.mxu0
    %v3343 = vadd.f32 %v3214, %v3342
    %3344 = vmatmul.bf16.gmra.mxu0 %v2448
    %v3345 = vpop.f32.mrf.mxu0
    %v3346 = vadd.f32 %v3217, %v3345
    %v3347 = vpop.f32.mrf.mxu0
    %v3348 = vadd.f32 %v3219, %v3347
    %3349 = vmatmul.bf16.gmra.mxu0 %v2466
    %v3350 = vpop.f32.mrf.mxu0
    %v3351 = vadd.f32 %v3222, %v3350
    %v3352 = vpop.f32.mrf.mxu0
    %v3353 = vadd.f32 %v3224, %v3352
    %3354 = vmatmul.bf16.gmra.mxu0 %v2484
    %v3355 = vpop.f32.mrf.mxu0
    %v3356 = vadd.f32 %v3227, %v3355
    %v3357 = vpop.f32.mrf.mxu0
    %v3358 = vadd.f32 %v3229, %v3357
    %3359 = vmatmul.bf16.gmra.mxu0 %v2502
    %v3360 = vpop.f32.mrf.mxu0
    %v3361 = vadd.f32 %v3232, %v3360
    %v3362 = vpop.f32.mrf.mxu0
    %v3363 = vadd.f32 %v3234, %v3362
    %3364 = vmatmul.bf16.gmra.mxu0 %v2520
    %v3365 = vpop.f32.mrf.mxu0
    %v3366 = vadd.f32 %v3237, %v3365
    %v3367 = vpop.f32.mrf.mxu0
    %v3368 = vadd.f32 %v3239, %v3367
    %3369 = vmatmul.bf16.gmra.mxu0 %v2538
    %v3370 = vpop.f32.mrf.mxu0
    %v3371 = vadd.f32 %v3242, %v3370
    %v3372 = vpop.f32.mrf.mxu0
    %v3373 = vadd.f32 %v3244, %v3372
    %3374 = vmatmul.bf16.gmra.mxu0 %v2556
    %v3375 = vpop.f32.mrf.mxu0
    %v3376 = vadd.f32 %v3247, %v3375
    %v3377 = vpop.f32.mrf.mxu0
    %v3378 = vadd.f32 %v3249, %v3377
    %3379 = vmatmul.bf16.gmra.mxu0 %v2574
    %v3380 = vpop.f32.mrf.mxu0
    %v3381 = vadd.f32 %v3252, %v3380
    %v3382 = vpop.f32.mrf.mxu0
    %v3383 = vadd.f32 %v3254, %v3382
    %3384 = vmatmul.bf16.gmra.mxu0 %v2592
    %v3385 = vpop.f32.mrf.mxu0
    %v3386 = vadd.f32 %v3257, %v3385
    %v3387 = vpop.f32.mrf.mxu0
    %v3388 = vadd.f32 %v3259, %v3387
    %3389 = vmatmul.bf16.gmra.mxu0 %v2610
    %v3390 = vpop.f32.mrf.mxu0
    %v3391 = vadd.f32 %v3262, %v3390
    %v3392 = vpop.f32.mrf.mxu0
    %v3393 = vadd.f32 %v3264, %v3392
    %3394 = vmatmul.bf16.gmra.mxu0 %v2628
    %v3395 = vpop.f32.mrf.mxu0
    %v3396 = vadd.f32 %v3267, %v3395
    %v3397 = vpop.f32.mrf.mxu0
    %v3398 = vadd.f32 %v3269, %v3397
    %3399 = vmatmul.bf16.gmra.mxu0 %v2646
    %v3400 = vpop.f32.mrf.mxu0
    %v3401 = vadd.f32 %v3272, %v3400
    %v3402 = vpop.f32.mrf.mxu0
    %v3403 = vadd.f32 %v3274, %v3402
    %3404 = vmatmul.bf16.gmra.mxu0 %v2664
    %v3405 = vpop.f32.mrf.mxu0
    %v3406 = vadd.f32 %v3277, %v3405
    %v3407 = vpop.f32.mrf.mxu0
    %v3408 = vadd.f32 %v3279, %v3407
    %3409 = vmatmul.bf16.gmra.mxu0 %v2682
    %v3410 = vpop.f32.mrf.mxu0
    %v3411 = vadd.f32 %v3282, %v3410
    %v3412 = vpop.f32.mrf.mxu0
    %v3413 = vadd.f32 %v3284, %v3412
    %3414 = vmatmul.bf16.gmra.mxu0 %v2700
    %v3415 = vpop.f32.mrf.mxu0
    %v3416 = vadd.f32 %v3287, %v3415
    %v3417 = vpop.f32.mrf.mxu0
    %v3418 = vadd.f32 %v3289, %v3417
    %3419 = vmatmul.bf16.gmra.mxu0 %v2718
    %v3420 = vpop.f32.mrf.mxu0
    %v3421 = vadd.f32 %v3292, %v3420
    %v3422 = vpop.f32.mrf.mxu0
    %v3423 = vadd.f32 %v3294, %v3422
    %3424 = vdwg.mxu0
    %3425 = vmatpush.bf16.msra.mxu0 %v3046
    %3426 = vmatpush.bf16.msra.mxu0 %v3045
    %3427 = vmatpush.bf16.msra.mxu0 %v3044
    %3428 = vmatpush.bf16.msra.mxu0 %v3043
    %3429 = vmatpush.bf16.msra.mxu0 %v3042
    %3430 = vmatpush.bf16.msra.mxu0 %v3041
    %3431 = vmatpush.bf16.msra.mxu0 %v3040
    %3432 = vmatpush.bf16.msra.mxu0 %v3039
    %3433 = vmatmul.bf16.gmra.mxu0 %v2305
    %v3434 = vpop.f32.mrf.mxu0
    %v3435 = vadd.f32 %v3306, %v3434
    %v3436 = vpop.f32.mrf.mxu0
    %v3437 = vadd.f32 %v3308, %v3436
    %3438 = vmatmul.bf16.gmra.mxu0 %v2323
    %v3439 = vpop.f32.mrf.mxu0
    %v3440 = vadd.f32 %v3311, %v3439
    %v3441 = vpop.f32.mrf.mxu0
    %v3442 = vadd.f32 %v3313, %v3441
    %3443 = vmatmul.bf16.gmra.mxu0 %v2341
    %v3444 = vpop.f32.mrf.mxu0
    %v3445 = vadd.f32 %v3316, %v3444
    %v3446 = vpop.f32.mrf.mxu0
    %v3447 = vadd.f32 %v3318, %v3446
    %3448 = vmatmul.bf16.gmra.mxu0 %v2359
    %v3449 = vpop.f32.mrf.mxu0
    %v3450 = vadd.f32 %v3321, %v3449
    %v3451 = vpop.f32.mrf.mxu0
    %v3452 = vadd.f32 %v3323, %v3451
    %3453 = vmatmul.bf16.gmra.mxu0 %v2377
    %v3454 = vpop.f32.mrf.mxu0
    %v3455 = vadd.f32 %v3326, %v3454
    %v3456 = vpop.f32.mrf.mxu0
    %v3457 = vadd.f32 %v3328, %v3456
    %3458 = vmatmul.bf16.gmra.mxu0 %v2395
    %v3459 = vpop.f32.mrf.mxu0
    %v3460 = vadd.f32 %v3331, %v3459
    %v3461 = vpop.f32.mrf.mxu0
    %v3462 = vadd.f32 %v3333, %v3461
    %3463 = vmatmul.bf16.gmra.mxu0 %v2413
    %v3464 = vpop.f32.mrf.mxu0
    %v3465 = vadd.f32 %v3336, %v3464
    %v3466 = vpop.f32.mrf.mxu0
    %v3467 = vadd.f32 %v3338, %v3466
    %3468 = vmatmul.bf16.gmra.mxu0 %v2431
    %v3469 = vpop.f32.mrf.mxu0
    %v3470 = vadd.f32 %v3341, %v3469
    %v3471 = vpop.f32.mrf.mxu0
    %v3472 = vadd.f32 %v3343, %v3471
    %3473 = vmatmul.bf16.gmra.mxu0 %v2449
    %v3474 = vpop.f32.mrf.mxu0
    %v3475 = vadd.f32 %v3346, %v3474
    %v3476 = vpop.f32.mrf.mxu0
    %v3477 = vadd.f32 %v3348, %v3476
    %3478 = vmatmul.bf16.gmra.mxu0 %v2467
    %v3479 = vpop.f32.mrf.mxu0
    %v3480 = vadd.f32 %v3351, %v3479
    %v3481 = vpop.f32.mrf.mxu0
    %v3482 = vadd.f32 %v3353, %v3481
    %3483 = vmatmul.bf16.gmra.mxu0 %v2485
    %v3484 = vpop.f32.mrf.mxu0
    %v3485 = vadd.f32 %v3356, %v3484
    %v3486 = vpop.f32.mrf.mxu0
    %v3487 = vadd.f32 %v3358, %v3486
    %3488 = vmatmul.bf16.gmra.mxu0 %v2503
    %v3489 = vpop.f32.mrf.mxu0
    %v3490 = vadd.f32 %v3361, %v3489
    %v3491 = vpop.f32.mrf.mxu0
    %v3492 = vadd.f32 %v3363, %v3491
    %3493 = vmatmul.bf16.gmra.mxu0 %v2521
    %v3494 = vpop.f32.mrf.mxu0
    %v3495 = vadd.f32 %v3366, %v3494
    %v3496 = vpop.f32.mrf.mxu0
    %v3497 = vadd.f32 %v3368, %v3496
    %3498 = vmatmul.bf16.gmra.mxu0 %v2539
    %v3499 = vpop.f32.mrf.mxu0
    %v3500 = vadd.f32 %v3371, %v3499
    %v3501 = vpop.f32.mrf.mxu0
    %v3502 = vadd.f32 %v3373, %v3501
    %3503 = vmatmul.bf16.gmra.mxu0 %v2557
    %v3504 = vpop.f32.mrf.mxu0
    %v3505 = vadd.f32 %v3376, %v3504
    %v3506 = vpop.f32.mrf.mxu0
    %v3507 = vadd.f32 %v3378, %v3506
    %3508 = vmatmul.bf16.gmra.mxu0 %v2575
    %v3509 = vpop.f32.mrf.mxu0
    %v3510 = vadd.f32 %v3381, %v3509
    %v3511 = vpop.f32.mrf.mxu0
    %v3512 = vadd.f32 %v3383, %v3511
    %3513 = vmatmul.bf16.gmra.mxu0 %v2593
    %v3514 = vpop.f32.mrf.mxu0
    %v3515 = vadd.f32 %v3386, %v3514
    %v3516 = vpop.f32.mrf.mxu0
    %v3517 = vadd.f32 %v3388, %v3516
    %3518 = vmatmul.bf16.gmra.mxu0 %v2611
    %v3519 = vpop.f32.mrf.mxu0
    %v3520 = vadd.f32 %v3391, %v3519
    %v3521 = vpop.f32.mrf.mxu0
    %v3522 = vadd.f32 %v3393, %v3521
    %3523 = vmatmul.bf16.gmra.mxu0 %v2629
    %v3524 = vpop.f32.mrf.mxu0
    %v3525 = vadd.f32 %v3396, %v3524
    %v3526 = vpop.f32.mrf.mxu0
    %v3527 = vadd.f32 %v3398, %v3526
    %3528 = vmatmul.bf16.gmra.mxu0 %v2647
    %v3529 = vpop.f32.mrf.mxu0
    %v3530 = vadd.f32 %v3401, %v3529
    %v3531 = vpop.f32.mrf.mxu0
    %v3532 = vadd.f32 %v3403, %v3531
    %3533 = vmatmul.bf16.gmra.mxu0 %v2665
    %v3534 = vpop.f32.mrf.mxu0
    %v3535 = vadd.f32 %v3406, %v3534
    %v3536 = vpop.f32.mrf.mxu0
    %v3537 = vadd.f32 %v3408, %v3536
    %3538 = vmatmul.bf16.gmra.mxu0 %v2683
    %v3539 = vpop.f32.mrf.mxu0
    %v3540 = vadd.f32 %v3411, %v3539
    %v3541 = vpop.f32.mrf.mxu0
    %v3542 = vadd.f32 %v3413, %v3541
    %3543 = vmatmul.bf16.gmra.mxu0 %v2701
    %v3544 = vpop.f32.mrf.mxu0
    %v3545 = vadd.f32 %v3416, %v3544
    %v3546 = vpop.f32.mrf.mxu0
    %v3547 = vadd.f32 %v3418, %v3546
    %3548 = vmatmul.bf16.gmra.mxu0 %v2719
    %v3549 = vpop.f32.mrf.mxu0
    %v3550 = vadd.f32 %v3421, %v3549
    %v3551 = vpop.f32.mrf.mxu0
    %v3552 = vadd.f32 %v3423, %v3551
    %3553 = vdwg.mxu0
    %3554 = vmatpush.bf16.msra.mxu0 %v3054
    %3555 = vmatpush.bf16.msra.mxu0 %v3053
    %3556 = vmatpush.bf16.msra.mxu0 %v3052
    %3557 = vmatpush.bf16.msra.mxu0 %v3051
    %3558 = vmatpush.bf16.msra.mxu0 %v3050
    %3559 = vmatpush.bf16.msra.mxu0 %v3049
    %3560 = vmatpush.bf16.msra.mxu0 %v3048
    %3561 = vmatpush.bf16.msra.mxu0 %v3047
    %3562 = vmatmul.bf16.gmra.mxu0 %v2306
    %v3563 = vpop.f32.mrf.mxu0
    %v3564 = vadd.f32 %v3435, %v3563
    %v3565 = vpop.f32.mrf.mxu0
    %v3566 = vadd.f32 %v3437, %v3565
    %3567 = vmatmul.bf16.gmra.mxu0 %v2324
    %v3568 = vpop.f32.mrf.mxu0
    %v3569 = vadd.f32 %v3440, %v3568
    %v3570 = vpop.f32.mrf.mxu0
    %v3571 = vadd.f32 %v3442, %v3570
    %3572 = vmatmul.bf16.gmra.mxu0 %v2342
    %v3573 = vpop.f32.mrf.mxu0
    %v3574 = vadd.f32 %v3445, %v3573
    %v3575 = vpop.f32.mrf.mxu0
    %v3576 = vadd.f32 %v3447, %v3575
    %3577 = vmatmul.bf16.gmra.mxu0 %v2360
    %v3578 = vpop.f32.mrf.mxu0
    %v3579 = vadd.f32 %v3450, %v3578
    %v3580 = vpop.f32.mrf.mxu0
    %v3581 = vadd.f32 %v3452, %v3580
    %3582 = vmatmul.bf16.gmra.mxu0 %v2378
    %v3583 = vpop.f32.mrf.mxu0
    %v3584 = vadd.f32 %v3455, %v3583
    %v3585 = vpop.f32.mrf.mxu0
    %v3586 = vadd.f32 %v3457, %v3585
    %3587 = vmatmul.bf16.gmra.mxu0 %v2396
    %v3588 = vpop.f32.mrf.mxu0
    %v3589 = vadd.f32 %v3460, %v3588
    %v3590 = vpop.f32.mrf.mxu0
    %v3591 = vadd.f32 %v3462, %v3590
    %3592 = vmatmul.bf16.gmra.mxu0 %v2414
    %v3593 = vpop.f32.mrf.mxu0
    %v3594 = vadd.f32 %v3465, %v3593
    %v3595 = vpop.f32.mrf.mxu0
    %v3596 = vadd.f32 %v3467, %v3595
    %3597 = vmatmul.bf16.gmra.mxu0 %v2432
    %v3598 = vpop.f32.mrf.mxu0
    %v3599 = vadd.f32 %v3470, %v3598
    %v3600 = vpop.f32.mrf.mxu0
    %v3601 = vadd.f32 %v3472, %v3600
    %3602 = vmatmul.bf16.gmra.mxu0 %v2450
    %v3603 = vpop.f32.mrf.mxu0
    %v3604 = vadd.f32 %v3475, %v3603
    %v3605 = vpop.f32.mrf.mxu0
    %v3606 = vadd.f32 %v3477, %v3605
    %3607 = vmatmul.bf16.gmra.mxu0 %v2468
    %v3608 = vpop.f32.mrf.mxu0
    %v3609 = vadd.f32 %v3480, %v3608
    %v3610 = vpop.f32.mrf.mxu0
    %v3611 = vadd.f32 %v3482, %v3610
    %3612 = vmatmul.bf16.gmra.mxu0 %v2486
    %v3613 = vpop.f32.mrf.mxu0
    %v3614 = vadd.f32 %v3485, %v3613
    %v3615 = vpop.f32.mrf.mxu0
    %v3616 = vadd.f32 %v3487, %v3615
    %3617 = vmatmul.bf16.gmra.mxu0 %v2504
    %v3618 = vpop.f32.mrf.mxu0
    %v3619 = vadd.f32 %v3490, %v3618
    %v3620 = vpop.f32.mrf.mxu0
    %v3621 = vadd.f32 %v3492, %v3620
    %3622 = vmatmul.bf16.gmra.mxu0 %v2522
    %v3623 = vpop.f32.mrf.mxu0
    %v3624 = vadd.f32 %v3495, %v3623
    %v3625 = vpop.f32.mrf.mxu0
    %v3626 = vadd.f32 %v3497, %v3625
    %3627 = vmatmul.bf16.gmra.mxu0 %v2540
    %v3628 = vpop.f32.mrf.mxu0
    %v3629 = vadd.f32 %v3500, %v3628
    %v3630 = vpop.f32.mrf.mxu0
    %v3631 = vadd.f32 %v3502, %v3630
    %3632 = vmatmul.bf16.gmra.mxu0 %v2558
    %v3633 = vpop.f32.mrf.mxu0
    %v3634 = vadd.f32 %v3505, %v3633
    %v3635 = vpop.f32.mrf.mxu0
    %v3636 = vadd.f32 %v3507, %v3635
    %3637 = vmatmul.bf16.gmra.mxu0 %v2576
    %v3638 = vpop.f32.mrf.mxu0
    %v3639 = vadd.f32 %v3510, %v3638
    %v3640 = vpop.f32.mrf.mxu0
    %v3641 = vadd.f32 %v3512, %v3640
    %3642 = vmatmul.bf16.gmra.mxu0 %v2594
    %v3643 = vpop.f32.mrf.mxu0
    %v3644 = vadd.f32 %v3515, %v3643
    %v3645 = vpop.f32.mrf.mxu0
    %v3646 = vadd.f32 %v3517, %v3645
    %3647 = vmatmul.bf16.gmra.mxu0 %v2612
    %v3648 = vpop.f32.mrf.mxu0
    %v3649 = vadd.f32 %v3520, %v3648
    %v3650 = vpop.f32.mrf.mxu0
    %v3651 = vadd.f32 %v3522, %v3650
    %3652 = vmatmul.bf16.gmra.mxu0 %v2630
    %v3653 = vpop.f32.mrf.mxu0
    %v3654 = vadd.f32 %v3525, %v3653
    %v3655 = vpop.f32.mrf.mxu0
    %v3656 = vadd.f32 %v3527, %v3655
    %3657 = vmatmul.bf16.gmra.mxu0 %v2648
    %v3658 = vpop.f32.mrf.mxu0
    %v3659 = vadd.f32 %v3530, %v3658
    %v3660 = vpop.f32.mrf.mxu0
    %v3661 = vadd.f32 %v3532, %v3660
    %3662 = vmatmul.bf16.gmra.mxu0 %v2666
    %v3663 = vpop.f32.mrf.mxu0
    %v3664 = vadd.f32 %v3535, %v3663
    %v3665 = vpop.f32.mrf.mxu0
    %v3666 = vadd.f32 %v3537, %v3665
    %3667 = vmatmul.bf16.gmra.mxu0 %v2684
    %v3668 = vpop.f32.mrf.mxu0
    %v3669 = vadd.f32 %v3540, %v3668
    %v3670 = vpop.f32.mrf.mxu0
    %v3671 = vadd.f32 %v3542, %v3670
    %3672 = vmatmul.bf16.gmra.mxu0 %v2702
    %v3673 = vpop.f32.mrf.mxu0
    %v3674 = vadd.f32 %v3545, %v3673
    %v3675 = vpop.f32.mrf.mxu0
    %v3676 = vadd.f32 %v3547, %v3675
    %3677 = vmatmul.bf16.gmra.mxu0 %v2720
    %v3678 = vpop.f32.mrf.mxu0
    %v3679 = vadd.f32 %v3550, %v3678
    %v3680 = vpop.f32.mrf.mxu0
    %v3681 = vadd.f32 %v3552, %v3680
    %3682 = vdwg.mxu0
    %3683 = vmatpush.bf16.msra.mxu0 %v3062
    %3684 = vmatpush.bf16.msra.mxu0 %v3061
    %3685 = vmatpush.bf16.msra.mxu0 %v3060
    %3686 = vmatpush.bf16.msra.mxu0 %v3059
    %3687 = vmatpush.bf16.msra.mxu0 %v3058
    %3688 = vmatpush.bf16.msra.mxu0 %v3057
    %3689 = vmatpush.bf16.msra.mxu0 %v3056
    %3690 = vmatpush.bf16.msra.mxu0 %v3055
    %3691 = vmatmul.bf16.gmra.mxu0 %v2307
    %v3692 = vpop.f32.mrf.mxu0
    %v3693 = vadd.f32 %v3564, %v3692
    %v3694 = vpop.f32.mrf.mxu0
    %v3695 = vadd.f32 %v3566, %v3694
    %3696 = vmatmul.bf16.gmra.mxu0 %v2325
    %v3697 = vpop.f32.mrf.mxu0
    %v3698 = vadd.f32 %v3569, %v3697
    %v3699 = vpop.f32.mrf.mxu0
    %v3700 = vadd.f32 %v3571, %v3699
    %3701 = vmatmul.bf16.gmra.mxu0 %v2343
    %v3702 = vpop.f32.mrf.mxu0
    %v3703 = vadd.f32 %v3574, %v3702
    %v3704 = vpop.f32.mrf.mxu0
    %v3705 = vadd.f32 %v3576, %v3704
    %3706 = vmatmul.bf16.gmra.mxu0 %v2361
    %v3707 = vpop.f32.mrf.mxu0
    %v3708 = vadd.f32 %v3579, %v3707
    %v3709 = vpop.f32.mrf.mxu0
    %v3710 = vadd.f32 %v3581, %v3709
    %3711 = vmatmul.bf16.gmra.mxu0 %v2379
    %v3712 = vpop.f32.mrf.mxu0
    %v3713 = vadd.f32 %v3584, %v3712
    %v3714 = vpop.f32.mrf.mxu0
    %v3715 = vadd.f32 %v3586, %v3714
    %3716 = vmatmul.bf16.gmra.mxu0 %v2397
    %v3717 = vpop.f32.mrf.mxu0
    %v3718 = vadd.f32 %v3589, %v3717
    %v3719 = vpop.f32.mrf.mxu0
    %v3720 = vadd.f32 %v3591, %v3719
    %3721 = vmatmul.bf16.gmra.mxu0 %v2415
    %v3722 = vpop.f32.mrf.mxu0
    %v3723 = vadd.f32 %v3594, %v3722
    %v3724 = vpop.f32.mrf.mxu0
    %v3725 = vadd.f32 %v3596, %v3724
    %3726 = vmatmul.bf16.gmra.mxu0 %v2433
    %v3727 = vpop.f32.mrf.mxu0
    %v3728 = vadd.f32 %v3599, %v3727
    %v3729 = vpop.f32.mrf.mxu0
    %v3730 = vadd.f32 %v3601, %v3729
    %3731 = vmatmul.bf16.gmra.mxu0 %v2451
    %v3732 = vpop.f32.mrf.mxu0
    %v3733 = vadd.f32 %v3604, %v3732
    %v3734 = vpop.f32.mrf.mxu0
    %v3735 = vadd.f32 %v3606, %v3734
    %3736 = vmatmul.bf16.gmra.mxu0 %v2469
    %v3737 = vpop.f32.mrf.mxu0
    %v3738 = vadd.f32 %v3609, %v3737
    %v3739 = vpop.f32.mrf.mxu0
    %v3740 = vadd.f32 %v3611, %v3739
    %3741 = vmatmul.bf16.gmra.mxu0 %v2487
    %v3742 = vpop.f32.mrf.mxu0
    %v3743 = vadd.f32 %v3614, %v3742
    %v3744 = vpop.f32.mrf.mxu0
    %v3745 = vadd.f32 %v3616, %v3744
    %3746 = vmatmul.bf16.gmra.mxu0 %v2505
    %v3747 = vpop.f32.mrf.mxu0
    %v3748 = vadd.f32 %v3619, %v3747
    %v3749 = vpop.f32.mrf.mxu0
    %v3750 = vadd.f32 %v3621, %v3749
    %3751 = vmatmul.bf16.gmra.mxu0 %v2523
    %v3752 = vpop.f32.mrf.mxu0
    %v3753 = vadd.f32 %v3624, %v3752
    %v3754 = vpop.f32.mrf.mxu0
    %v3755 = vadd.f32 %v3626, %v3754
    %3756 = vmatmul.bf16.gmra.mxu0 %v2541
    %v3757 = vpop.f32.mrf.mxu0
    %v3758 = vadd.f32 %v3629, %v3757
    %v3759 = vpop.f32.mrf.mxu0
    %v3760 = vadd.f32 %v3631, %v3759
    %3761 = vmatmul.bf16.gmra.mxu0 %v2559
    %v3762 = vpop.f32.mrf.mxu0
    %v3763 = vadd.f32 %v3634, %v3762
    %v3764 = vpop.f32.mrf.mxu0
    %v3765 = vadd.f32 %v3636, %v3764
    %3766 = vmatmul.bf16.gmra.mxu0 %v2577
    %v3767 = vpop.f32.mrf.mxu0
    %v3768 = vadd.f32 %v3639, %v3767
    %v3769 = vpop.f32.mrf.mxu0
    %v3770 = vadd.f32 %v3641, %v3769
    %3771 = vmatmul.bf16.gmra.mxu0 %v2595
    %v3772 = vpop.f32.mrf.mxu0
    %v3773 = vadd.f32 %v3644, %v3772
    %v3774 = vpop.f32.mrf.mxu0
    %v3775 = vadd.f32 %v3646, %v3774
    %3776 = vmatmul.bf16.gmra.mxu0 %v2613
    %v3777 = vpop.f32.mrf.mxu0
    %v3778 = vadd.f32 %v3649, %v3777
    %v3779 = vpop.f32.mrf.mxu0
    %v3780 = vadd.f32 %v3651, %v3779
    %3781 = vmatmul.bf16.gmra.mxu0 %v2631
    %v3782 = vpop.f32.mrf.mxu0
    %v3783 = vadd.f32 %v3654, %v3782
    %v3784 = vpop.f32.mrf.mxu0
    %v3785 = vadd.f32 %v3656, %v3784
    %3786 = vmatmul.bf16.gmra.mxu0 %v2649
    %v3787 = vpop.f32.mrf.mxu0
    %v3788 = vadd.f32 %v3659, %v3787
    %v3789 = vpop.f32.mrf.mxu0
    %v3790 = vadd.f32 %v3661, %v3789
    %3791 = vmatmul.bf16.gmra.mxu0 %v2667
    %v3792 = vpop.f32.mrf.mxu0
    %v3793 = vadd.f32 %v3664, %v3792
    %v3794 = vpop.f32.mrf.mxu0
    %v3795 = vadd.f32 %v3666, %v3794
    %3796 = vmatmul.bf16.gmra.mxu0 %v2685
    %v3797 = vpop.f32.mrf.mxu0
    %v3798 = vadd.f32 %v3669, %v3797
    %v3799 = vpop.f32.mrf.mxu0
    %v3800 = vadd.f32 %v3671, %v3799
    %3801 = vmatmul.bf16.gmra.mxu0 %v2703
    %v3802 = vpop.f32.mrf.mxu0
    %v3803 = vadd.f32 %v3674, %v3802
    %v3804 = vpop.f32.mrf.mxu0
    %v3805 = vadd.f32 %v3676, %v3804
    %3806 = vmatmul.bf16.gmra.mxu0 %v2721
    %v3807 = vpop.f32.mrf.mxu0
    %v3808 = vadd.f32 %v3679, %v3807
    %v3809 = vpop.f32.mrf.mxu0
    %v3810 = vadd.f32 %v3681, %v3809
    %3811 = vdwg.mxu0
    %3812 = vmatpush.bf16.msra.mxu0 %v3070
    %3813 = vmatpush.bf16.msra.mxu0 %v3069
    %3814 = vmatpush.bf16.msra.mxu0 %v3068
    %3815 = vmatpush.bf16.msra.mxu0 %v3067
    %3816 = vmatpush.bf16.msra.mxu0 %v3066
    %3817 = vmatpush.bf16.msra.mxu0 %v3065
    %3818 = vmatpush.bf16.msra.mxu0 %v3064
    %3819 = vmatpush.bf16.msra.mxu0 %v3063
    %3820 = vmatmul.bf16.gmra.mxu0 %v2308
    %v3821 = vpop.f32.mrf.mxu0
    %v3822 = vadd.f32 %v3693, %v3821
    %v3823 = vpop.f32.mrf.mxu0
    %v3824 = vadd.f32 %v3695, %v3823
    %3825 = vmatmul.bf16.gmra.mxu0 %v2326
    %v3826 = vpop.f32.mrf.mxu0
    %v3827 = vadd.f32 %v3698, %v3826
    %v3828 = vpop.f32.mrf.mxu0
    %v3829 = vadd.f32 %v3700, %v3828
    %3830 = vmatmul.bf16.gmra.mxu0 %v2344
    %v3831 = vpop.f32.mrf.mxu0
    %v3832 = vadd.f32 %v3703, %v3831
    %v3833 = vpop.f32.mrf.mxu0
    %v3834 = vadd.f32 %v3705, %v3833
    %3835 = vmatmul.bf16.gmra.mxu0 %v2362
    %v3836 = vpop.f32.mrf.mxu0
    %v3837 = vadd.f32 %v3708, %v3836
    %v3838 = vpop.f32.mrf.mxu0
    %v3839 = vadd.f32 %v3710, %v3838
    %3840 = vmatmul.bf16.gmra.mxu0 %v2380
    %v3841 = vpop.f32.mrf.mxu0
    %v3842 = vadd.f32 %v3713, %v3841
    %v3843 = vpop.f32.mrf.mxu0
    %v3844 = vadd.f32 %v3715, %v3843
    %3845 = vmatmul.bf16.gmra.mxu0 %v2398
    %v3846 = vpop.f32.mrf.mxu0
    %v3847 = vadd.f32 %v3718, %v3846
    %v3848 = vpop.f32.mrf.mxu0
    %v3849 = vadd.f32 %v3720, %v3848
    %3850 = vmatmul.bf16.gmra.mxu0 %v2416
    %v3851 = vpop.f32.mrf.mxu0
    %v3852 = vadd.f32 %v3723, %v3851
    %v3853 = vpop.f32.mrf.mxu0
    %v3854 = vadd.f32 %v3725, %v3853
    %3855 = vmatmul.bf16.gmra.mxu0 %v2434
    %v3856 = vpop.f32.mrf.mxu0
    %v3857 = vadd.f32 %v3728, %v3856
    %v3858 = vpop.f32.mrf.mxu0
    %v3859 = vadd.f32 %v3730, %v3858
    %3860 = vmatmul.bf16.gmra.mxu0 %v2452
    %v3861 = vpop.f32.mrf.mxu0
    %v3862 = vadd.f32 %v3733, %v3861
    %v3863 = vpop.f32.mrf.mxu0
    %v3864 = vadd.f32 %v3735, %v3863
    %3865 = vmatmul.bf16.gmra.mxu0 %v2470
    %v3866 = vpop.f32.mrf.mxu0
    %v3867 = vadd.f32 %v3738, %v3866
    %v3868 = vpop.f32.mrf.mxu0
    %v3869 = vadd.f32 %v3740, %v3868
    %3870 = vmatmul.bf16.gmra.mxu0 %v2488
    %v3871 = vpop.f32.mrf.mxu0
    %v3872 = vadd.f32 %v3743, %v3871
    %v3873 = vpop.f32.mrf.mxu0
    %v3874 = vadd.f32 %v3745, %v3873
    %3875 = vmatmul.bf16.gmra.mxu0 %v2506
    %v3876 = vpop.f32.mrf.mxu0
    %v3877 = vadd.f32 %v3748, %v3876
    %v3878 = vpop.f32.mrf.mxu0
    %v3879 = vadd.f32 %v3750, %v3878
    %3880 = vmatmul.bf16.gmra.mxu0 %v2524
    %v3881 = vpop.f32.mrf.mxu0
    %v3882 = vadd.f32 %v3753, %v3881
    %v3883 = vpop.f32.mrf.mxu0
    %v3884 = vadd.f32 %v3755, %v3883
    %3885 = vmatmul.bf16.gmra.mxu0 %v2542
    %v3886 = vpop.f32.mrf.mxu0
    %v3887 = vadd.f32 %v3758, %v3886
    %v3888 = vpop.f32.mrf.mxu0
    %v3889 = vadd.f32 %v3760, %v3888
    %3890 = vmatmul.bf16.gmra.mxu0 %v2560
    %v3891 = vpop.f32.mrf.mxu0
    %v3892 = vadd.f32 %v3763, %v3891
    %v3893 = vpop.f32.mrf.mxu0
    %v3894 = vadd.f32 %v3765, %v3893
    %3895 = vmatmul.bf16.gmra.mxu0 %v2578
    %v3896 = vpop.f32.mrf.mxu0
    %v3897 = vadd.f32 %v3768, %v3896
    %v3898 = vpop.f32.mrf.mxu0
    %v3899 = vadd.f32 %v3770, %v3898
    %3900 = vmatmul.bf16.gmra.mxu0 %v2596
    %v3901 = vpop.f32.mrf.mxu0
    %v3902 = vadd.f32 %v3773, %v3901
    %v3903 = vpop.f32.mrf.mxu0
    %v3904 = vadd.f32 %v3775, %v3903
    %3905 = vmatmul.bf16.gmra.mxu0 %v2614
    %v3906 = vpop.f32.mrf.mxu0
    %v3907 = vadd.f32 %v3778, %v3906
    %v3908 = vpop.f32.mrf.mxu0
    %v3909 = vadd.f32 %v3780, %v3908
    %3910 = vmatmul.bf16.gmra.mxu0 %v2632
    %v3911 = vpop.f32.mrf.mxu0
    %v3912 = vadd.f32 %v3783, %v3911
    %v3913 = vpop.f32.mrf.mxu0
    %v3914 = vadd.f32 %v3785, %v3913
    %3915 = vmatmul.bf16.gmra.mxu0 %v2650
    %v3916 = vpop.f32.mrf.mxu0
    %v3917 = vadd.f32 %v3788, %v3916
    %v3918 = vpop.f32.mrf.mxu0
    %v3919 = vadd.f32 %v3790, %v3918
    %3920 = vmatmul.bf16.gmra.mxu0 %v2668
    %v3921 = vpop.f32.mrf.mxu0
    %v3922 = vadd.f32 %v3793, %v3921
    %v3923 = vpop.f32.mrf.mxu0
    %v3924 = vadd.f32 %v3795, %v3923
    %3925 = vmatmul.bf16.gmra.mxu0 %v2686
    %v3926 = vpop.f32.mrf.mxu0
    %v3927 = vadd.f32 %v3798, %v3926
    %v3928 = vpop.f32.mrf.mxu0
    %v3929 = vadd.f32 %v3800, %v3928
    %3930 = vmatmul.bf16.gmra.mxu0 %v2704
    %v3931 = vpop.f32.mrf.mxu0
    %v3932 = vadd.f32 %v3803, %v3931
    %v3933 = vpop.f32.mrf.mxu0
    %v3934 = vadd.f32 %v3805, %v3933
    %3935 = vmatmul.bf16.gmra.mxu0 %v2722
    %v3936 = vpop.f32.mrf.mxu0
    %v3937 = vadd.f32 %v3808, %v3936
    %v3938 = vpop.f32.mrf.mxu0
    %v3939 = vadd.f32 %v3810, %v3938
    %3940 = vdwg.mxu0
    %3941 = vmatpush.bf16.msra.mxu0 %v3078
    %3942 = vmatpush.bf16.msra.mxu0 %v3077
    %3943 = vmatpush.bf16.msra.mxu0 %v3076
    %3944 = vmatpush.bf16.msra.mxu0 %v3075
    %3945 = vmatpush.bf16.msra.mxu0 %v3074
    %3946 = vmatpush.bf16.msra.mxu0 %v3073
    %3947 = vmatpush.bf16.msra.mxu0 %v3072
    %3948 = vmatpush.bf16.msra.mxu0 %v3071
    %3949 = vmatmul.bf16.gmra.mxu0 %v2309
    %v3950 = vpop.f32.mrf.mxu0
    %v3951 = vadd.f32 %v3822, %v3950
    %v3952 = vpop.f32.mrf.mxu0
    %v3953 = vadd.f32 %v3824, %v3952
    %3954 = vmatmul.bf16.gmra.mxu0 %v2327
    %v3955 = vpop.f32.mrf.mxu0
    %v3956 = vadd.f32 %v3827, %v3955
    %v3957 = vpop.f32.mrf.mxu0
    %v3958 = vadd.f32 %v3829, %v3957
    %3959 = vmatmul.bf16.gmra.mxu0 %v2345
    %v3960 = vpop.f32.mrf.mxu0
    %v3961 = vadd.f32 %v3832, %v3960
    %v3962 = vpop.f32.mrf.mxu0
    %v3963 = vadd.f32 %v3834, %v3962
    %3964 = vmatmul.bf16.gmra.mxu0 %v2363
    %v3965 = vpop.f32.mrf.mxu0
    %v3966 = vadd.f32 %v3837, %v3965
    %v3967 = vpop.f32.mrf.mxu0
    %v3968 = vadd.f32 %v3839, %v3967
    %3969 = vmatmul.bf16.gmra.mxu0 %v2381
    %v3970 = vpop.f32.mrf.mxu0
    %v3971 = vadd.f32 %v3842, %v3970
    %v3972 = vpop.f32.mrf.mxu0
    %v3973 = vadd.f32 %v3844, %v3972
    %3974 = vmatmul.bf16.gmra.mxu0 %v2399
    %v3975 = vpop.f32.mrf.mxu0
    %v3976 = vadd.f32 %v3847, %v3975
    %v3977 = vpop.f32.mrf.mxu0
    %v3978 = vadd.f32 %v3849, %v3977
    %3979 = vmatmul.bf16.gmra.mxu0 %v2417
    %v3980 = vpop.f32.mrf.mxu0
    %v3981 = vadd.f32 %v3852, %v3980
    %v3982 = vpop.f32.mrf.mxu0
    %v3983 = vadd.f32 %v3854, %v3982
    %3984 = vmatmul.bf16.gmra.mxu0 %v2435
    %v3985 = vpop.f32.mrf.mxu0
    %v3986 = vadd.f32 %v3857, %v3985
    %v3987 = vpop.f32.mrf.mxu0
    %v3988 = vadd.f32 %v3859, %v3987
    %3989 = vmatmul.bf16.gmra.mxu0 %v2453
    %v3990 = vpop.f32.mrf.mxu0
    %v3991 = vadd.f32 %v3862, %v3990
    %v3992 = vpop.f32.mrf.mxu0
    %v3993 = vadd.f32 %v3864, %v3992
    %3994 = vmatmul.bf16.gmra.mxu0 %v2471
    %v3995 = vpop.f32.mrf.mxu0
    %v3996 = vadd.f32 %v3867, %v3995
    %v3997 = vpop.f32.mrf.mxu0
    %v3998 = vadd.f32 %v3869, %v3997
    %3999 = vmatmul.bf16.gmra.mxu0 %v2489
    %v4000 = vpop.f32.mrf.mxu0
    %v4001 = vadd.f32 %v3872, %v4000
    %v4002 = vpop.f32.mrf.mxu0
    %v4003 = vadd.f32 %v3874, %v4002
    %4004 = vmatmul.bf16.gmra.mxu0 %v2507
    %v4005 = vpop.f32.mrf.mxu0
    %v4006 = vadd.f32 %v3877, %v4005
    %v4007 = vpop.f32.mrf.mxu0
    %v4008 = vadd.f32 %v3879, %v4007
    %4009 = vmatmul.bf16.gmra.mxu0 %v2525
    %v4010 = vpop.f32.mrf.mxu0
    %v4011 = vadd.f32 %v3882, %v4010
    %v4012 = vpop.f32.mrf.mxu0
    %v4013 = vadd.f32 %v3884, %v4012
    %4014 = vmatmul.bf16.gmra.mxu0 %v2543
    %v4015 = vpop.f32.mrf.mxu0
    %v4016 = vadd.f32 %v3887, %v4015
    %v4017 = vpop.f32.mrf.mxu0
    %v4018 = vadd.f32 %v3889, %v4017
    %4019 = vmatmul.bf16.gmra.mxu0 %v2561
    %v4020 = vpop.f32.mrf.mxu0
    %v4021 = vadd.f32 %v3892, %v4020
    %v4022 = vpop.f32.mrf.mxu0
    %v4023 = vadd.f32 %v3894, %v4022
    %4024 = vmatmul.bf16.gmra.mxu0 %v2579
    %v4025 = vpop.f32.mrf.mxu0
    %v4026 = vadd.f32 %v3897, %v4025
    %v4027 = vpop.f32.mrf.mxu0
    %v4028 = vadd.f32 %v3899, %v4027
    %4029 = vmatmul.bf16.gmra.mxu0 %v2597
    %v4030 = vpop.f32.mrf.mxu0
    %v4031 = vadd.f32 %v3902, %v4030
    %v4032 = vpop.f32.mrf.mxu0
    %v4033 = vadd.f32 %v3904, %v4032
    %4034 = vmatmul.bf16.gmra.mxu0 %v2615
    %v4035 = vpop.f32.mrf.mxu0
    %v4036 = vadd.f32 %v3907, %v4035
    %v4037 = vpop.f32.mrf.mxu0
    %v4038 = vadd.f32 %v3909, %v4037
    %4039 = vmatmul.bf16.gmra.mxu0 %v2633
    %v4040 = vpop.f32.mrf.mxu0
    %v4041 = vadd.f32 %v3912, %v4040
    %v4042 = vpop.f32.mrf.mxu0
    %v4043 = vadd.f32 %v3914, %v4042
    %4044 = vmatmul.bf16.gmra.mxu0 %v2651
    %v4045 = vpop.f32.mrf.mxu0
    %v4046 = vadd.f32 %v3917, %v4045
    %v4047 = vpop.f32.mrf.mxu0
    %v4048 = vadd.f32 %v3919, %v4047
    %4049 = vmatmul.bf16.gmra.mxu0 %v2669
    %v4050 = vpop.f32.mrf.mxu0
    %v4051 = vadd.f32 %v3922, %v4050
    %v4052 = vpop.f32.mrf.mxu0
    %v4053 = vadd.f32 %v3924, %v4052
    %4054 = vmatmul.bf16.gmra.mxu0 %v2687
    %v4055 = vpop.f32.mrf.mxu0
    %v4056 = vadd.f32 %v3927, %v4055
    %v4057 = vpop.f32.mrf.mxu0
    %v4058 = vadd.f32 %v3929, %v4057
    %4059 = vmatmul.bf16.gmra.mxu0 %v2705
    %v4060 = vpop.f32.mrf.mxu0
    %v4061 = vadd.f32 %v3932, %v4060
    %v4062 = vpop.f32.mrf.mxu0
    %v4063 = vadd.f32 %v3934, %v4062
    %4064 = vmatmul.bf16.gmra.mxu0 %v2723
    %v4065 = vpop.f32.mrf.mxu0
    %v4066 = vadd.f32 %v3937, %v4065
    %v4067 = vpop.f32.mrf.mxu0
    %v4068 = vadd.f32 %v3939, %v4067
    %4069 = vdwg.mxu0
    %4070 = vmatpush.bf16.msra.mxu0 %v3086
    %4071 = vmatpush.bf16.msra.mxu0 %v3085
    %4072 = vmatpush.bf16.msra.mxu0 %v3084
    %4073 = vmatpush.bf16.msra.mxu0 %v3083
    %4074 = vmatpush.bf16.msra.mxu0 %v3082
    %4075 = vmatpush.bf16.msra.mxu0 %v3081
    %4076 = vmatpush.bf16.msra.mxu0 %v3080
    %4077 = vmatpush.bf16.msra.mxu0 %v3079
    %4078 = vmatmul.bf16.gmra.mxu0 %v2310
    %v4079 = vpop.f32.mrf.mxu0
    %v4080 = vadd.f32 %v3951, %v4079
    %v4081 = vpop.f32.mrf.mxu0
    %v4082 = vadd.f32 %v3953, %v4081
    %4083 = vmatmul.bf16.gmra.mxu0 %v2328
    %v4084 = vpop.f32.mrf.mxu0
    %v4085 = vadd.f32 %v3956, %v4084
    %v4086 = vpop.f32.mrf.mxu0
    %v4087 = vadd.f32 %v3958, %v4086
    %4088 = vmatmul.bf16.gmra.mxu0 %v2346
    %v4089 = vpop.f32.mrf.mxu0
    %v4090 = vadd.f32 %v3961, %v4089
    %v4091 = vpop.f32.mrf.mxu0
    %v4092 = vadd.f32 %v3963, %v4091
    %4093 = vmatmul.bf16.gmra.mxu0 %v2364
    %v4094 = vpop.f32.mrf.mxu0
    %v4095 = vadd.f32 %v3966, %v4094
    %v4096 = vpop.f32.mrf.mxu0
    %v4097 = vadd.f32 %v3968, %v4096
    %4098 = vmatmul.bf16.gmra.mxu0 %v2382
    %v4099 = vpop.f32.mrf.mxu0
    %v4100 = vadd.f32 %v3971, %v4099
    %v4101 = vpop.f32.mrf.mxu0
    %v4102 = vadd.f32 %v3973, %v4101
    %4103 = vmatmul.bf16.gmra.mxu0 %v2400
    %v4104 = vpop.f32.mrf.mxu0
    %v4105 = vadd.f32 %v3976, %v4104
    %v4106 = vpop.f32.mrf.mxu0
    %v4107 = vadd.f32 %v3978, %v4106
    %4108 = vmatmul.bf16.gmra.mxu0 %v2418
    %v4109 = vpop.f32.mrf.mxu0
    %v4110 = vadd.f32 %v3981, %v4109
    %v4111 = vpop.f32.mrf.mxu0
    %v4112 = vadd.f32 %v3983, %v4111
    %4113 = vmatmul.bf16.gmra.mxu0 %v2436
    %v4114 = vpop.f32.mrf.mxu0
    %v4115 = vadd.f32 %v3986, %v4114
    %v4116 = vpop.f32.mrf.mxu0
    %v4117 = vadd.f32 %v3988, %v4116
    %4118 = vmatmul.bf16.gmra.mxu0 %v2454
    %v4119 = vpop.f32.mrf.mxu0
    %v4120 = vadd.f32 %v3991, %v4119
    %v4121 = vpop.f32.mrf.mxu0
    %v4122 = vadd.f32 %v3993, %v4121
    %4123 = vmatmul.bf16.gmra.mxu0 %v2472
    %v4124 = vpop.f32.mrf.mxu0
    %v4125 = vadd.f32 %v3996, %v4124
    %v4126 = vpop.f32.mrf.mxu0
    %v4127 = vadd.f32 %v3998, %v4126
    %4128 = vmatmul.bf16.gmra.mxu0 %v2490
    %v4129 = vpop.f32.mrf.mxu0
    %v4130 = vadd.f32 %v4001, %v4129
    %v4131 = vpop.f32.mrf.mxu0
    %v4132 = vadd.f32 %v4003, %v4131
    %4133 = vmatmul.bf16.gmra.mxu0 %v2508
    %v4134 = vpop.f32.mrf.mxu0
    %v4135 = vadd.f32 %v4006, %v4134
    %v4136 = vpop.f32.mrf.mxu0
    %v4137 = vadd.f32 %v4008, %v4136
    %4138 = vmatmul.bf16.gmra.mxu0 %v2526
    %v4139 = vpop.f32.mrf.mxu0
    %v4140 = vadd.f32 %v4011, %v4139
    %v4141 = vpop.f32.mrf.mxu0
    %v4142 = vadd.f32 %v4013, %v4141
    %4143 = vmatmul.bf16.gmra.mxu0 %v2544
    %v4144 = vpop.f32.mrf.mxu0
    %v4145 = vadd.f32 %v4016, %v4144
    %v4146 = vpop.f32.mrf.mxu0
    %v4147 = vadd.f32 %v4018, %v4146
    %4148 = vmatmul.bf16.gmra.mxu0 %v2562
    %v4149 = vpop.f32.mrf.mxu0
    %v4150 = vadd.f32 %v4021, %v4149
    %v4151 = vpop.f32.mrf.mxu0
    %v4152 = vadd.f32 %v4023, %v4151
    %4153 = vmatmul.bf16.gmra.mxu0 %v2580
    %v4154 = vpop.f32.mrf.mxu0
    %v4155 = vadd.f32 %v4026, %v4154
    %v4156 = vpop.f32.mrf.mxu0
    %v4157 = vadd.f32 %v4028, %v4156
    %4158 = vmatmul.bf16.gmra.mxu0 %v2598
    %v4159 = vpop.f32.mrf.mxu0
    %v4160 = vadd.f32 %v4031, %v4159
    %v4161 = vpop.f32.mrf.mxu0
    %v4162 = vadd.f32 %v4033, %v4161
    %4163 = vmatmul.bf16.gmra.mxu0 %v2616
    %v4164 = vpop.f32.mrf.mxu0
    %v4165 = vadd.f32 %v4036, %v4164
    %v4166 = vpop.f32.mrf.mxu0
    %v4167 = vadd.f32 %v4038, %v4166
    %4168 = vmatmul.bf16.gmra.mxu0 %v2634
    %v4169 = vpop.f32.mrf.mxu0
    %v4170 = vadd.f32 %v4041, %v4169
    %v4171 = vpop.f32.mrf.mxu0
    %v4172 = vadd.f32 %v4043, %v4171
    %4173 = vmatmul.bf16.gmra.mxu0 %v2652
    %v4174 = vpop.f32.mrf.mxu0
    %v4175 = vadd.f32 %v4046, %v4174
    %v4176 = vpop.f32.mrf.mxu0
    %v4177 = vadd.f32 %v4048, %v4176
    %4178 = vmatmul.bf16.gmra.mxu0 %v2670
    %v4179 = vpop.f32.mrf.mxu0
    %v4180 = vadd.f32 %v4051, %v4179
    %v4181 = vpop.f32.mrf.mxu0
    %v4182 = vadd.f32 %v4053, %v4181
    %4183 = vmatmul.bf16.gmra.mxu0 %v2688
    %v4184 = vpop.f32.mrf.mxu0
    %v4185 = vadd.f32 %v4056, %v4184
    %v4186 = vpop.f32.mrf.mxu0
    %v4187 = vadd.f32 %v4058, %v4186
    %4188 = vmatmul.bf16.gmra.mxu0 %v2706
    %v4189 = vpop.f32.mrf.mxu0
    %v4190 = vadd.f32 %v4061, %v4189
    %v4191 = vpop.f32.mrf.mxu0
    %v4192 = vadd.f32 %v4063, %v4191
    %4193 = vmatmul.bf16.gmra.mxu0 %v2724
    %v4194 = vpop.f32.mrf.mxu0
    %v4195 = vadd.f32 %v4066, %v4194
    %v4196 = vpop.f32.mrf.mxu0
    %v4197 = vadd.f32 %v4068, %v4196
    %4198 = vdwg.mxu0
    %4199 = vmatpush.bf16.msra.mxu0 %v3094
    %4200 = vmatpush.bf16.msra.mxu0 %v3093
    %4201 = vmatpush.bf16.msra.mxu0 %v3092
    %4202 = vmatpush.bf16.msra.mxu0 %v3091
    %4203 = vmatpush.bf16.msra.mxu0 %v3090
    %4204 = vmatpush.bf16.msra.mxu0 %v3089
    %4205 = vmatpush.bf16.msra.mxu0 %v3088
    %4206 = vmatpush.bf16.msra.mxu0 %v3087
    %4207 = vmatmul.bf16.gmra.mxu0 %v2311
    %v4208 = vpop.f32.mrf.mxu0
    %v4209 = vadd.f32 %v4080, %v4208
    %v4210 = vpop.f32.mrf.mxu0
    %v4211 = vadd.f32 %v4082, %v4210
    %4212 = vmatmul.bf16.gmra.mxu0 %v2329
    %v4213 = vpop.f32.mrf.mxu0
    %v4214 = vadd.f32 %v4085, %v4213
    %v4215 = vpop.f32.mrf.mxu0
    %v4216 = vadd.f32 %v4087, %v4215
    %4217 = vmatmul.bf16.gmra.mxu0 %v2347
    %v4218 = vpop.f32.mrf.mxu0
    %v4219 = vadd.f32 %v4090, %v4218
    %v4220 = vpop.f32.mrf.mxu0
    %v4221 = vadd.f32 %v4092, %v4220
    %4222 = vmatmul.bf16.gmra.mxu0 %v2365
    %v4223 = vpop.f32.mrf.mxu0
    %v4224 = vadd.f32 %v4095, %v4223
    %v4225 = vpop.f32.mrf.mxu0
    %v4226 = vadd.f32 %v4097, %v4225
    %4227 = vmatmul.bf16.gmra.mxu0 %v2383
    %v4228 = vpop.f32.mrf.mxu0
    %v4229 = vadd.f32 %v4100, %v4228
    %v4230 = vpop.f32.mrf.mxu0
    %v4231 = vadd.f32 %v4102, %v4230
    %4232 = vmatmul.bf16.gmra.mxu0 %v2401
    %v4233 = vpop.f32.mrf.mxu0
    %v4234 = vadd.f32 %v4105, %v4233
    %v4235 = vpop.f32.mrf.mxu0
    %v4236 = vadd.f32 %v4107, %v4235
    %4237 = vmatmul.bf16.gmra.mxu0 %v2419
    %v4238 = vpop.f32.mrf.mxu0
    %v4239 = vadd.f32 %v4110, %v4238
    %v4240 = vpop.f32.mrf.mxu0
    %v4241 = vadd.f32 %v4112, %v4240
    %4242 = vmatmul.bf16.gmra.mxu0 %v2437
    %v4243 = vpop.f32.mrf.mxu0
    %v4244 = vadd.f32 %v4115, %v4243
    %v4245 = vpop.f32.mrf.mxu0
    %v4246 = vadd.f32 %v4117, %v4245
    %4247 = vmatmul.bf16.gmra.mxu0 %v2455
    %v4248 = vpop.f32.mrf.mxu0
    %v4249 = vadd.f32 %v4120, %v4248
    %v4250 = vpop.f32.mrf.mxu0
    %v4251 = vadd.f32 %v4122, %v4250
    %4252 = vmatmul.bf16.gmra.mxu0 %v2473
    %v4253 = vpop.f32.mrf.mxu0
    %v4254 = vadd.f32 %v4125, %v4253
    %v4255 = vpop.f32.mrf.mxu0
    %v4256 = vadd.f32 %v4127, %v4255
    %4257 = vmatmul.bf16.gmra.mxu0 %v2491
    %v4258 = vpop.f32.mrf.mxu0
    %v4259 = vadd.f32 %v4130, %v4258
    %v4260 = vpop.f32.mrf.mxu0
    %v4261 = vadd.f32 %v4132, %v4260
    %4262 = vmatmul.bf16.gmra.mxu0 %v2509
    %v4263 = vpop.f32.mrf.mxu0
    %v4264 = vadd.f32 %v4135, %v4263
    %v4265 = vpop.f32.mrf.mxu0
    %v4266 = vadd.f32 %v4137, %v4265
    %4267 = vmatmul.bf16.gmra.mxu0 %v2527
    %v4268 = vpop.f32.mrf.mxu0
    %v4269 = vadd.f32 %v4140, %v4268
    %v4270 = vpop.f32.mrf.mxu0
    %v4271 = vadd.f32 %v4142, %v4270
    %4272 = vmatmul.bf16.gmra.mxu0 %v2545
    %v4273 = vpop.f32.mrf.mxu0
    %v4274 = vadd.f32 %v4145, %v4273
    %v4275 = vpop.f32.mrf.mxu0
    %v4276 = vadd.f32 %v4147, %v4275
    %4277 = vmatmul.bf16.gmra.mxu0 %v2563
    %v4278 = vpop.f32.mrf.mxu0
    %v4279 = vadd.f32 %v4150, %v4278
    %v4280 = vpop.f32.mrf.mxu0
    %v4281 = vadd.f32 %v4152, %v4280
    %4282 = vmatmul.bf16.gmra.mxu0 %v2581
    %v4283 = vpop.f32.mrf.mxu0
    %v4284 = vadd.f32 %v4155, %v4283
    %v4285 = vpop.f32.mrf.mxu0
    %v4286 = vadd.f32 %v4157, %v4285
    %4287 = vmatmul.bf16.gmra.mxu0 %v2599
    %v4288 = vpop.f32.mrf.mxu0
    %v4289 = vadd.f32 %v4160, %v4288
    %v4290 = vpop.f32.mrf.mxu0
    %v4291 = vadd.f32 %v4162, %v4290
    %4292 = vmatmul.bf16.gmra.mxu0 %v2617
    %v4293 = vpop.f32.mrf.mxu0
    %v4294 = vadd.f32 %v4165, %v4293
    %v4295 = vpop.f32.mrf.mxu0
    %v4296 = vadd.f32 %v4167, %v4295
    %4297 = vmatmul.bf16.gmra.mxu0 %v2635
    %v4298 = vpop.f32.mrf.mxu0
    %v4299 = vadd.f32 %v4170, %v4298
    %v4300 = vpop.f32.mrf.mxu0
    %v4301 = vadd.f32 %v4172, %v4300
    %4302 = vmatmul.bf16.gmra.mxu0 %v2653
    %v4303 = vpop.f32.mrf.mxu0
    %v4304 = vadd.f32 %v4175, %v4303
    %v4305 = vpop.f32.mrf.mxu0
    %v4306 = vadd.f32 %v4177, %v4305
    %4307 = vmatmul.bf16.gmra.mxu0 %v2671
    %v4308 = vpop.f32.mrf.mxu0
    %v4309 = vadd.f32 %v4180, %v4308
    %v4310 = vpop.f32.mrf.mxu0
    %v4311 = vadd.f32 %v4182, %v4310
    %4312 = vmatmul.bf16.gmra.mxu0 %v2689
    %v4313 = vpop.f32.mrf.mxu0
    %v4314 = vadd.f32 %v4185, %v4313
    %v4315 = vpop.f32.mrf.mxu0
    %v4316 = vadd.f32 %v4187, %v4315
    %4317 = vmatmul.bf16.gmra.mxu0 %v2707
    %v4318 = vpop.f32.mrf.mxu0
    %v4319 = vadd.f32 %v4190, %v4318
    %v4320 = vpop.f32.mrf.mxu0
    %v4321 = vadd.f32 %v4192, %v4320
    %4322 = vmatmul.bf16.gmra.mxu0 %v2725
    %v4323 = vpop.f32.mrf.mxu0
    %v4324 = vadd.f32 %v4195, %v4323
    %v4325 = vpop.f32.mrf.mxu0
    %v4326 = vadd.f32 %v4197, %v4325
    %4327 = vdwg.mxu0
    %4328 = vmatpush.bf16.msra.mxu0 %v3102
    %4329 = vmatpush.bf16.msra.mxu0 %v3101
    %4330 = vmatpush.bf16.msra.mxu0 %v3100
    %4331 = vmatpush.bf16.msra.mxu0 %v3099
    %4332 = vmatpush.bf16.msra.mxu0 %v3098
    %4333 = vmatpush.bf16.msra.mxu0 %v3097
    %4334 = vmatpush.bf16.msra.mxu0 %v3096
    %4335 = vmatpush.bf16.msra.mxu0 %v3095
    %4336 = vmatmul.bf16.gmra.mxu0 %v2312
    %v4337 = vpop.f32.mrf.mxu0
    %v4338 = vadd.f32 %v4209, %v4337
    %v4339 = vpop.f32.mrf.mxu0
    %v4340 = vadd.f32 %v4211, %v4339
    %4341 = vmatmul.bf16.gmra.mxu0 %v2330
    %v4342 = vpop.f32.mrf.mxu0
    %v4343 = vadd.f32 %v4214, %v4342
    %v4344 = vpop.f32.mrf.mxu0
    %v4345 = vadd.f32 %v4216, %v4344
    %4346 = vmatmul.bf16.gmra.mxu0 %v2348
    %v4347 = vpop.f32.mrf.mxu0
    %v4348 = vadd.f32 %v4219, %v4347
    %v4349 = vpop.f32.mrf.mxu0
    %v4350 = vadd.f32 %v4221, %v4349
    %4351 = vmatmul.bf16.gmra.mxu0 %v2366
    %v4352 = vpop.f32.mrf.mxu0
    %v4353 = vadd.f32 %v4224, %v4352
    %v4354 = vpop.f32.mrf.mxu0
    %v4355 = vadd.f32 %v4226, %v4354
    %4356 = vmatmul.bf16.gmra.mxu0 %v2384
    %v4357 = vpop.f32.mrf.mxu0
    %v4358 = vadd.f32 %v4229, %v4357
    %v4359 = vpop.f32.mrf.mxu0
    %v4360 = vadd.f32 %v4231, %v4359
    %4361 = vmatmul.bf16.gmra.mxu0 %v2402
    %v4362 = vpop.f32.mrf.mxu0
    %v4363 = vadd.f32 %v4234, %v4362
    %v4364 = vpop.f32.mrf.mxu0
    %v4365 = vadd.f32 %v4236, %v4364
    %4366 = vmatmul.bf16.gmra.mxu0 %v2420
    %v4367 = vpop.f32.mrf.mxu0
    %v4368 = vadd.f32 %v4239, %v4367
    %v4369 = vpop.f32.mrf.mxu0
    %v4370 = vadd.f32 %v4241, %v4369
    %4371 = vmatmul.bf16.gmra.mxu0 %v2438
    %v4372 = vpop.f32.mrf.mxu0
    %v4373 = vadd.f32 %v4244, %v4372
    %v4374 = vpop.f32.mrf.mxu0
    %v4375 = vadd.f32 %v4246, %v4374
    %4376 = vmatmul.bf16.gmra.mxu0 %v2456
    %v4377 = vpop.f32.mrf.mxu0
    %v4378 = vadd.f32 %v4249, %v4377
    %v4379 = vpop.f32.mrf.mxu0
    %v4380 = vadd.f32 %v4251, %v4379
    %4381 = vmatmul.bf16.gmra.mxu0 %v2474
    %v4382 = vpop.f32.mrf.mxu0
    %v4383 = vadd.f32 %v4254, %v4382
    %v4384 = vpop.f32.mrf.mxu0
    %v4385 = vadd.f32 %v4256, %v4384
    %4386 = vmatmul.bf16.gmra.mxu0 %v2492
    %v4387 = vpop.f32.mrf.mxu0
    %v4388 = vadd.f32 %v4259, %v4387
    %v4389 = vpop.f32.mrf.mxu0
    %v4390 = vadd.f32 %v4261, %v4389
    %4391 = vmatmul.bf16.gmra.mxu0 %v2510
    %v4392 = vpop.f32.mrf.mxu0
    %v4393 = vadd.f32 %v4264, %v4392
    %v4394 = vpop.f32.mrf.mxu0
    %v4395 = vadd.f32 %v4266, %v4394
    %4396 = vmatmul.bf16.gmra.mxu0 %v2528
    %v4397 = vpop.f32.mrf.mxu0
    %v4398 = vadd.f32 %v4269, %v4397
    %v4399 = vpop.f32.mrf.mxu0
    %v4400 = vadd.f32 %v4271, %v4399
    %4401 = vmatmul.bf16.gmra.mxu0 %v2546
    %v4402 = vpop.f32.mrf.mxu0
    %v4403 = vadd.f32 %v4274, %v4402
    %v4404 = vpop.f32.mrf.mxu0
    %v4405 = vadd.f32 %v4276, %v4404
    %4406 = vmatmul.bf16.gmra.mxu0 %v2564
    %v4407 = vpop.f32.mrf.mxu0
    %v4408 = vadd.f32 %v4279, %v4407
    %v4409 = vpop.f32.mrf.mxu0
    %v4410 = vadd.f32 %v4281, %v4409
    %4411 = vmatmul.bf16.gmra.mxu0 %v2582
    %v4412 = vpop.f32.mrf.mxu0
    %v4413 = vadd.f32 %v4284, %v4412
    %v4414 = vpop.f32.mrf.mxu0
    %v4415 = vadd.f32 %v4286, %v4414
    %4416 = vmatmul.bf16.gmra.mxu0 %v2600
    %v4417 = vpop.f32.mrf.mxu0
    %v4418 = vadd.f32 %v4289, %v4417
    %v4419 = vpop.f32.mrf.mxu0
    %v4420 = vadd.f32 %v4291, %v4419
    %4421 = vmatmul.bf16.gmra.mxu0 %v2618
    %v4422 = vpop.f32.mrf.mxu0
    %v4423 = vadd.f32 %v4294, %v4422
    %v4424 = vpop.f32.mrf.mxu0
    %v4425 = vadd.f32 %v4296, %v4424
    %4426 = vmatmul.bf16.gmra.mxu0 %v2636
    %v4427 = vpop.f32.mrf.mxu0
    %v4428 = vadd.f32 %v4299, %v4427
    %v4429 = vpop.f32.mrf.mxu0
    %v4430 = vadd.f32 %v4301, %v4429
    %4431 = vmatmul.bf16.gmra.mxu0 %v2654
    %v4432 = vpop.f32.mrf.mxu0
    %v4433 = vadd.f32 %v4304, %v4432
    %v4434 = vpop.f32.mrf.mxu0
    %v4435 = vadd.f32 %v4306, %v4434
    %4436 = vmatmul.bf16.gmra.mxu0 %v2672
    %v4437 = vpop.f32.mrf.mxu0
    %v4438 = vadd.f32 %v4309, %v4437
    %v4439 = vpop.f32.mrf.mxu0
    %v4440 = vadd.f32 %v4311, %v4439
    %4441 = vmatmul.bf16.gmra.mxu0 %v2690
    %v4442 = vpop.f32.mrf.mxu0
    %v4443 = vadd.f32 %v4314, %v4442
    %v4444 = vpop.f32.mrf.mxu0
    %v4445 = vadd.f32 %v4316, %v4444
    %4446 = vmatmul.bf16.gmra.mxu0 %v2708
    %v4447 = vpop.f32.mrf.mxu0
    %v4448 = vadd.f32 %v4319, %v4447
    %v4449 = vpop.f32.mrf.mxu0
    %v4450 = vadd.f32 %v4321, %v4449
    %4451 = vmatmul.bf16.gmra.mxu0 %v2726
    %v4452 = vpop.f32.mrf.mxu0
    %v4453 = vadd.f32 %v4324, %v4452
    %v4454 = vpop.f32.mrf.mxu0
    %v4455 = vadd.f32 %v4326, %v4454
    %4456 = vdwg.mxu0
    %4457 = vmatpush.bf16.msra.mxu0 %v3110
    %4458 = vmatpush.bf16.msra.mxu0 %v3109
    %4459 = vmatpush.bf16.msra.mxu0 %v3108
    %4460 = vmatpush.bf16.msra.mxu0 %v3107
    %4461 = vmatpush.bf16.msra.mxu0 %v3106
    %4462 = vmatpush.bf16.msra.mxu0 %v3105
    %4463 = vmatpush.bf16.msra.mxu0 %v3104
    %4464 = vmatpush.bf16.msra.mxu0 %v3103
    %4465 = vmatmul.bf16.gmra.mxu0 %v2313
    %v4466 = vpop.f32.mrf.mxu0
    %v4467 = vadd.f32 %v4338, %v4466
    %v4468 = vpop.f32.mrf.mxu0
    %v4469 = vadd.f32 %v4340, %v4468
    %4470 = vmatmul.bf16.gmra.mxu0 %v2331
    %v4471 = vpop.f32.mrf.mxu0
    %v4472 = vadd.f32 %v4343, %v4471
    %v4473 = vpop.f32.mrf.mxu0
    %v4474 = vadd.f32 %v4345, %v4473
    %4475 = vmatmul.bf16.gmra.mxu0 %v2349
    %v4476 = vpop.f32.mrf.mxu0
    %v4477 = vadd.f32 %v4348, %v4476
    %v4478 = vpop.f32.mrf.mxu0
    %v4479 = vadd.f32 %v4350, %v4478
    %4480 = vmatmul.bf16.gmra.mxu0 %v2367
    %v4481 = vpop.f32.mrf.mxu0
    %v4482 = vadd.f32 %v4353, %v4481
    %v4483 = vpop.f32.mrf.mxu0
    %v4484 = vadd.f32 %v4355, %v4483
    %4485 = vmatmul.bf16.gmra.mxu0 %v2385
    %v4486 = vpop.f32.mrf.mxu0
    %v4487 = vadd.f32 %v4358, %v4486
    %v4488 = vpop.f32.mrf.mxu0
    %v4489 = vadd.f32 %v4360, %v4488
    %4490 = vmatmul.bf16.gmra.mxu0 %v2403
    %v4491 = vpop.f32.mrf.mxu0
    %v4492 = vadd.f32 %v4363, %v4491
    %v4493 = vpop.f32.mrf.mxu0
    %v4494 = vadd.f32 %v4365, %v4493
    %4495 = vmatmul.bf16.gmra.mxu0 %v2421
    %v4496 = vpop.f32.mrf.mxu0
    %v4497 = vadd.f32 %v4368, %v4496
    %v4498 = vpop.f32.mrf.mxu0
    %v4499 = vadd.f32 %v4370, %v4498
    %4500 = vmatmul.bf16.gmra.mxu0 %v2439
    %v4501 = vpop.f32.mrf.mxu0
    %v4502 = vadd.f32 %v4373, %v4501
    %v4503 = vpop.f32.mrf.mxu0
    %v4504 = vadd.f32 %v4375, %v4503
    %4505 = vmatmul.bf16.gmra.mxu0 %v2457
    %v4506 = vpop.f32.mrf.mxu0
    %v4507 = vadd.f32 %v4378, %v4506
    %v4508 = vpop.f32.mrf.mxu0
    %v4509 = vadd.f32 %v4380, %v4508
    %4510 = vmatmul.bf16.gmra.mxu0 %v2475
    %v4511 = vpop.f32.mrf.mxu0
    %v4512 = vadd.f32 %v4383, %v4511
    %v4513 = vpop.f32.mrf.mxu0
    %v4514 = vadd.f32 %v4385, %v4513
    %4515 = vmatmul.bf16.gmra.mxu0 %v2493
    %v4516 = vpop.f32.mrf.mxu0
    %v4517 = vadd.f32 %v4388, %v4516
    %v4518 = vpop.f32.mrf.mxu0
    %v4519 = vadd.f32 %v4390, %v4518
    %4520 = vmatmul.bf16.gmra.mxu0 %v2511
    %v4521 = vpop.f32.mrf.mxu0
    %v4522 = vadd.f32 %v4393, %v4521
    %v4523 = vpop.f32.mrf.mxu0
    %v4524 = vadd.f32 %v4395, %v4523
    %4525 = vmatmul.bf16.gmra.mxu0 %v2529
    %v4526 = vpop.f32.mrf.mxu0
    %v4527 = vadd.f32 %v4398, %v4526
    %v4528 = vpop.f32.mrf.mxu0
    %v4529 = vadd.f32 %v4400, %v4528
    %4530 = vmatmul.bf16.gmra.mxu0 %v2547
    %v4531 = vpop.f32.mrf.mxu0
    %v4532 = vadd.f32 %v4403, %v4531
    %v4533 = vpop.f32.mrf.mxu0
    %v4534 = vadd.f32 %v4405, %v4533
    %4535 = vmatmul.bf16.gmra.mxu0 %v2565
    %v4536 = vpop.f32.mrf.mxu0
    %v4537 = vadd.f32 %v4408, %v4536
    %v4538 = vpop.f32.mrf.mxu0
    %v4539 = vadd.f32 %v4410, %v4538
    %4540 = vmatmul.bf16.gmra.mxu0 %v2583
    %v4541 = vpop.f32.mrf.mxu0
    %v4542 = vadd.f32 %v4413, %v4541
    %v4543 = vpop.f32.mrf.mxu0
    %v4544 = vadd.f32 %v4415, %v4543
    %4545 = vmatmul.bf16.gmra.mxu0 %v2601
    %v4546 = vpop.f32.mrf.mxu0
    %v4547 = vadd.f32 %v4418, %v4546
    %v4548 = vpop.f32.mrf.mxu0
    %v4549 = vadd.f32 %v4420, %v4548
    %4550 = vmatmul.bf16.gmra.mxu0 %v2619
    %v4551 = vpop.f32.mrf.mxu0
    %v4552 = vadd.f32 %v4423, %v4551
    %v4553 = vpop.f32.mrf.mxu0
    %v4554 = vadd.f32 %v4425, %v4553
    %4555 = vmatmul.bf16.gmra.mxu0 %v2637
    %v4556 = vpop.f32.mrf.mxu0
    %v4557 = vadd.f32 %v4428, %v4556
    %v4558 = vpop.f32.mrf.mxu0
    %v4559 = vadd.f32 %v4430, %v4558
    %4560 = vmatmul.bf16.gmra.mxu0 %v2655
    %v4561 = vpop.f32.mrf.mxu0
    %v4562 = vadd.f32 %v4433, %v4561
    %v4563 = vpop.f32.mrf.mxu0
    %v4564 = vadd.f32 %v4435, %v4563
    %4565 = vmatmul.bf16.gmra.mxu0 %v2673
    %v4566 = vpop.f32.mrf.mxu0
    %v4567 = vadd.f32 %v4438, %v4566
    %v4568 = vpop.f32.mrf.mxu0
    %v4569 = vadd.f32 %v4440, %v4568
    %4570 = vmatmul.bf16.gmra.mxu0 %v2691
    %v4571 = vpop.f32.mrf.mxu0
    %v4572 = vadd.f32 %v4443, %v4571
    %v4573 = vpop.f32.mrf.mxu0
    %v4574 = vadd.f32 %v4445, %v4573
    %4575 = vmatmul.bf16.gmra.mxu0 %v2709
    %v4576 = vpop.f32.mrf.mxu0
    %v4577 = vadd.f32 %v4448, %v4576
    %v4578 = vpop.f32.mrf.mxu0
    %v4579 = vadd.f32 %v4450, %v4578
    %4580 = vmatmul.bf16.gmra.mxu0 %v2727
    %v4581 = vpop.f32.mrf.mxu0
    %v4582 = vadd.f32 %v4453, %v4581
    %v4583 = vpop.f32.mrf.mxu0
    %v4584 = vadd.f32 %v4455, %v4583
    %4585 = vdwg.mxu0
    %4586 = vmatpush.bf16.msra.mxu0 %v3118
    %4587 = vmatpush.bf16.msra.mxu0 %v3117
    %4588 = vmatpush.bf16.msra.mxu0 %v3116
    %4589 = vmatpush.bf16.msra.mxu0 %v3115
    %4590 = vmatpush.bf16.msra.mxu0 %v3114
    %4591 = vmatpush.bf16.msra.mxu0 %v3113
    %4592 = vmatpush.bf16.msra.mxu0 %v3112
    %4593 = vmatpush.bf16.msra.mxu0 %v3111
    %4594 = vmatmul.bf16.gmra.mxu0 %v2314
    %v4595 = vpop.f32.mrf.mxu0
    %v4596 = vadd.f32 %v4467, %v4595
    %v4597 = vpop.f32.mrf.mxu0
    %v4598 = vadd.f32 %v4469, %v4597
    %4599 = vmatmul.bf16.gmra.mxu0 %v2332
    %v4600 = vpop.f32.mrf.mxu0
    %v4601 = vadd.f32 %v4472, %v4600
    %v4602 = vpop.f32.mrf.mxu0
    %v4603 = vadd.f32 %v4474, %v4602
    %4604 = vmatmul.bf16.gmra.mxu0 %v2350
    %v4605 = vpop.f32.mrf.mxu0
    %v4606 = vadd.f32 %v4477, %v4605
    %v4607 = vpop.f32.mrf.mxu0
    %v4608 = vadd.f32 %v4479, %v4607
    %4609 = vmatmul.bf16.gmra.mxu0 %v2368
    %v4610 = vpop.f32.mrf.mxu0
    %v4611 = vadd.f32 %v4482, %v4610
    %v4612 = vpop.f32.mrf.mxu0
    %v4613 = vadd.f32 %v4484, %v4612
    %4614 = vmatmul.bf16.gmra.mxu0 %v2386
    %v4615 = vpop.f32.mrf.mxu0
    %v4616 = vadd.f32 %v4487, %v4615
    %v4617 = vpop.f32.mrf.mxu0
    %v4618 = vadd.f32 %v4489, %v4617
    %4619 = vmatmul.bf16.gmra.mxu0 %v2404
    %v4620 = vpop.f32.mrf.mxu0
    %v4621 = vadd.f32 %v4492, %v4620
    %v4622 = vpop.f32.mrf.mxu0
    %v4623 = vadd.f32 %v4494, %v4622
    %4624 = vmatmul.bf16.gmra.mxu0 %v2422
    %v4625 = vpop.f32.mrf.mxu0
    %v4626 = vadd.f32 %v4497, %v4625
    %v4627 = vpop.f32.mrf.mxu0
    %v4628 = vadd.f32 %v4499, %v4627
    %4629 = vmatmul.bf16.gmra.mxu0 %v2440
    %v4630 = vpop.f32.mrf.mxu0
    %v4631 = vadd.f32 %v4502, %v4630
    %v4632 = vpop.f32.mrf.mxu0
    %v4633 = vadd.f32 %v4504, %v4632
    %4634 = vmatmul.bf16.gmra.mxu0 %v2458
    %v4635 = vpop.f32.mrf.mxu0
    %v4636 = vadd.f32 %v4507, %v4635
    %v4637 = vpop.f32.mrf.mxu0
    %v4638 = vadd.f32 %v4509, %v4637
    %4639 = vmatmul.bf16.gmra.mxu0 %v2476
    %v4640 = vpop.f32.mrf.mxu0
    %v4641 = vadd.f32 %v4512, %v4640
    %v4642 = vpop.f32.mrf.mxu0
    %v4643 = vadd.f32 %v4514, %v4642
    %4644 = vmatmul.bf16.gmra.mxu0 %v2494
    %v4645 = vpop.f32.mrf.mxu0
    %v4646 = vadd.f32 %v4517, %v4645
    %v4647 = vpop.f32.mrf.mxu0
    %v4648 = vadd.f32 %v4519, %v4647
    %4649 = vmatmul.bf16.gmra.mxu0 %v2512
    %v4650 = vpop.f32.mrf.mxu0
    %v4651 = vadd.f32 %v4522, %v4650
    %v4652 = vpop.f32.mrf.mxu0
    %v4653 = vadd.f32 %v4524, %v4652
    %4654 = vmatmul.bf16.gmra.mxu0 %v2530
    %v4655 = vpop.f32.mrf.mxu0
    %v4656 = vadd.f32 %v4527, %v4655
    %v4657 = vpop.f32.mrf.mxu0
    %v4658 = vadd.f32 %v4529, %v4657
    %4659 = vmatmul.bf16.gmra.mxu0 %v2548
    %v4660 = vpop.f32.mrf.mxu0
    %v4661 = vadd.f32 %v4532, %v4660
    %v4662 = vpop.f32.mrf.mxu0
    %v4663 = vadd.f32 %v4534, %v4662
    %4664 = vmatmul.bf16.gmra.mxu0 %v2566
    %v4665 = vpop.f32.mrf.mxu0
    %v4666 = vadd.f32 %v4537, %v4665
    %v4667 = vpop.f32.mrf.mxu0
    %v4668 = vadd.f32 %v4539, %v4667
    %4669 = vmatmul.bf16.gmra.mxu0 %v2584
    %v4670 = vpop.f32.mrf.mxu0
    %v4671 = vadd.f32 %v4542, %v4670
    %v4672 = vpop.f32.mrf.mxu0
    %v4673 = vadd.f32 %v4544, %v4672
    %4674 = vmatmul.bf16.gmra.mxu0 %v2602
    %v4675 = vpop.f32.mrf.mxu0
    %v4676 = vadd.f32 %v4547, %v4675
    %v4677 = vpop.f32.mrf.mxu0
    %v4678 = vadd.f32 %v4549, %v4677
    %4679 = vmatmul.bf16.gmra.mxu0 %v2620
    %v4680 = vpop.f32.mrf.mxu0
    %v4681 = vadd.f32 %v4552, %v4680
    %v4682 = vpop.f32.mrf.mxu0
    %v4683 = vadd.f32 %v4554, %v4682
    %4684 = vmatmul.bf16.gmra.mxu0 %v2638
    %v4685 = vpop.f32.mrf.mxu0
    %v4686 = vadd.f32 %v4557, %v4685
    %v4687 = vpop.f32.mrf.mxu0
    %v4688 = vadd.f32 %v4559, %v4687
    %4689 = vmatmul.bf16.gmra.mxu0 %v2656
    %v4690 = vpop.f32.mrf.mxu0
    %v4691 = vadd.f32 %v4562, %v4690
    %v4692 = vpop.f32.mrf.mxu0
    %v4693 = vadd.f32 %v4564, %v4692
    %4694 = vmatmul.bf16.gmra.mxu0 %v2674
    %v4695 = vpop.f32.mrf.mxu0
    %v4696 = vadd.f32 %v4567, %v4695
    %v4697 = vpop.f32.mrf.mxu0
    %v4698 = vadd.f32 %v4569, %v4697
    %4699 = vmatmul.bf16.gmra.mxu0 %v2692
    %v4700 = vpop.f32.mrf.mxu0
    %v4701 = vadd.f32 %v4572, %v4700
    %v4702 = vpop.f32.mrf.mxu0
    %v4703 = vadd.f32 %v4574, %v4702
    %4704 = vmatmul.bf16.gmra.mxu0 %v2710
    %v4705 = vpop.f32.mrf.mxu0
    %v4706 = vadd.f32 %v4577, %v4705
    %v4707 = vpop.f32.mrf.mxu0
    %v4708 = vadd.f32 %v4579, %v4707
    %4709 = vmatmul.bf16.gmra.mxu0 %v2728
    %v4710 = vpop.f32.mrf.mxu0
    %v4711 = vadd.f32 %v4582, %v4710
    %v4712 = vpop.f32.mrf.mxu0
    %v4713 = vadd.f32 %v4584, %v4712
    %4714 = vdwg.mxu0
    %4715 = vmatpush.bf16.msra.mxu0 %v3126
    %4716 = vmatpush.bf16.msra.mxu0 %v3125
    %4717 = vmatpush.bf16.msra.mxu0 %v3124
    %4718 = vmatpush.bf16.msra.mxu0 %v3123
    %4719 = vmatpush.bf16.msra.mxu0 %v3122
    %4720 = vmatpush.bf16.msra.mxu0 %v3121
    %4721 = vmatpush.bf16.msra.mxu0 %v3120
    %4722 = vmatpush.bf16.msra.mxu0 %v3119
    %4723 = vmatmul.bf16.gmra.mxu0 %v2315
    %v4724 = vpop.f32.mrf.mxu0
    %v4725 = vadd.f32 %v4596, %v4724
    %v4726 = vpop.f32.mrf.mxu0
    %v4727 = vadd.f32 %v4598, %v4726
    %4728 = vmatmul.bf16.gmra.mxu0 %v2333
    %v4729 = vpop.f32.mrf.mxu0
    %v4730 = vadd.f32 %v4601, %v4729
    %v4731 = vpop.f32.mrf.mxu0
    %v4732 = vadd.f32 %v4603, %v4731
    %4733 = vmatmul.bf16.gmra.mxu0 %v2351
    %v4734 = vpop.f32.mrf.mxu0
    %v4735 = vadd.f32 %v4606, %v4734
    %v4736 = vpop.f32.mrf.mxu0
    %v4737 = vadd.f32 %v4608, %v4736
    %4738 = vmatmul.bf16.gmra.mxu0 %v2369
    %v4739 = vpop.f32.mrf.mxu0
    %v4740 = vadd.f32 %v4611, %v4739
    %v4741 = vpop.f32.mrf.mxu0
    %v4742 = vadd.f32 %v4613, %v4741
    %4743 = vmatmul.bf16.gmra.mxu0 %v2387
    %v4744 = vpop.f32.mrf.mxu0
    %v4745 = vadd.f32 %v4616, %v4744
    %v4746 = vpop.f32.mrf.mxu0
    %v4747 = vadd.f32 %v4618, %v4746
    %4748 = vmatmul.bf16.gmra.mxu0 %v2405
    %v4749 = vpop.f32.mrf.mxu0
    %v4750 = vadd.f32 %v4621, %v4749
    %v4751 = vpop.f32.mrf.mxu0
    %v4752 = vadd.f32 %v4623, %v4751
    %4753 = vmatmul.bf16.gmra.mxu0 %v2423
    %v4754 = vpop.f32.mrf.mxu0
    %v4755 = vadd.f32 %v4626, %v4754
    %v4756 = vpop.f32.mrf.mxu0
    %v4757 = vadd.f32 %v4628, %v4756
    %4758 = vmatmul.bf16.gmra.mxu0 %v2441
    %v4759 = vpop.f32.mrf.mxu0
    %v4760 = vadd.f32 %v4631, %v4759
    %v4761 = vpop.f32.mrf.mxu0
    %v4762 = vadd.f32 %v4633, %v4761
    %4763 = vmatmul.bf16.gmra.mxu0 %v2459
    %v4764 = vpop.f32.mrf.mxu0
    %v4765 = vadd.f32 %v4636, %v4764
    %v4766 = vpop.f32.mrf.mxu0
    %v4767 = vadd.f32 %v4638, %v4766
    %4768 = vmatmul.bf16.gmra.mxu0 %v2477
    %v4769 = vpop.f32.mrf.mxu0
    %v4770 = vadd.f32 %v4641, %v4769
    %v4771 = vpop.f32.mrf.mxu0
    %v4772 = vadd.f32 %v4643, %v4771
    %4773 = vmatmul.bf16.gmra.mxu0 %v2495
    %v4774 = vpop.f32.mrf.mxu0
    %v4775 = vadd.f32 %v4646, %v4774
    %v4776 = vpop.f32.mrf.mxu0
    %v4777 = vadd.f32 %v4648, %v4776
    %4778 = vmatmul.bf16.gmra.mxu0 %v2513
    %v4779 = vpop.f32.mrf.mxu0
    %v4780 = vadd.f32 %v4651, %v4779
    %v4781 = vpop.f32.mrf.mxu0
    %v4782 = vadd.f32 %v4653, %v4781
    %4783 = vmatmul.bf16.gmra.mxu0 %v2531
    %v4784 = vpop.f32.mrf.mxu0
    %v4785 = vadd.f32 %v4656, %v4784
    %v4786 = vpop.f32.mrf.mxu0
    %v4787 = vadd.f32 %v4658, %v4786
    %4788 = vmatmul.bf16.gmra.mxu0 %v2549
    %v4789 = vpop.f32.mrf.mxu0
    %v4790 = vadd.f32 %v4661, %v4789
    %v4791 = vpop.f32.mrf.mxu0
    %v4792 = vadd.f32 %v4663, %v4791
    %4793 = vmatmul.bf16.gmra.mxu0 %v2567
    %v4794 = vpop.f32.mrf.mxu0
    %v4795 = vadd.f32 %v4666, %v4794
    %v4796 = vpop.f32.mrf.mxu0
    %v4797 = vadd.f32 %v4668, %v4796
    %4798 = vmatmul.bf16.gmra.mxu0 %v2585
    %v4799 = vpop.f32.mrf.mxu0
    %v4800 = vadd.f32 %v4671, %v4799
    %v4801 = vpop.f32.mrf.mxu0
    %v4802 = vadd.f32 %v4673, %v4801
    %4803 = vmatmul.bf16.gmra.mxu0 %v2603
    %v4804 = vpop.f32.mrf.mxu0
    %v4805 = vadd.f32 %v4676, %v4804
    %v4806 = vpop.f32.mrf.mxu0
    %v4807 = vadd.f32 %v4678, %v4806
    %4808 = vmatmul.bf16.gmra.mxu0 %v2621
    %v4809 = vpop.f32.mrf.mxu0
    %v4810 = vadd.f32 %v4681, %v4809
    %v4811 = vpop.f32.mrf.mxu0
    %v4812 = vadd.f32 %v4683, %v4811
    %4813 = vmatmul.bf16.gmra.mxu0 %v2639
    %v4814 = vpop.f32.mrf.mxu0
    %v4815 = vadd.f32 %v4686, %v4814
    %v4816 = vpop.f32.mrf.mxu0
    %v4817 = vadd.f32 %v4688, %v4816
    %4818 = vmatmul.bf16.gmra.mxu0 %v2657
    %v4819 = vpop.f32.mrf.mxu0
    %v4820 = vadd.f32 %v4691, %v4819
    %v4821 = vpop.f32.mrf.mxu0
    %v4822 = vadd.f32 %v4693, %v4821
    %4823 = vmatmul.bf16.gmra.mxu0 %v2675
    %v4824 = vpop.f32.mrf.mxu0
    %v4825 = vadd.f32 %v4696, %v4824
    %v4826 = vpop.f32.mrf.mxu0
    %v4827 = vadd.f32 %v4698, %v4826
    %4828 = vmatmul.bf16.gmra.mxu0 %v2693
    %v4829 = vpop.f32.mrf.mxu0
    %v4830 = vadd.f32 %v4701, %v4829
    %v4831 = vpop.f32.mrf.mxu0
    %v4832 = vadd.f32 %v4703, %v4831
    %4833 = vmatmul.bf16.gmra.mxu0 %v2711
    %v4834 = vpop.f32.mrf.mxu0
    %v4835 = vadd.f32 %v4706, %v4834
    %v4836 = vpop.f32.mrf.mxu0
    %v4837 = vadd.f32 %v4708, %v4836
    %4838 = vmatmul.bf16.gmra.mxu0 %v2729
    %v4839 = vpop.f32.mrf.mxu0
    %v4840 = vadd.f32 %v4711, %v4839
    %v4841 = vpop.f32.mrf.mxu0
    %v4842 = vadd.f32 %v4713, %v4841
    %4843 = vdwg.mxu0
    %4844 = vmatpush.bf16.msra.mxu0 %v3134
    %4845 = vmatpush.bf16.msra.mxu0 %v3133
    %4846 = vmatpush.bf16.msra.mxu0 %v3132
    %4847 = vmatpush.bf16.msra.mxu0 %v3131
    %4848 = vmatpush.bf16.msra.mxu0 %v3130
    %4849 = vmatpush.bf16.msra.mxu0 %v3129
    %4850 = vmatpush.bf16.msra.mxu0 %v3128
    %4851 = vmatpush.bf16.msra.mxu0 %v3127
    %4852 = vmatmul.bf16.gmra.mxu0 %v2316
    %v4853 = vpop.f32.mrf.mxu0
    %v4854 = vadd.f32 %v4725, %v4853
    %v4855 = vpop.f32.mrf.mxu0
    %v4856 = vadd.f32 %v4727, %v4855
    %4857 = vmatmul.bf16.gmra.mxu0 %v2334
    %v4858 = vpop.f32.mrf.mxu0
    %v4859 = vadd.f32 %v4730, %v4858
    %v4860 = vpop.f32.mrf.mxu0
    %v4861 = vadd.f32 %v4732, %v4860
    %4862 = vmatmul.bf16.gmra.mxu0 %v2352
    %v4863 = vpop.f32.mrf.mxu0
    %v4864 = vadd.f32 %v4735, %v4863
    %v4865 = vpop.f32.mrf.mxu0
    %v4866 = vadd.f32 %v4737, %v4865
    %4867 = vmatmul.bf16.gmra.mxu0 %v2370
    %v4868 = vpop.f32.mrf.mxu0
    %v4869 = vadd.f32 %v4740, %v4868
    %v4870 = vpop.f32.mrf.mxu0
    %v4871 = vadd.f32 %v4742, %v4870
    %4872 = vmatmul.bf16.gmra.mxu0 %v2388
    %v4873 = vpop.f32.mrf.mxu0
    %v4874 = vadd.f32 %v4745, %v4873
    %v4875 = vpop.f32.mrf.mxu0
    %v4876 = vadd.f32 %v4747, %v4875
    %4877 = vmatmul.bf16.gmra.mxu0 %v2406
    %v4878 = vpop.f32.mrf.mxu0
    %v4879 = vadd.f32 %v4750, %v4878
    %v4880 = vpop.f32.mrf.mxu0
    %v4881 = vadd.f32 %v4752, %v4880
    %4882 = vmatmul.bf16.gmra.mxu0 %v2424
    %v4883 = vpop.f32.mrf.mxu0
    %v4884 = vadd.f32 %v4755, %v4883
    %v4885 = vpop.f32.mrf.mxu0
    %v4886 = vadd.f32 %v4757, %v4885
    %4887 = vmatmul.bf16.gmra.mxu0 %v2442
    %v4888 = vpop.f32.mrf.mxu0
    %v4889 = vadd.f32 %v4760, %v4888
    %v4890 = vpop.f32.mrf.mxu0
    %v4891 = vadd.f32 %v4762, %v4890
    %4892 = vmatmul.bf16.gmra.mxu0 %v2460
    %v4893 = vpop.f32.mrf.mxu0
    %v4894 = vadd.f32 %v4765, %v4893
    %v4895 = vpop.f32.mrf.mxu0
    %v4896 = vadd.f32 %v4767, %v4895
    %4897 = vmatmul.bf16.gmra.mxu0 %v2478
    %v4898 = vpop.f32.mrf.mxu0
    %v4899 = vadd.f32 %v4770, %v4898
    %v4900 = vpop.f32.mrf.mxu0
    %v4901 = vadd.f32 %v4772, %v4900
    %4902 = vmatmul.bf16.gmra.mxu0 %v2496
    %v4903 = vpop.f32.mrf.mxu0
    %v4904 = vadd.f32 %v4775, %v4903
    %v4905 = vpop.f32.mrf.mxu0
    %v4906 = vadd.f32 %v4777, %v4905
    %4907 = vmatmul.bf16.gmra.mxu0 %v2514
    %v4908 = vpop.f32.mrf.mxu0
    %v4909 = vadd.f32 %v4780, %v4908
    %v4910 = vpop.f32.mrf.mxu0
    %v4911 = vadd.f32 %v4782, %v4910
    %4912 = vmatmul.bf16.gmra.mxu0 %v2532
    %v4913 = vpop.f32.mrf.mxu0
    %v4914 = vadd.f32 %v4785, %v4913
    %v4915 = vpop.f32.mrf.mxu0
    %v4916 = vadd.f32 %v4787, %v4915
    %4917 = vmatmul.bf16.gmra.mxu0 %v2550
    %v4918 = vpop.f32.mrf.mxu0
    %v4919 = vadd.f32 %v4790, %v4918
    %v4920 = vpop.f32.mrf.mxu0
    %v4921 = vadd.f32 %v4792, %v4920
    %4922 = vmatmul.bf16.gmra.mxu0 %v2568
    %v4923 = vpop.f32.mrf.mxu0
    %v4924 = vadd.f32 %v4795, %v4923
    %v4925 = vpop.f32.mrf.mxu0
    %v4926 = vadd.f32 %v4797, %v4925
    %4927 = vmatmul.bf16.gmra.mxu0 %v2586
    %v4928 = vpop.f32.mrf.mxu0
    %v4929 = vadd.f32 %v4800, %v4928
    %v4930 = vpop.f32.mrf.mxu0
    %v4931 = vadd.f32 %v4802, %v4930
    %4932 = vmatmul.bf16.gmra.mxu0 %v2604
    %v4933 = vpop.f32.mrf.mxu0
    %v4934 = vadd.f32 %v4805, %v4933
    %v4935 = vpop.f32.mrf.mxu0
    %v4936 = vadd.f32 %v4807, %v4935
    %4937 = vmatmul.bf16.gmra.mxu0 %v2622
    %v4938 = vpop.f32.mrf.mxu0
    %v4939 = vadd.f32 %v4810, %v4938
    %v4940 = vpop.f32.mrf.mxu0
    %v4941 = vadd.f32 %v4812, %v4940
    %4942 = vmatmul.bf16.gmra.mxu0 %v2640
    %v4943 = vpop.f32.mrf.mxu0
    %v4944 = vadd.f32 %v4815, %v4943
    %v4945 = vpop.f32.mrf.mxu0
    %v4946 = vadd.f32 %v4817, %v4945
    %4947 = vmatmul.bf16.gmra.mxu0 %v2658
    %v4948 = vpop.f32.mrf.mxu0
    %v4949 = vadd.f32 %v4820, %v4948
    %v4950 = vpop.f32.mrf.mxu0
    %v4951 = vadd.f32 %v4822, %v4950
    %4952 = vmatmul.bf16.gmra.mxu0 %v2676
    %v4953 = vpop.f32.mrf.mxu0
    %v4954 = vadd.f32 %v4825, %v4953
    %v4955 = vpop.f32.mrf.mxu0
    %v4956 = vadd.f32 %v4827, %v4955
    %4957 = vmatmul.bf16.gmra.mxu0 %v2694
    %v4958 = vpop.f32.mrf.mxu0
    %v4959 = vadd.f32 %v4830, %v4958
    %v4960 = vpop.f32.mrf.mxu0
    %v4961 = vadd.f32 %v4832, %v4960
    %4962 = vmatmul.bf16.gmra.mxu0 %v2712
    %v4963 = vpop.f32.mrf.mxu0
    %v4964 = vadd.f32 %v4835, %v4963
    %v4965 = vpop.f32.mrf.mxu0
    %v4966 = vadd.f32 %v4837, %v4965
    %4967 = vmatmul.bf16.gmra.mxu0 %v2730
    %v4968 = vpop.f32.mrf.mxu0
    %v4969 = vadd.f32 %v4840, %v4968
    %v4970 = vpop.f32.mrf.mxu0
    %v4971 = vadd.f32 %v4842, %v4970
    %4972 = vdwg.mxu0
    %4973 = vmatpush.bf16.msra.mxu0 %v3142
    %4974 = vmatpush.bf16.msra.mxu0 %v3141
    %4975 = vmatpush.bf16.msra.mxu0 %v3140
    %4976 = vmatpush.bf16.msra.mxu0 %v3139
    %4977 = vmatpush.bf16.msra.mxu0 %v3138
    %4978 = vmatpush.bf16.msra.mxu0 %v3137
    %4979 = vmatpush.bf16.msra.mxu0 %v3136
    %4980 = vmatpush.bf16.msra.mxu0 %v3135
    %4981 = vmatmul.bf16.gmra.mxu0 %v2317
    %v4982 = vpop.f32.mrf.mxu0
    %v4983 = vadd.f32 %v4854, %v4982
    %v4984 = vpop.f32.mrf.mxu0
    %v4985 = vadd.f32 %v4856, %v4984
    %4986 = vmatmul.bf16.gmra.mxu0 %v2335
    %v4987 = vpop.f32.mrf.mxu0
    %v4988 = vadd.f32 %v4859, %v4987
    %v4989 = vpop.f32.mrf.mxu0
    %v4990 = vadd.f32 %v4861, %v4989
    %4991 = vmatmul.bf16.gmra.mxu0 %v2353
    %v4992 = vpop.f32.mrf.mxu0
    %v4993 = vadd.f32 %v4864, %v4992
    %v4994 = vpop.f32.mrf.mxu0
    %v4995 = vadd.f32 %v4866, %v4994
    %4996 = vmatmul.bf16.gmra.mxu0 %v2371
    %v4997 = vpop.f32.mrf.mxu0
    %v4998 = vadd.f32 %v4869, %v4997
    %v4999 = vpop.f32.mrf.mxu0
    %v5000 = vadd.f32 %v4871, %v4999
    %5001 = vmatmul.bf16.gmra.mxu0 %v2389
    %v5002 = vpop.f32.mrf.mxu0
    %v5003 = vadd.f32 %v4874, %v5002
    %v5004 = vpop.f32.mrf.mxu0
    %v5005 = vadd.f32 %v4876, %v5004
    %5006 = vmatmul.bf16.gmra.mxu0 %v2407
    %v5007 = vpop.f32.mrf.mxu0
    %v5008 = vadd.f32 %v4879, %v5007
    %v5009 = vpop.f32.mrf.mxu0
    %v5010 = vadd.f32 %v4881, %v5009
    %5011 = vmatmul.bf16.gmra.mxu0 %v2425
    %v5012 = vpop.f32.mrf.mxu0
    %v5013 = vadd.f32 %v4884, %v5012
    %v5014 = vpop.f32.mrf.mxu0
    %v5015 = vadd.f32 %v4886, %v5014
    %5016 = vmatmul.bf16.gmra.mxu0 %v2443
    %v5017 = vpop.f32.mrf.mxu0
    %v5018 = vadd.f32 %v4889, %v5017
    %v5019 = vpop.f32.mrf.mxu0
    %v5020 = vadd.f32 %v4891, %v5019
    %5021 = vmatmul.bf16.gmra.mxu0 %v2461
    %v5022 = vpop.f32.mrf.mxu0
    %v5023 = vadd.f32 %v4894, %v5022
    %v5024 = vpop.f32.mrf.mxu0
    %v5025 = vadd.f32 %v4896, %v5024
    %5026 = vmatmul.bf16.gmra.mxu0 %v2479
    %v5027 = vpop.f32.mrf.mxu0
    %v5028 = vadd.f32 %v4899, %v5027
    %v5029 = vpop.f32.mrf.mxu0
    %v5030 = vadd.f32 %v4901, %v5029
    %5031 = vmatmul.bf16.gmra.mxu0 %v2497
    %v5032 = vpop.f32.mrf.mxu0
    %v5033 = vadd.f32 %v4904, %v5032
    %v5034 = vpop.f32.mrf.mxu0
    %v5035 = vadd.f32 %v4906, %v5034
    %5036 = vmatmul.bf16.gmra.mxu0 %v2515
    %v5037 = vpop.f32.mrf.mxu0
    %v5038 = vadd.f32 %v4909, %v5037
    %v5039 = vpop.f32.mrf.mxu0
    %v5040 = vadd.f32 %v4911, %v5039
    %5041 = vmatmul.bf16.gmra.mxu0 %v2533
    %v5042 = vpop.f32.mrf.mxu0
    %v5043 = vadd.f32 %v4914, %v5042
    %v5044 = vpop.f32.mrf.mxu0
    %v5045 = vadd.f32 %v4916, %v5044
    %5046 = vmatmul.bf16.gmra.mxu0 %v2551
    %v5047 = vpop.f32.mrf.mxu0
    %v5048 = vadd.f32 %v4919, %v5047
    %v5049 = vpop.f32.mrf.mxu0
    %v5050 = vadd.f32 %v4921, %v5049
    %5051 = vmatmul.bf16.gmra.mxu0 %v2569
    %v5052 = vpop.f32.mrf.mxu0
    %v5053 = vadd.f32 %v4924, %v5052
    %v5054 = vpop.f32.mrf.mxu0
    %v5055 = vadd.f32 %v4926, %v5054
    %5056 = vmatmul.bf16.gmra.mxu0 %v2587
    %v5057 = vpop.f32.mrf.mxu0
    %v5058 = vadd.f32 %v4929, %v5057
    %v5059 = vpop.f32.mrf.mxu0
    %v5060 = vadd.f32 %v4931, %v5059
    %5061 = vmatmul.bf16.gmra.mxu0 %v2605
    %v5062 = vpop.f32.mrf.mxu0
    %v5063 = vadd.f32 %v4934, %v5062
    %v5064 = vpop.f32.mrf.mxu0
    %v5065 = vadd.f32 %v4936, %v5064
    %5066 = vmatmul.bf16.gmra.mxu0 %v2623
    %v5067 = vpop.f32.mrf.mxu0
    %v5068 = vadd.f32 %v4939, %v5067
    %v5069 = vpop.f32.mrf.mxu0
    %v5070 = vadd.f32 %v4941, %v5069
    %5071 = vmatmul.bf16.gmra.mxu0 %v2641
    %v5072 = vpop.f32.mrf.mxu0
    %v5073 = vadd.f32 %v4944, %v5072
    %v5074 = vpop.f32.mrf.mxu0
    %v5075 = vadd.f32 %v4946, %v5074
    %5076 = vmatmul.bf16.gmra.mxu0 %v2659
    %v5077 = vpop.f32.mrf.mxu0
    %v5078 = vadd.f32 %v4949, %v5077
    %v5079 = vpop.f32.mrf.mxu0
    %v5080 = vadd.f32 %v4951, %v5079
    %5081 = vmatmul.bf16.gmra.mxu0 %v2677
    %v5082 = vpop.f32.mrf.mxu0
    %v5083 = vadd.f32 %v4954, %v5082
    %v5084 = vpop.f32.mrf.mxu0
    %v5085 = vadd.f32 %v4956, %v5084
    %5086 = vmatmul.bf16.gmra.mxu0 %v2695
    %v5087 = vpop.f32.mrf.mxu0
    %v5088 = vadd.f32 %v4959, %v5087
    %v5089 = vpop.f32.mrf.mxu0
    %v5090 = vadd.f32 %v4961, %v5089
    %5091 = vmatmul.bf16.gmra.mxu0 %v2713
    %v5092 = vpop.f32.mrf.mxu0
    %v5093 = vadd.f32 %v4964, %v5092
    %v5094 = vpop.f32.mrf.mxu0
    %v5095 = vadd.f32 %v4966, %v5094
    %5096 = vmatmul.bf16.gmra.mxu0 %v2731
    %v5097 = vpop.f32.mrf.mxu0
    %v5098 = vadd.f32 %v4969, %v5097
    %v5099 = vpop.f32.mrf.mxu0
    %v5100 = vadd.f32 %v4971, %v5099
    %5101 = vdwg.mxu0
    %5102 = vmatpush.bf16.msra.mxu0 %v3150
    %5103 = vmatpush.bf16.msra.mxu0 %v3149
    %5104 = vmatpush.bf16.msra.mxu0 %v3148
    %5105 = vmatpush.bf16.msra.mxu0 %v3147
    %5106 = vmatpush.bf16.msra.mxu0 %v3146
    %5107 = vmatpush.bf16.msra.mxu0 %v3145
    %5108 = vmatpush.bf16.msra.mxu0 %v3144
    %5109 = vmatpush.bf16.msra.mxu0 %v3143
    %5110 = vmatmul.bf16.gmra.mxu0 %v2318
    %v5111 = vpop.f32.mrf.mxu0
    %v5112 = vadd.f32 %v4983, %v5111
    %v5113 = vpop.f32.mrf.mxu0
    %v5114 = vadd.f32 %v4985, %v5113
    %5115 = vmatmul.bf16.gmra.mxu0 %v2336
    %v5116 = vpop.f32.mrf.mxu0
    %v5117 = vadd.f32 %v4988, %v5116
    %v5118 = vpop.f32.mrf.mxu0
    %v5119 = vadd.f32 %v4990, %v5118
    %5120 = vmatmul.bf16.gmra.mxu0 %v2354
    %v5121 = vpop.f32.mrf.mxu0
    %v5122 = vadd.f32 %v4993, %v5121
    %v5123 = vpop.f32.mrf.mxu0
    %v5124 = vadd.f32 %v4995, %v5123
    %5125 = vmatmul.bf16.gmra.mxu0 %v2372
    %v5126 = vpop.f32.mrf.mxu0
    %v5127 = vadd.f32 %v4998, %v5126
    %v5128 = vpop.f32.mrf.mxu0
    %v5129 = vadd.f32 %v5000, %v5128
    %5130 = vmatmul.bf16.gmra.mxu0 %v2390
    %v5131 = vpop.f32.mrf.mxu0
    %v5132 = vadd.f32 %v5003, %v5131
    %v5133 = vpop.f32.mrf.mxu0
    %v5134 = vadd.f32 %v5005, %v5133
    %5135 = vmatmul.bf16.gmra.mxu0 %v2408
    %v5136 = vpop.f32.mrf.mxu0
    %v5137 = vadd.f32 %v5008, %v5136
    %v5138 = vpop.f32.mrf.mxu0
    %v5139 = vadd.f32 %v5010, %v5138
    %5140 = vmatmul.bf16.gmra.mxu0 %v2426
    %v5141 = vpop.f32.mrf.mxu0
    %v5142 = vadd.f32 %v5013, %v5141
    %v5143 = vpop.f32.mrf.mxu0
    %v5144 = vadd.f32 %v5015, %v5143
    %5145 = vmatmul.bf16.gmra.mxu0 %v2444
    %v5146 = vpop.f32.mrf.mxu0
    %v5147 = vadd.f32 %v5018, %v5146
    %v5148 = vpop.f32.mrf.mxu0
    %v5149 = vadd.f32 %v5020, %v5148
    %5150 = vmatmul.bf16.gmra.mxu0 %v2462
    %v5151 = vpop.f32.mrf.mxu0
    %v5152 = vadd.f32 %v5023, %v5151
    %v5153 = vpop.f32.mrf.mxu0
    %v5154 = vadd.f32 %v5025, %v5153
    %5155 = vmatmul.bf16.gmra.mxu0 %v2480
    %v5156 = vpop.f32.mrf.mxu0
    %v5157 = vadd.f32 %v5028, %v5156
    %v5158 = vpop.f32.mrf.mxu0
    %v5159 = vadd.f32 %v5030, %v5158
    %5160 = vmatmul.bf16.gmra.mxu0 %v2498
    %v5161 = vpop.f32.mrf.mxu0
    %v5162 = vadd.f32 %v5033, %v5161
    %v5163 = vpop.f32.mrf.mxu0
    %v5164 = vadd.f32 %v5035, %v5163
    %5165 = vmatmul.bf16.gmra.mxu0 %v2516
    %v5166 = vpop.f32.mrf.mxu0
    %v5167 = vadd.f32 %v5038, %v5166
    %v5168 = vpop.f32.mrf.mxu0
    %v5169 = vadd.f32 %v5040, %v5168
    %5170 = vmatmul.bf16.gmra.mxu0 %v2534
    %v5171 = vpop.f32.mrf.mxu0
    %v5172 = vadd.f32 %v5043, %v5171
    %v5173 = vpop.f32.mrf.mxu0
    %v5174 = vadd.f32 %v5045, %v5173
    %5175 = vmatmul.bf16.gmra.mxu0 %v2552
    %v5176 = vpop.f32.mrf.mxu0
    %v5177 = vadd.f32 %v5048, %v5176
    %v5178 = vpop.f32.mrf.mxu0
    %v5179 = vadd.f32 %v5050, %v5178
    %5180 = vmatmul.bf16.gmra.mxu0 %v2570
    %v5181 = vpop.f32.mrf.mxu0
    %v5182 = vadd.f32 %v5053, %v5181
    %v5183 = vpop.f32.mrf.mxu0
    %v5184 = vadd.f32 %v5055, %v5183
    %5185 = vmatmul.bf16.gmra.mxu0 %v2588
    %v5186 = vpop.f32.mrf.mxu0
    %v5187 = vadd.f32 %v5058, %v5186
    %v5188 = vpop.f32.mrf.mxu0
    %v5189 = vadd.f32 %v5060, %v5188
    %5190 = vmatmul.bf16.gmra.mxu0 %v2606
    %v5191 = vpop.f32.mrf.mxu0
    %v5192 = vadd.f32 %v5063, %v5191
    %v5193 = vpop.f32.mrf.mxu0
    %v5194 = vadd.f32 %v5065, %v5193
    %5195 = vmatmul.bf16.gmra.mxu0 %v2624
    %v5196 = vpop.f32.mrf.mxu0
    %v5197 = vadd.f32 %v5068, %v5196
    %v5198 = vpop.f32.mrf.mxu0
    %v5199 = vadd.f32 %v5070, %v5198
    %5200 = vmatmul.bf16.gmra.mxu0 %v2642
    %v5201 = vpop.f32.mrf.mxu0
    %v5202 = vadd.f32 %v5073, %v5201
    %v5203 = vpop.f32.mrf.mxu0
    %v5204 = vadd.f32 %v5075, %v5203
    %5205 = vmatmul.bf16.gmra.mxu0 %v2660
    %v5206 = vpop.f32.mrf.mxu0
    %v5207 = vadd.f32 %v5078, %v5206
    %v5208 = vpop.f32.mrf.mxu0
    %v5209 = vadd.f32 %v5080, %v5208
    %5210 = vmatmul.bf16.gmra.mxu0 %v2678
    %v5211 = vpop.f32.mrf.mxu0
    %v5212 = vadd.f32 %v5083, %v5211
    %v5213 = vpop.f32.mrf.mxu0
    %v5214 = vadd.f32 %v5085, %v5213
    %5215 = vmatmul.bf16.gmra.mxu0 %v2696
    %v5216 = vpop.f32.mrf.mxu0
    %v5217 = vadd.f32 %v5088, %v5216
    %v5218 = vpop.f32.mrf.mxu0
    %v5219 = vadd.f32 %v5090, %v5218
    %5220 = vmatmul.bf16.gmra.mxu0 %v2714
    %v5221 = vpop.f32.mrf.mxu0
    %v5222 = vadd.f32 %v5093, %v5221
    %v5223 = vpop.f32.mrf.mxu0
    %v5224 = vadd.f32 %v5095, %v5223
    %5225 = vmatmul.bf16.gmra.mxu0 %v2732
    %v5226 = vpop.f32.mrf.mxu0
    %v5227 = vadd.f32 %v5098, %v5226
    %v5228 = vpop.f32.mrf.mxu0
    %v5229 = vadd.f32 %v5100, %v5228
    %5230 = vdwg.mxu0
    %5231 = vmatpush.bf16.msra.mxu0 %v3158
    %5232 = vmatpush.bf16.msra.mxu0 %v3157
    %5233 = vmatpush.bf16.msra.mxu0 %v3156
    %5234 = vmatpush.bf16.msra.mxu0 %v3155
    %5235 = vmatpush.bf16.msra.mxu0 %v3154
    %5236 = vmatpush.bf16.msra.mxu0 %v3153
    %5237 = vmatpush.bf16.msra.mxu0 %v3152
    %5238 = vmatpush.bf16.msra.mxu0 %v3151
    %5239 = vmatmul.bf16.gmra.mxu0 %v2319
    %v5240 = vpop.f32.mrf.mxu0
    %v5241 = vadd.f32 %v5112, %v5240
    %v5242 = vpop.f32.mrf.mxu0
    %v5243 = vadd.f32 %v5114, %v5242
    %5244 = vmatmul.bf16.gmra.mxu0 %v2337
    %v5245 = vpop.f32.mrf.mxu0
    %v5246 = vadd.f32 %v5117, %v5245
    %v5247 = vpop.f32.mrf.mxu0
    %v5248 = vadd.f32 %v5119, %v5247
    %5249 = vmatmul.bf16.gmra.mxu0 %v2355
    %v5250 = vpop.f32.mrf.mxu0
    %v5251 = vadd.f32 %v5122, %v5250
    %v5252 = vpop.f32.mrf.mxu0
    %v5253 = vadd.f32 %v5124, %v5252
    %5254 = vmatmul.bf16.gmra.mxu0 %v2373
    %v5255 = vpop.f32.mrf.mxu0
    %v5256 = vadd.f32 %v5127, %v5255
    %v5257 = vpop.f32.mrf.mxu0
    %v5258 = vadd.f32 %v5129, %v5257
    %5259 = vmatmul.bf16.gmra.mxu0 %v2391
    %v5260 = vpop.f32.mrf.mxu0
    %v5261 = vadd.f32 %v5132, %v5260
    %v5262 = vpop.f32.mrf.mxu0
    %v5263 = vadd.f32 %v5134, %v5262
    %5264 = vmatmul.bf16.gmra.mxu0 %v2409
    %v5265 = vpop.f32.mrf.mxu0
    %v5266 = vadd.f32 %v5137, %v5265
    %v5267 = vpop.f32.mrf.mxu0
    %v5268 = vadd.f32 %v5139, %v5267
    %5269 = vmatmul.bf16.gmra.mxu0 %v2427
    %v5270 = vpop.f32.mrf.mxu0
    %v5271 = vadd.f32 %v5142, %v5270
    %v5272 = vpop.f32.mrf.mxu0
    %v5273 = vadd.f32 %v5144, %v5272
    %5274 = vmatmul.bf16.gmra.mxu0 %v2445
    %v5275 = vpop.f32.mrf.mxu0
    %v5276 = vadd.f32 %v5147, %v5275
    %v5277 = vpop.f32.mrf.mxu0
    %v5278 = vadd.f32 %v5149, %v5277
    %5279 = vmatmul.bf16.gmra.mxu0 %v2463
    %v5280 = vpop.f32.mrf.mxu0
    %v5281 = vadd.f32 %v5152, %v5280
    %v5282 = vpop.f32.mrf.mxu0
    %v5283 = vadd.f32 %v5154, %v5282
    %5284 = vmatmul.bf16.gmra.mxu0 %v2481
    %v5285 = vpop.f32.mrf.mxu0
    %v5286 = vadd.f32 %v5157, %v5285
    %v5287 = vpop.f32.mrf.mxu0
    %v5288 = vadd.f32 %v5159, %v5287
    %5289 = vmatmul.bf16.gmra.mxu0 %v2499
    %v5290 = vpop.f32.mrf.mxu0
    %v5291 = vadd.f32 %v5162, %v5290
    %v5292 = vpop.f32.mrf.mxu0
    %v5293 = vadd.f32 %v5164, %v5292
    %5294 = vmatmul.bf16.gmra.mxu0 %v2517
    %v5295 = vpop.f32.mrf.mxu0
    %v5296 = vadd.f32 %v5167, %v5295
    %v5297 = vpop.f32.mrf.mxu0
    %v5298 = vadd.f32 %v5169, %v5297
    %5299 = vmatmul.bf16.gmra.mxu0 %v2535
    %v5300 = vpop.f32.mrf.mxu0
    %v5301 = vadd.f32 %v5172, %v5300
    %v5302 = vpop.f32.mrf.mxu0
    %v5303 = vadd.f32 %v5174, %v5302
    %5304 = vmatmul.bf16.gmra.mxu0 %v2553
    %v5305 = vpop.f32.mrf.mxu0
    %v5306 = vadd.f32 %v5177, %v5305
    %v5307 = vpop.f32.mrf.mxu0
    %v5308 = vadd.f32 %v5179, %v5307
    %5309 = vmatmul.bf16.gmra.mxu0 %v2571
    %v5310 = vpop.f32.mrf.mxu0
    %v5311 = vadd.f32 %v5182, %v5310
    %v5312 = vpop.f32.mrf.mxu0
    %v5313 = vadd.f32 %v5184, %v5312
    %5314 = vmatmul.bf16.gmra.mxu0 %v2589
    %v5315 = vpop.f32.mrf.mxu0
    %v5316 = vadd.f32 %v5187, %v5315
    %v5317 = vpop.f32.mrf.mxu0
    %v5318 = vadd.f32 %v5189, %v5317
    %5319 = vmatmul.bf16.gmra.mxu0 %v2607
    %v5320 = vpop.f32.mrf.mxu0
    %v5321 = vadd.f32 %v5192, %v5320
    %v5322 = vpop.f32.mrf.mxu0
    %v5323 = vadd.f32 %v5194, %v5322
    %5324 = vmatmul.bf16.gmra.mxu0 %v2625
    %v5325 = vpop.f32.mrf.mxu0
    %v5326 = vadd.f32 %v5197, %v5325
    %v5327 = vpop.f32.mrf.mxu0
    %v5328 = vadd.f32 %v5199, %v5327
    %5329 = vmatmul.bf16.gmra.mxu0 %v2643
    %v5330 = vpop.f32.mrf.mxu0
    %v5331 = vadd.f32 %v5202, %v5330
    %v5332 = vpop.f32.mrf.mxu0
    %v5333 = vadd.f32 %v5204, %v5332
    %5334 = vmatmul.bf16.gmra.mxu0 %v2661
    %v5335 = vpop.f32.mrf.mxu0
    %v5336 = vadd.f32 %v5207, %v5335
    %v5337 = vpop.f32.mrf.mxu0
    %v5338 = vadd.f32 %v5209, %v5337
    %5339 = vmatmul.bf16.gmra.mxu0 %v2679
    %v5340 = vpop.f32.mrf.mxu0
    %v5341 = vadd.f32 %v5212, %v5340
    %v5342 = vpop.f32.mrf.mxu0
    %v5343 = vadd.f32 %v5214, %v5342
    %5344 = vmatmul.bf16.gmra.mxu0 %v2697
    %v5345 = vpop.f32.mrf.mxu0
    %v5346 = vadd.f32 %v5217, %v5345
    %v5347 = vpop.f32.mrf.mxu0
    %v5348 = vadd.f32 %v5219, %v5347
    %5349 = vmatmul.bf16.gmra.mxu0 %v2715
    %v5350 = vpop.f32.mrf.mxu0
    %v5351 = vadd.f32 %v5222, %v5350
    %v5352 = vpop.f32.mrf.mxu0
    %v5353 = vadd.f32 %v5224, %v5352
    %5354 = vmatmul.bf16.gmra.mxu0 %v2733
    %v5355 = vpop.f32.mrf.mxu0
    %v5356 = vadd.f32 %v5227, %v5355
    %v5357 = vpop.f32.mrf.mxu0
    %v5358 = vadd.f32 %v5229, %v5357
    %5359 = vdwg.mxu0
    %5360 = vmatpush.bf16.msra.mxu0 %v3166
    %5361 = vmatpush.bf16.msra.mxu0 %v3165
    %5362 = vmatpush.bf16.msra.mxu0 %v3164
    %5363 = vmatpush.bf16.msra.mxu0 %v3163
    %5364 = vmatpush.bf16.msra.mxu0 %v3162
    %5365 = vmatpush.bf16.msra.mxu0 %v3161
    %5366 = vmatpush.bf16.msra.mxu0 %v3160
    %5367 = vmatpush.bf16.msra.mxu0 %v3159
    %5368 = vmatmul.bf16.gmra.mxu0 %v2320
    %v5369 = vpop.f32.mrf.mxu0
    %v5370 = vadd.f32 %v5241, %v5369
    %v5371 = vpop.f32.mrf.mxu0
    %v5372 = vadd.f32 %v5243, %v5371
    %5373 = vmatmul.bf16.gmra.mxu0 %v2338
    %v5374 = vpop.f32.mrf.mxu0
    %v5375 = vadd.f32 %v5246, %v5374
    %v5376 = vpop.f32.mrf.mxu0
    %v5377 = vadd.f32 %v5248, %v5376
    %5378 = vmatmul.bf16.gmra.mxu0 %v2356
    %v5379 = vpop.f32.mrf.mxu0
    %v5380 = vadd.f32 %v5251, %v5379
    %v5381 = vpop.f32.mrf.mxu0
    %v5382 = vadd.f32 %v5253, %v5381
    %5383 = vmatmul.bf16.gmra.mxu0 %v2374
    %v5384 = vpop.f32.mrf.mxu0
    %v5385 = vadd.f32 %v5256, %v5384
    %v5386 = vpop.f32.mrf.mxu0
    %v5387 = vadd.f32 %v5258, %v5386
    %5388 = vmatmul.bf16.gmra.mxu0 %v2392
    %v5389 = vpop.f32.mrf.mxu0
    %v5390 = vadd.f32 %v5261, %v5389
    %v5391 = vpop.f32.mrf.mxu0
    %v5392 = vadd.f32 %v5263, %v5391
    %5393 = vmatmul.bf16.gmra.mxu0 %v2410
    %v5394 = vpop.f32.mrf.mxu0
    %v5395 = vadd.f32 %v5266, %v5394
    %v5396 = vpop.f32.mrf.mxu0
    %v5397 = vadd.f32 %v5268, %v5396
    %5398 = vmatmul.bf16.gmra.mxu0 %v2428
    %v5399 = vpop.f32.mrf.mxu0
    %v5400 = vadd.f32 %v5271, %v5399
    %v5401 = vpop.f32.mrf.mxu0
    %v5402 = vadd.f32 %v5273, %v5401
    %5403 = vmatmul.bf16.gmra.mxu0 %v2446
    %v5404 = vpop.f32.mrf.mxu0
    %v5405 = vadd.f32 %v5276, %v5404
    %v5406 = vpop.f32.mrf.mxu0
    %v5407 = vadd.f32 %v5278, %v5406
    %5408 = vmatmul.bf16.gmra.mxu0 %v2464
    %v5409 = vpop.f32.mrf.mxu0
    %v5410 = vadd.f32 %v5281, %v5409
    %v5411 = vpop.f32.mrf.mxu0
    %v5412 = vadd.f32 %v5283, %v5411
    %5413 = vmatmul.bf16.gmra.mxu0 %v2482
    %v5414 = vpop.f32.mrf.mxu0
    %v5415 = vadd.f32 %v5286, %v5414
    %v5416 = vpop.f32.mrf.mxu0
    %v5417 = vadd.f32 %v5288, %v5416
    %5418 = vmatmul.bf16.gmra.mxu0 %v2500
    %v5419 = vpop.f32.mrf.mxu0
    %v5420 = vadd.f32 %v5291, %v5419
    %v5421 = vpop.f32.mrf.mxu0
    %v5422 = vadd.f32 %v5293, %v5421
    %5423 = vmatmul.bf16.gmra.mxu0 %v2518
    %v5424 = vpop.f32.mrf.mxu0
    %v5425 = vadd.f32 %v5296, %v5424
    %v5426 = vpop.f32.mrf.mxu0
    %v5427 = vadd.f32 %v5298, %v5426
    %5428 = vmatmul.bf16.gmra.mxu0 %v2536
    %v5429 = vpop.f32.mrf.mxu0
    %v5430 = vadd.f32 %v5301, %v5429
    %v5431 = vpop.f32.mrf.mxu0
    %v5432 = vadd.f32 %v5303, %v5431
    %5433 = vmatmul.bf16.gmra.mxu0 %v2554
    %v5434 = vpop.f32.mrf.mxu0
    %v5435 = vadd.f32 %v5306, %v5434
    %v5436 = vpop.f32.mrf.mxu0
    %v5437 = vadd.f32 %v5308, %v5436
    %5438 = vmatmul.bf16.gmra.mxu0 %v2572
    %v5439 = vpop.f32.mrf.mxu0
    %v5440 = vadd.f32 %v5311, %v5439
    %v5441 = vpop.f32.mrf.mxu0
    %v5442 = vadd.f32 %v5313, %v5441
    %5443 = vmatmul.bf16.gmra.mxu0 %v2590
    %v5444 = vpop.f32.mrf.mxu0
    %v5445 = vadd.f32 %v5316, %v5444
    %v5446 = vpop.f32.mrf.mxu0
    %v5447 = vadd.f32 %v5318, %v5446
    %5448 = vmatmul.bf16.gmra.mxu0 %v2608
    %v5449 = vpop.f32.mrf.mxu0
    %v5450 = vadd.f32 %v5321, %v5449
    %v5451 = vpop.f32.mrf.mxu0
    %v5452 = vadd.f32 %v5323, %v5451
    %5453 = vmatmul.bf16.gmra.mxu0 %v2626
    %v5454 = vpop.f32.mrf.mxu0
    %v5455 = vadd.f32 %v5326, %v5454
    %v5456 = vpop.f32.mrf.mxu0
    %v5457 = vadd.f32 %v5328, %v5456
    %5458 = vmatmul.bf16.gmra.mxu0 %v2644
    %v5459 = vpop.f32.mrf.mxu0
    %v5460 = vadd.f32 %v5331, %v5459
    %v5461 = vpop.f32.mrf.mxu0
    %v5462 = vadd.f32 %v5333, %v5461
    %5463 = vmatmul.bf16.gmra.mxu0 %v2662
    %v5464 = vpop.f32.mrf.mxu0
    %v5465 = vadd.f32 %v5336, %v5464
    %v5466 = vpop.f32.mrf.mxu0
    %v5467 = vadd.f32 %v5338, %v5466
    %5468 = vmatmul.bf16.gmra.mxu0 %v2680
    %v5469 = vpop.f32.mrf.mxu0
    %v5470 = vadd.f32 %v5341, %v5469
    %v5471 = vpop.f32.mrf.mxu0
    %v5472 = vadd.f32 %v5343, %v5471
    %5473 = vmatmul.bf16.gmra.mxu0 %v2698
    %v5474 = vpop.f32.mrf.mxu0
    %v5475 = vadd.f32 %v5346, %v5474
    %v5476 = vpop.f32.mrf.mxu0
    %v5477 = vadd.f32 %v5348, %v5476
    %5478 = vmatmul.bf16.gmra.mxu0 %v2716
    %v5479 = vpop.f32.mrf.mxu0
    %v5480 = vadd.f32 %v5351, %v5479
    %v5481 = vpop.f32.mrf.mxu0
    %v5482 = vadd.f32 %v5353, %v5481
    %5483 = vmatmul.bf16.gmra.mxu0 %v2734
    %v5484 = vpop.f32.mrf.mxu0
    %v5485 = vadd.f32 %v5356, %v5484
    %v5486 = vpop.f32.mrf.mxu0
    %v5487 = vadd.f32 %v5358, %v5486
    %5488 = vdwg.mxu0
    %p5489 = scmp.eq.s32.totalorder 0, 0
    // Predicated region
    $region22: #{tpu_custom_call.1} parent=1 // pred_check
      %p5490 = pneg %p5489
    $region23: #{tpu_custom_call.1} parent=1 // pred_check_branch
      %5492 = sbr.rel (%p5490) target = $region25
    $region24: #{tpu_custom_call.1} parent=1 // pred_region
      %vm5493 = vcmask 400384
      %5494 = vst.msk [vmem:[%s3] sm:$0xff] %vm5493, %v5370
      %5495 = vst.msk [vmem:[%s3 + $0x8] sm:$0xff] %vm5493, %v5372
      %5496 = vst.msk [vmem:[%s3 + $0x10] sm:$0xff] %vm5493, %v5375
      %5497 = vst.msk [vmem:[%s3 + $0x18] sm:$0xff] %vm5493, %v5377
      %5498 = vst.msk [vmem:[%s3 + $0x20] sm:$0xff] %vm5493, %v5380
      %5499 = vst.msk [vmem:[%s3 + $0x28] sm:$0xff] %vm5493, %v5382
      %5500 = vst.msk [vmem:[%s3 + $0x30] sm:$0xff] %vm5493, %v5385
      %5501 = vst.msk [vmem:[%s3 + $0x38] sm:$0xff] %vm5493, %v5387
      %5502 = vst.msk [vmem:[%s3 + $0x40] sm:$0xff] %vm5493, %v5390
      %5503 = vst.msk [vmem:[%s3 + $0x48] sm:$0xff] %vm5493, %v5392
      %5504 = vst.msk [vmem:[%s3 + $0x50] sm:$0xff] %vm5493, %v5395
      %5505 = vst.msk [vmem:[%s3 + $0x58] sm:$0xff] %vm5493, %v5397
      %5506 = vst.msk [vmem:[%s3 + $0x60] sm:$0xff] %vm5493, %v5400
      %5507 = vst.msk [vmem:[%s3 + $0x68] sm:$0xff] %vm5493, %v5402
      %5508 = vst.msk [vmem:[%s3 + $0x70] sm:$0xff] %vm5493, %v5405
      %5509 = vst.msk [vmem:[%s3 + $0x78] sm:$0xff] %vm5493, %v5407
      %5510 = vst.msk [vmem:[%s3 + $0x80] sm:$0xff] %vm5493, %v5410
      %5511 = vst.msk [vmem:[%s3 + $0x88] sm:$0xff] %vm5493, %v5412
      %5512 = vst.msk [vmem:[%s3 + $0x90] sm:$0xff] %vm5493, %v5415
      %5513 = vst.msk [vmem:[%s3 + $0x98] sm:$0xff] %vm5493, %v5417
      %5514 = vst.msk [vmem:[%s3 + $0xa0] sm:$0xff] %vm5493, %v5420
      %5515 = vst.msk [vmem:[%s3 + $0xa8] sm:$0xff] %vm5493, %v5422
      %5516 = vst.msk [vmem:[%s3 + $0xb0] sm:$0xff] %vm5493, %v5425
      %5517 = vst.msk [vmem:[%s3 + $0xb8] sm:$0xff] %vm5493, %v5427
      %5518 = vst.msk [vmem:[%s3 + $0xc0] sm:$0xff] %vm5493, %v5430
      %5519 = vst.msk [vmem:[%s3 + $0xc8] sm:$0xff] %vm5493, %v5432
      %5520 = vst.msk [vmem:[%s3 + $0xd0] sm:$0xff] %vm5493, %v5435
      %5521 = vst.msk [vmem:[%s3 + $0xd8] sm:$0xff] %vm5493, %v5437
      %5522 = vst.msk [vmem:[%s3 + $0xe0] sm:$0xff] %vm5493, %v5440
      %5523 = vst.msk [vmem:[%s3 + $0xe8] sm:$0xff] %vm5493, %v5442
      %5524 = vst.msk [vmem:[%s3 + $0xf0] sm:$0xff] %vm5493, %v5445
      %5525 = vst.msk [vmem:[%s3 + $0xf8] sm:$0xff] %vm5493, %v5447
      %5526 = vst.msk [vmem:[%s3 + $0x100] sm:$0xff] %vm5493, %v5450
      %5527 = vst.msk [vmem:[%s3 + $0x108] sm:$0xff] %vm5493, %v5452
      %5528 = vst.msk [vmem:[%s3 + $0x110] sm:$0xff] %vm5493, %v5455
      %5529 = vst.msk [vmem:[%s3 + $0x118] sm:$0xff] %vm5493, %v5457
      %5530 = vst.msk [vmem:[%s3 + $0x120] sm:$0xff] %vm5493, %v5460
      %5531 = vst.msk [vmem:[%s3 + $0x128] sm:$0xff] %vm5493, %v5462
      %5532 = vst.msk [vmem:[%s3 + $0x130] sm:$0xff] %vm5493, %v5465
      %5533 = vst.msk [vmem:[%s3 + $0x138] sm:$0xff] %vm5493, %v5467
      %5534 = vst.msk [vmem:[%s3 + $0x140] sm:$0xff] %vm5493, %v5470
      %5535 = vst.msk [vmem:[%s3 + $0x148] sm:$0xff] %vm5493, %v5472
      %5536 = vst.msk [vmem:[%s3 + $0x150] sm:$0xff] %vm5493, %v5475
      %5537 = vst.msk [vmem:[%s3 + $0x158] sm:$0xff] %vm5493, %v5477
      %5538 = vst.msk [vmem:[%s3 + $0x160] sm:$0xff] %vm5493, %v5480
      %5539 = vst.msk [vmem:[%s3 + $0x168] sm:$0xff] %vm5493, %v5482
      %5540 = vst.msk [vmem:[%s3 + $0x170] sm:$0xff] %vm5493, %v5485
      %5541 = vst.msk [vmem:[%s3 + $0x178] sm:$0xff] %vm5493, %v5487
    $region25: #{tpu_custom_call.1} parent=1 // pred_fallthru
      _
    %p5542 = scmp.gt.s32.totalorder 0, 0
    // Predicated region
    $region26: #{tpu_custom_call.1} parent=1 // pred_check
      %p5543 = pneg %p5542
    $region27: #{tpu_custom_call.1} parent=1 // pred_check_branch
      %5545 = sbr.rel (%p5543) target = $region29
    $region28: #{tpu_custom_call.1} parent=1 // pred_region
      %v5546 = vld [vmem:[%s3] sm:$0xff]
      %v5547 = vld [vmem:[%s3 + $0x8] sm:$0xff]
      %v5548 = vld [vmem:[%s3 + $0x10] sm:$0xff]
      %v5549 = vld [vmem:[%s3 + $0x18] sm:$0xff]
      %v5550 = vld [vmem:[%s3 + $0x20] sm:$0xff]
      %v5551 = vld [vmem:[%s3 + $0x28] sm:$0xff]
      %v5552 = vld [vmem:[%s3 + $0x30] sm:$0xff]
      %v5553 = vld [vmem:[%s3 + $0x38] sm:$0xff]
      %v5554 = vld [vmem:[%s3 + $0x40] sm:$0xff]
      %v5555 = vld [vmem:[%s3 + $0x48] sm:$0xff]
      %v5556 = vld [vmem:[%s3 + $0x50] sm:$0xff]
      %v5557 = vld [vmem:[%s3 + $0x58] sm:$0xff]
      %v5558 = vld [vmem:[%s3 + $0x60] sm:$0xff]
      %v5559 = vld [vmem:[%s3 + $0x68] sm:$0xff]
      %v5560 = vld [vmem:[%s3 + $0x70] sm:$0xff]
      %v5561 = vld [vmem:[%s3 + $0x78] sm:$0xff]
      %v5562 = vld [vmem:[%s3 + $0x80] sm:$0xff]
      %v5563 = vld [vmem:[%s3 + $0x88] sm:$0xff]
      %v5564 = vld [vmem:[%s3 + $0x90] sm:$0xff]
      %v5565 = vld [vmem:[%s3 + $0x98] sm:$0xff]
      %v5566 = vld [vmem:[%s3 + $0xa0] sm:$0xff]
      %v5567 = vld [vmem:[%s3 + $0xa8] sm:$0xff]
      %v5568 = vld [vmem:[%s3 + $0xb0] sm:$0xff]
      %v5569 = vld [vmem:[%s3 + $0xb8] sm:$0xff]
      %v5570 = vld [vmem:[%s3 + $0xc0] sm:$0xff]
      %v5571 = vld [vmem:[%s3 + $0xc8] sm:$0xff]
      %v5572 = vld [vmem:[%s3 + $0xd0] sm:$0xff]
      %v5573 = vld [vmem:[%s3 + $0xd8] sm:$0xff]
      %v5574 = vld [vmem:[%s3 + $0xe0] sm:$0xff]
      %v5575 = vld [vmem:[%s3 + $0xe8] sm:$0xff]
      %v5576 = vld [vmem:[%s3 + $0xf0] sm:$0xff]
      %v5577 = vld [vmem:[%s3 + $0xf8] sm:$0xff]
      %v5578 = vld [vmem:[%s3 + $0x100] sm:$0xff]
      %v5579 = vld [vmem:[%s3 + $0x108] sm:$0xff]
      %v5580 = vld [vmem:[%s3 + $0x110] sm:$0xff]
      %v5581 = vld [vmem:[%s3 + $0x118] sm:$0xff]
      %v5582 = vld [vmem:[%s3 + $0x120] sm:$0xff]
      %v5583 = vld [vmem:[%s3 + $0x128] sm:$0xff]
      %v5584 = vld [vmem:[%s3 + $0x130] sm:$0xff]
      %v5585 = vld [vmem:[%s3 + $0x138] sm:$0xff]
      %v5586 = vld [vmem:[%s3 + $0x140] sm:$0xff]
      %v5587 = vld [vmem:[%s3 + $0x148] sm:$0xff]
      %v5588 = vld [vmem:[%s3 + $0x150] sm:$0xff]
      %v5589 = vld [vmem:[%s3 + $0x158] sm:$0xff]
      %v5590 = vld [vmem:[%s3 + $0x160] sm:$0xff]
      %v5591 = vld [vmem:[%s3 + $0x168] sm:$0xff]
      %v5592 = vld [vmem:[%s3 + $0x170] sm:$0xff]
      %v5593 = vld [vmem:[%s3 + $0x178] sm:$0xff]
      %v5594 = vadd.f32 %v5546, %v5370
      %v5595 = vadd.f32 %v5547, %v5372
      %v5596 = vadd.f32 %v5548, %v5375
      %v5597 = vadd.f32 %v5549, %v5377
      %v5598 = vadd.f32 %v5550, %v5380
      %v5599 = vadd.f32 %v5551, %v5382
      %v5600 = vadd.f32 %v5552, %v5385
      %v5601 = vadd.f32 %v5553, %v5387
      %v5602 = vadd.f32 %v5554, %v5390
      %v5603 = vadd.f32 %v5555, %v5392
      %v5604 = vadd.f32 %v5556, %v5395
      %v5605 = vadd.f32 %v5557, %v5397
      %v5606 = vadd.f32 %v5558, %v5400
      %v5607 = vadd.f32 %v5559, %v5402
      %v5608 = vadd.f32 %v5560, %v5405
      %v5609 = vadd.f32 %v5561, %v5407
      %v5610 = vadd.f32 %v5562, %v5410
      %v5611 = vadd.f32 %v5563, %v5412
      %v5612 = vadd.f32 %v5564, %v5415
      %v5613 = vadd.f32 %v5565, %v5417
      %v5614 = vadd.f32 %v5566, %v5420
      %v5615 = vadd.f32 %v5567, %v5422
      %v5616 = vadd.f32 %v5568, %v5425
      %v5617 = vadd.f32 %v5569, %v5427
      %v5618 = vadd.f32 %v5570, %v5430
      %v5619 = vadd.f32 %v5571, %v5432
      %v5620 = vadd.f32 %v5572, %v5435
      %v5621 = vadd.f32 %v5573, %v5437
      %v5622 = vadd.f32 %v5574, %v5440
      %v5623 = vadd.f32 %v5575, %v5442
      %v5624 = vadd.f32 %v5576, %v5445
      %v5625 = vadd.f32 %v5577, %v5447
      %v5626 = vadd.f32 %v5578, %v5450
      %v5627 = vadd.f32 %v5579, %v5452
      %v5628 = vadd.f32 %v5580, %v5455
      %v5629 = vadd.f32 %v5581, %v5457
      %v5630 = vadd.f32 %v5582, %v5460
      %v5631 = vadd.f32 %v5583, %v5462
      %v5632 = vadd.f32 %v5584, %v5465
      %v5633 = vadd.f32 %v5585, %v5467
      %v5634 = vadd.f32 %v5586, %v5470
      %v5635 = vadd.f32 %v5587, %v5472
      %v5636 = vadd.f32 %v5588, %v5475
      %v5637 = vadd.f32 %v5589, %v5477
      %v5638 = vadd.f32 %v5590, %v5480
      %v5639 = vadd.f32 %v5591, %v5482
      %v5640 = vadd.f32 %v5592, %v5485
      %v5641 = vadd.f32 %v5593, %v5487
      %vm5642 = vcmask 400384
      %5643 = vst.msk [vmem:[%s3] sm:$0xff] %vm5642, %v5594
      %5644 = vst.msk [vmem:[%s3 + $0x8] sm:$0xff] %vm5642, %v5595
      %5645 = vst.msk [vmem:[%s3 + $0x10] sm:$0xff] %vm5642, %v5596
      %5646 = vst.msk [vmem:[%s3 + $0x18] sm:$0xff] %vm5642, %v5597
      %5647 = vst.msk [vmem:[%s3 + $0x20] sm:$0xff] %vm5642, %v5598
      %5648 = vst.msk [vmem:[%s3 + $0x28] sm:$0xff] %vm5642, %v5599
      %5649 = vst.msk [vmem:[%s3 + $0x30] sm:$0xff] %vm5642, %v5600
      %5650 = vst.msk [vmem:[%s3 + $0x38] sm:$0xff] %vm5642, %v5601
      %5651 = vst.msk [vmem:[%s3 + $0x40] sm:$0xff] %vm5642, %v5602
      %5652 = vst.msk [vmem:[%s3 + $0x48] sm:$0xff] %vm5642, %v5603
      %5653 = vst.msk [vmem:[%s3 + $0x50] sm:$0xff] %vm5642, %v5604
      %5654 = vst.msk [vmem:[%s3 + $0x58] sm:$0xff] %vm5642, %v5605
      %5655 = vst.msk [vmem:[%s3 + $0x60] sm:$0xff] %vm5642, %v5606
      %5656 = vst.msk [vmem:[%s3 + $0x68] sm:$0xff] %vm5642, %v5607
      %5657 = vst.msk [vmem:[%s3 + $0x70] sm:$0xff] %vm5642, %v5608
      %5658 = vst.msk [vmem:[%s3 + $0x78] sm:$0xff] %vm5642, %v5609
      %5659 = vst.msk [vmem:[%s3 + $0x80] sm:$0xff] %vm5642, %v5610
      %5660 = vst.msk [vmem:[%s3 + $0x88] sm:$0xff] %vm5642, %v5611
      %5661 = vst.msk [vmem:[%s3 + $0x90] sm:$0xff] %vm5642, %v5612
      %5662 = vst.msk [vmem:[%s3 + $0x98] sm:$0xff] %vm5642, %v5613
      %5663 = vst.msk [vmem:[%s3 + $0xa0] sm:$0xff] %vm5642, %v5614
      %5664 = vst.msk [vmem:[%s3 + $0xa8] sm:$0xff] %vm5642, %v5615
      %5665 = vst.msk [vmem:[%s3 + $0xb0] sm:$0xff] %vm5642, %v5616
      %5666 = vst.msk [vmem:[%s3 + $0xb8] sm:$0xff] %vm5642, %v5617
      %5667 = vst.msk [vmem:[%s3 + $0xc0] sm:$0xff] %vm5642, %v5618
      %5668 = vst.msk [vmem:[%s3 + $0xc8] sm:$0xff] %vm5642, %v5619
      %5669 = vst.msk [vmem:[%s3 + $0xd0] sm:$0xff] %vm5642, %v5620
      %5670 = vst.msk [vmem:[%s3 + $0xd8] sm:$0xff] %vm5642, %v5621
      %5671 = vst.msk [vmem:[%s3 + $0xe0] sm:$0xff] %vm5642, %v5622
      %5672 = vst.msk [vmem:[%s3 + $0xe8] sm:$0xff] %vm5642, %v5623
      %5673 = vst.msk [vmem:[%s3 + $0xf0] sm:$0xff] %vm5642, %v5624
      %5674 = vst.msk [vmem:[%s3 + $0xf8] sm:$0xff] %vm5642, %v5625
      %5675 = vst.msk [vmem:[%s3 + $0x100] sm:$0xff] %vm5642, %v5626
      %5676 = vst.msk [vmem:[%s3 + $0x108] sm:$0xff] %vm5642, %v5627
      %5677 = vst.msk [vmem:[%s3 + $0x110] sm:$0xff] %vm5642, %v5628
      %5678 = vst.msk [vmem:[%s3 + $0x118] sm:$0xff] %vm5642, %v5629
      %5679 = vst.msk [vmem:[%s3 + $0x120] sm:$0xff] %vm5642, %v5630
      %5680 = vst.msk [vmem:[%s3 + $0x128] sm:$0xff] %vm5642, %v5631
      %5681 = vst.msk [vmem:[%s3 + $0x130] sm:$0xff] %vm5642, %v5632
      %5682 = vst.msk [vmem:[%s3 + $0x138] sm:$0xff] %vm5642, %v5633
      %5683 = vst.msk [vmem:[%s3 + $0x140] sm:$0xff] %vm5642, %v5634
      %5684 = vst.msk [vmem:[%s3 + $0x148] sm:$0xff] %vm5642, %v5635
      %5685 = vst.msk [vmem:[%s3 + $0x150] sm:$0xff] %vm5642, %v5636
      %5686 = vst.msk [vmem:[%s3 + $0x158] sm:$0xff] %vm5642, %v5637
      %5687 = vst.msk [vmem:[%s3 + $0x160] sm:$0xff] %vm5642, %v5638
      %5688 = vst.msk [vmem:[%s3 + $0x168] sm:$0xff] %vm5642, %v5639
      %5689 = vst.msk [vmem:[%s3 + $0x170] sm:$0xff] %vm5642, %v5640
      %5690 = vst.msk [vmem:[%s3 + $0x178] sm:$0xff] %vm5642, %v5641
    $region29: #{tpu_custom_call.1} parent=1 // pred_fallthru
      _
    // Predicated region
    $region30: #{tpu_custom_call.1} parent=1 // pred_check
      _
    $region31: #{tpu_custom_call.1} parent=1 // pred_check_branch
      %5692 = sbr.rel (0) target = $region33
    $region32: #{tpu_custom_call.1} parent=1 // pred_region
      _
    $region33: #{tpu_custom_call.1} parent=1 // pred_fallthru
      _
    // Predicated region
    $region34: #{tpu_custom_call.1} parent=1 // pred_check
      _
    $region35: #{tpu_custom_call.1} parent=1 // pred_check_branch
      %5694 = sbr.rel (0) target = $region37
    $region36: #{tpu_custom_call.1} parent=1 // pred_region
      _
    $region37: #{tpu_custom_call.1} parent=1 // pred_fallthru
      _
    %5695 = vsyncpa [#allocation3], 1
    %5696 = vsyncpa [#allocation5], 1

</llo_original>
